<compile_context>
chip_gen: v6e
topology: v6e:2x2x1
jax: 0.10.0
libtpu: 0.0.40
codegen_flags: <defaults>
</compile_context>

<pallas_src>
import functools

import jax
import jax.numpy as jnp
from jax.experimental import pallas as pl
from jax.experimental.pallas import tpu as pltpu

LANE = 128                      # lane (last dim) tile
SUB = 8                         # sublane tile for f32
MXU_DTYPE = jnp.bfloat16        # MXU input dtype (f32 accumulation)
VOCAB_TILE = 512                # vocab padded to this so tn never collapses
VMEM_LIMIT = 32 * 1024 * 1024   # safe on v5e/v6e/v7x


def _ru(x, m):
    return ((x + m - 1) // m) * m


def _pad2d(a, rows, cols):
    return jnp.pad(a, ((0, rows - a.shape[0]), (0, cols - a.shape[1])))


def _softplus(y):
    return jnp.maximum(y, 0.0) + jnp.log1p(jnp.exp(-jnp.abs(y)))


def _pick_tile(dim, target, unit):
    """Largest multiple of `unit` <= target that divides dim, else full dim."""
    t = min(target, dim)
    t -= t % unit
    if t <= 0:
        return dim
    while dim % t:
        t -= unit
        if t <= 0:
            return dim
    return t


# ----------------------------------------------------------------------------
# Tiled dense kernel:  y = act(x @ W + b)
# grid = (N/tn, M/tm, K/tk): N outermost so the W block (k, j) stays resident
# while the M axis varies (no weight re-streaming when K fits one k-tile).
# act == "split_softplus": softplus on global columns >= split (mu|sigma head).
# ----------------------------------------------------------------------------
def _dense_kernel(x_ref, w_ref, b_ref, o_ref, acc_ref, *, act, split):
    j = pl.program_id(0)          # N tile   (top level: never inside pl.when)
    k = pl.program_id(2)          # K tile

    @pl.when(k == 0)
    def _():
        acc_ref[...] = jnp.zeros_like(acc_ref)

    acc_ref[...] += jnp.dot(x_ref[...].astype(MXU_DTYPE),
                            w_ref[...].astype(MXU_DTYPE),
                            preferred_element_type=jnp.float32)

    @pl.when(k == pl.num_programs(2) - 1)
    def _():
        y = acc_ref[...] + b_ref[...]
        if act == "tanh":
            y = jnp.tanh(y)
        elif act == "softplus":
            y = _softplus(y)
        elif act == "split_softplus":
            tn = o_ref.shape[-1]
            col = jax.lax.broadcasted_iota(jnp.int32, y.shape, 1) + j * tn
            y = jnp.where(col >= split, _softplus(y), y)
        o_ref[...] = y.astype(o_ref.dtype)


def dense(x, w, b, act="none", split=0, *, tm=512, tn=512, tk=512,
          out_dtype=jnp.float32):
    """x:[M,K], w:[K,N] (bf16 ok), b:[1,N] — dims already lane/sublane padded."""
    M, K = x.shape
    N = w.shape[1]
    sub_unit = SUB * max(1, 4 // x.dtype.itemsize)   # 8 for f32, 16 for bf16
    tm = _pick_tile(M, tm, sub_unit)
    tn = _pick_tile(N, tn, LANE)
    tk = _pick_tile(K, tk, LANE)
    grid = (N // tn, M // tm, K // tk)
    return pl.pallas_call(
        functools.partial(_dense_kernel, act=act, split=split),
        out_shape=jax.ShapeDtypeStruct((M, N), out_dtype),
        grid_spec=pltpu.PrefetchScalarGridSpec(
            num_scalar_prefetch=0,
            grid=grid,
            in_specs=[
                pl.BlockSpec((tm, tk), lambda j, i, k: (i, k)),
                pl.BlockSpec((tk, tn), lambda j, i, k: (k, j)),
                pl.BlockSpec((1, tn), lambda j, i, k: (0, j)),
            ],
            out_specs=pl.BlockSpec((tm, tn), lambda j, i, k: (i, j)),
            scratch_shapes=[pltpu.VMEM((tm, tn), jnp.float32)],
        ),
        compiler_params=pltpu.CompilerParams(
            dimension_semantics=("parallel", "parallel", "arbitrary"),
            vmem_limit_bytes=VMEM_LIMIT),
    )(x, w, b)


# ----------------------------------------------------------------------------
# GRU cell on pre-projected inputs (PyTorch gate order r, z, n).
#   gi = x@W_ih + b_ih (+ b_hh for r/z, folded at pack time)   : [B, 3H]
#   gh = h@W_hh                                                : [B, 3H]
#   n  = tanh(gi_n + r * (gh_n + b_hn))
# ----------------------------------------------------------------------------
def _gru_cell(gi, h, whh, bhn):
    H = h.shape[-1]
    gh = jnp.dot(h.astype(whh.dtype), whh, preferred_element_type=jnp.float32)
    r = jax.nn.sigmoid(gi[:, 0:H] + gh[:, 0:H])
    z = jax.nn.sigmoid(gi[:, H:2 * H] + gh[:, H:2 * H])
    n = jnp.tanh(gi[:, 2 * H:3 * H] + r * (gh[:, 2 * H:3 * H] + bhn))
    return (1.0 - z) * n + z * h


# ----------------------------------------------------------------------------
# Fused bidirectional encoder GRU, chunked over T.
# x is passed twice with index maps c and (C-1-c); each chunk's input
# projection is computed in-kernel (no xp HBM round trip).  Only the final
# [Bp, 2H] hidden state ever reaches HBM.
# ----------------------------------------------------------------------------
def _bigru_kernel(xf_ref, xb_ref, wif_ref, bif_ref, whf_ref, bhf_ref,
                  wib_ref, bib_ref, whb_ref, bhb_ref, out_ref,
                  hf_ref, hb_ref, gif_ref, gib_ref, *, Tc, Bp, H):
    c = pl.program_id(0)

    @pl.when(c == 0)
    def _():
        hf_ref[...] = jnp.zeros_like(hf_ref)
        hb_ref[...] = jnp.zeros_like(hb_ref)

    # Chunk-fused input projections: one [Tc*Bp, Ep] x [Ep, 3H] push per dir.
    gif_ref[...] = jnp.dot(xf_ref[...].astype(MXU_DTYPE), wif_ref[...],
                           preferred_element_type=jnp.float32) + bif_ref[...]
    gib_ref[...] = jnp.dot(xb_ref[...].astype(MXU_DTYPE), wib_ref[...],
                           preferred_element_type=jnp.float32) + bib_ref[...]

    whf = whf_ref[...]
    whb = whb_ref[...]
    bhf = bhf_ref[...]
    bhb = bhb_ref[...]

    # TODO(synk): v7x — batch-split across the 2 TensorCores (parallel grid
    # axis); merge fwd/bwd h-dots into one block-diagonal push for small B.
    def body(t, carry):
        h_f, h_b = carry
        gi_f = gif_ref[pl.ds(t * Bp, Bp), :]
        gi_b = gib_ref[pl.ds((Tc - 1 - t) * Bp, Bp), :]
        h_f = _gru_cell(gi_f, h_f, whf, bhf)
        h_b = _gru_cell(gi_b, h_b, whb, bhb)
        return (h_f, h_b)

    h_f, h_b = jax.lax.fori_loop(0, Tc, body, (hf_ref[...], hb_ref[...]))
    hf_ref[...] = h_f
    hb_ref[...] = h_b
    out_ref[:, 0:H] = h_f
    out_ref[:, H:2 * H] = h_b


def bigru_final(x2d, T, wif, bif, whf, bhf, wib, bib, whb, bhb, *, tc=4):
    TB, Ep = x2d.shape
    Bp = TB // T
    H = whf.shape[0]
    tc = _pick_tile(T, tc, 1)
    C = T // tc
    rows = tc * Bp
    res2 = lambda c: (0, 0)
    return pl.pallas_call(
        functools.partial(_bigru_kernel, Tc=tc, Bp=Bp, H=H),
        out_shape=jax.ShapeDtypeStruct((Bp, 2 * H), jnp.float32),
        grid_spec=pltpu.PrefetchScalarGridSpec(
            num_scalar_prefetch=0,
            grid=(C,),
            in_specs=[
                pl.BlockSpec((rows, Ep), lambda c: (c, 0)),            # fwd chunk
                pl.BlockSpec((rows, Ep), lambda c: (C - 1 - c, 0)),    # bwd chunk
                pl.BlockSpec(wif.shape, res2),
                pl.BlockSpec(bif.shape, res2),
                pl.BlockSpec(whf.shape, res2),
                pl.BlockSpec(bhf.shape, res2),
                pl.BlockSpec(wib.shape, res2),
                pl.BlockSpec(bib.shape, res2),
                pl.BlockSpec(whb.shape, res2),
                pl.BlockSpec(bhb.shape, res2),
            ],
            out_specs=pl.BlockSpec((Bp, 2 * H), lambda c: (0, 0)),
            scratch_shapes=[
                pltpu.VMEM((Bp, H), jnp.float32),        # h_fwd carry
                pltpu.VMEM((Bp, H), jnp.float32),        # h_bwd carry
                pltpu.VMEM((rows, 3 * H), jnp.float32),  # gi fwd chunk
                pltpu.VMEM((rows, 3 * H), jnp.float32),  # gi bwd chunk
            ],
        ),
        compiler_params=pltpu.CompilerParams(
            dimension_semantics=("arbitrary",),
            vmem_limit_bytes=VMEM_LIMIT),
    )(x2d, x2d, wif, bif, whf, bhf, wib, bib, whb, bhb)


# ----------------------------------------------------------------------------
# Decoder GRU, chunked over T, in-kernel input projection, emits all states
# (bf16) with the hidden state carried in VMEM scratch across chunks.
# ----------------------------------------------------------------------------
def _gru_seq_kernel(x_ref, h0_ref, wi_ref, bi_ref, wh_ref, bh_ref, out_ref,
                    h_ref, gi_ref, *, Tc, Bp, H):
    c = pl.program_id(0)

    @pl.when(c == 0)
    def _():
        h_ref[...] = h0_ref[...]

    gi_ref[...] = jnp.dot(x_ref[...].astype(MXU_DTYPE), wi_ref[...],
                          preferred_element_type=jnp.float32) + bi_ref[...]
    wh = wh_ref[...]
    bh = bh_ref[...]

    def body(t, h):
        h = _gru_cell(gi_ref[pl.ds(t * Bp, Bp), :], h, wh, bh)
        out_ref[t] = h.astype(out_ref.dtype)
        return h

    h_ref[...] = jax.lax.fori_loop(0, Tc, body, h_ref[...])


def gru_seq(x2d, T, h0, w_in, b_in, whh, bhn, *, tc=4):
    TB, Ep = x2d.shape
    Bp = TB // T
    H = whh.shape[0]
    tc = _pick_tile(T, tc, 1)
    C = T // tc
    rows = tc * Bp
    res2 = lambda c: (0, 0)
    return pl.pallas_call(
        functools.partial(_gru_seq_kernel, Tc=tc, Bp=Bp, H=H),
        out_shape=jax.ShapeDtypeStruct((T, Bp, H), MXU_DTYPE),
        grid_spec=pltpu.PrefetchScalarGridSpec(
            num_scalar_prefetch=0,
            grid=(C,),
            in_specs=[
                pl.BlockSpec((rows, Ep), lambda c: (c, 0)),
                pl.BlockSpec(h0.shape, res2),
                pl.BlockSpec(w_in.shape, res2),
                pl.BlockSpec(b_in.shape, res2),
                pl.BlockSpec(whh.shape, res2),
                pl.BlockSpec(bhn.shape, res2),
            ],
            out_specs=pl.BlockSpec((tc, Bp, H), lambda c: (c, 0, 0)),
            scratch_shapes=[
                pltpu.VMEM((Bp, H), jnp.float32),        # h carry
                pltpu.VMEM((rows, 3 * H), jnp.float32),  # gi chunk
            ],
        ),
        compiler_params=pltpu.CompilerParams(
            dimension_semantics=("arbitrary",),
            vmem_limit_bytes=VMEM_LIMIT),
    )(x2d, h0, w_in, b_in, whh, bhn)


# ----------------------------------------------------------------------------
# Parameters (logical shapes) and packing (padding, bias folding, bf16 cast).
# ----------------------------------------------------------------------------
def init_params(key, vocab, emb, enc_h, dec_h, latent):
    ks = iter(jax.random.split(key, 32))

    def u(shape, fan):
        bound = 1.0 / jnp.sqrt(jnp.float32(fan))
        return jax.random.uniform(next(ks), shape, jnp.float32, -bound, bound)

    def gru_p(in_dim, hid):
        return dict(w_ih=u((in_dim, 3 * hid), hid),
                    w_hh=u((hid, 3 * hid), hid),
                    b_ih=u((1, 3 * hid), hid),
                    b_hh=u((1, 3 * hid), hid))

    return {
        "emb": jax.random.normal(next(ks), (vocab, emb), jnp.float32),
        "enc_fwd": gru_p(emb, enc_h),
        "enc_bwd": gru_p(emb, enc_h),
        "hidden2mu_w": u((2 * enc_h, latent), 2 * enc_h),
        "hidden2mu_b": u((1, latent), 2 * enc_h),
        "hidden2sigma_w": u((2 * enc_h, latent), 2 * enc_h),
        "hidden2sigma_b": u((1, latent), 2 * enc_h),
        "latent2hidden_w": u((latent, dec_h), latent),
        "latent2hidden_b": u((1, dec_h), latent),
        "dec_gru": gru_p(emb, dec_h),
        "hidden2out_w": u((dec_h, vocab), dec_h),
        "hidden2out_b": u((1, vocab), dec_h),
    }


def pack_params(p, vocab, emb, enc_h, dec_h, latent):
    Ep, Hep, Hdp = _ru(emb, LANE), _ru(enc_h, LANE), _ru(dec_h, LANE)
    Lp = _ru(latent, LANE)
    Vp = _ru(vocab, VOCAB_TILE)

    def pad_gate_w(w, in_p, hp):          # [in, 3H] -> [in_p, 3*hp], per gate
        i, th = w.shape
        h = th // 3
        w = w.reshape(i, 3, h)
        w = jnp.pad(w, ((0, in_p - i), (0, 0), (0, hp - h)))
        return w.reshape(in_p, 3 * hp)

    def pad_gate_b(b, hp):                # [1, 3H] -> [1, 3*hp]
        h = b.shape[1] // 3
        b = b.reshape(1, 3, h)
        b = jnp.pad(b, ((0, 0), (0, 0), (0, hp - h)))
        return b.reshape(1, 3 * hp)

    def gru_pack(g, in_p, hp):
        h = g["w_hh"].shape[0]
        # Fold b_hh of the r/z gates into the input-projection bias.  The
        # n-gate hidden bias stays separate: n = tanh(. + r*(h@W_hn + b_hn)).
        b_hh_rz = jnp.concatenate(
            [g["b_hh"][:, 0:2 * h], jnp.zeros((1, h), jnp.float32)], axis=1)
        return dict(
            w_in=pad_gate_w(g["w_ih"], in_p, hp).astype(MXU_DTYPE),
            b_in=pad_gate_b(g["b_ih"] + b_hh_rz, hp),
            w_hh=pad_gate_w(g["w_hh"], hp, hp).astype(MXU_DTYPE),
            b_hn=jnp.pad(g["b_hh"][:, 2 * h:3 * h], ((0, 0), (0, hp - h))),
        )

    enc_f = gru_pack(p["enc_fwd"], Ep, Hep)
    enc_b = gru_pack(p["enc_bwd"], Ep, Hep)
    dec = gru_pack(p["dec_gru"], Ep, Hdp)

    def pad_cat_rows(w, h, hp):           # rows [fwd|bwd] -> padded per half
        top = jnp.pad(w[0:h], ((0, hp - h), (0, 0)))
        bot = jnp.pad(w[h:2 * h], ((0, hp - h), (0, 0)))
        return jnp.concatenate([top, bot], axis=0)

    w_mu = jnp.pad(pad_cat_rows(p["hidden2mu_w"], enc_h, Hep),
                   ((0, 0), (0, Lp - latent)))
    w_sg = jnp.pad(pad_cat_rows(p["hidden2sigma_w"], enc_h, Hep),
                   ((0, 0), (0, Lp - latent)))
    b_mu = jnp.pad(p["hidden2mu_b"], ((0, 0), (0, Lp - latent)))
    b_sg = jnp.pad(p["hidden2sigma_b"], ((0, 0), (0, Lp - latent)))

    return {
        "emb": p["emb"],
        "enc_f_w_in": enc_f["w_in"], "enc_f_b_in": enc_f["b_in"],
        "enc_f_w_hh": enc_f["w_hh"], "enc_f_b_hn": enc_f["b_hn"],
        "enc_b_w_in": enc_b["w_in"], "enc_b_b_in": enc_b["b_in"],
        "enc_b_w_hh": enc_b["w_hh"], "enc_b_b_hn": enc_b["b_hn"],
        "dec_w_in": dec["w_in"], "dec_b_in": dec["b_in"],
        "dec_w_hh": dec["w_hh"], "dec_b_hn": dec["b_hn"],
        # fused mu | sigma head: [2*Hep, 2*Lp]
        "musig_w": jnp.concatenate([w_mu, w_sg], axis=1).astype(MXU_DTYPE),
        "musig_b": jnp.concatenate([b_mu, b_sg], axis=1),
        "l2h_w": _pad2d(p["latent2hidden_w"], Lp, Hdp).astype(MXU_DTYPE),
        "l2h_b": _pad2d(p["latent2hidden_b"], 1, Hdp),
        "h2o_w": _pad2d(p["hidden2out_w"], Hdp, Vp).astype(MXU_DTYPE),
        "h2o_b": _pad2d(p["hidden2out_b"], 1, Vp),
    }


# ----------------------------------------------------------------------------
# VAE forward (eval mode: param_wdropout_k=1, nr_multi_sample=1)
# ----------------------------------------------------------------------------
def vae_forward(packed, dims, x_tokens, eps):
    B, T = x_tokens.shape
    E, He, Hd = dims["emb"], dims["enc_h"], dims["dec_h"]
    L, V = dims["latent"], dims["vocab"]
    Ep, Hep, Hdp = _ru(E, LANE), _ru(He, LANE), _ru(Hd, LANE)
    Lp = _ru(L, LANE)
    Vp = _ru(V, VOCAB_TILE)
    Bp = _ru(B, SUB)

    # time-major embedding gather (glue) + padding to the (8,128) grid
    x_tbe = packed["emb"][x_tokens.T]                       # [T, B, E]
    x_tbe = jnp.pad(x_tbe, ((0, 0), (0, Bp - B), (0, Ep - E)))
    x2d = x_tbe.reshape(T * Bp, Ep)                         # time-major rows

    # fused bidirectional encoder recurrence -> final hidden [Bp, 2*Hep]
    hidden = bigru_final(
        x2d, T,
        packed["enc_f_w_in"], packed["enc_f_b_in"],
        packed["enc_f_w_hh"], packed["enc_f_b_hn"],
        packed["enc_b_w_in"], packed["enc_b_b_in"],
        packed["enc_b_w_hh"], packed["enc_b_b_hn"])

    # fused mu | sigma heads (softplus only on the sigma half)
    musig = dense(hidden, packed["musig_w"], packed["musig_b"],
                  act="split_softplus", split=Lp)           # [Bp, 2*Lp]
    mu = musig[:B, 0:L]
    sigma = musig[:B, Lp:Lp + L]

    # reparameterization  z = mu + sigma * eps  (glue)
    z = mu + sigma * eps
    z_p = jnp.pad(z, ((0, Bp - B), (0, Lp - L)))

    # decoder
    h0_dec = dense(z_p, packed["l2h_w"], packed["l2h_b"], act="tanh")
    dec_states = gru_seq(x2d, T, h0_dec, packed["dec_w_in"], packed["dec_b_in"],
                         packed["dec_w_hh"], packed["dec_b_hn"])  # [T,Bp,Hdp] bf16
    logits = dense(dec_states.reshape(T * Bp, Hdp),
                   packed["h2o_w"], packed["h2o_b"])              # [T*Bp, Vp]
    pred = jnp.transpose(logits.reshape(T, Bp, Vp)[:, :B, :V], (1, 0, 2))

    # PyTorch returns (pred, Normal(mu, sigma)); we return the parameters.
    # TODO(synk): word-dropout / multi-sample branches are training-only and
    # not exercised in eval forward with param_wdropout_k=1, nr_multi_sample=1.
    return pred, (mu, sigma)


if __name__ == "__main__":
    VOCAB, EMB, ENC_H, DEC_H, LATENT = 32, 16, 16, 32, 8
    B, T = 2, 8

    key = jax.random.PRNGKey(0)
    k_params, k_tokens, k_eps = jax.random.split(key, 3)

    dims = dict(vocab=VOCAB, emb=EMB, enc_h=ENC_H, dec_h=DEC_H, latent=LATENT)
    params = init_params(k_params, VOCAB, EMB, ENC_H, DEC_H, LATENT)
    packed = pack_params(params, **dims)

    x_tokens = jax.random.randint(k_tokens, (B, T), 0, VOCAB, dtype=jnp.int32)
    eps = jax.random.normal(k_eps, (B, LATENT), jnp.float32)

    fwd = jax.jit(lambda tok, e: vae_forward(packed, dims, tok, e))
    pred, (mu, sigma) = fwd(x_tokens, eps)
    jax.block_until_ready((pred, mu, sigma))

    assert pred.shape == (B, T, VOCAB)
    assert mu.shape == (B, LATENT) and sigma.shape == (B, LATENT)
    assert bool(jnp.all(sigma > 0))
    assert bool(jnp.all(jnp.isfinite(pred)))
    print("KERNEL_OK")
</pallas_src>

<mosaic_0001>
module attributes {stable_mosaic.version = 11 : i64} {
  func.func @_dense_kernel(%arg0: i32, %arg1: i32, %arg2: i32, %arg3: memref<8x256xf32, #tpu.memory_space<vmem>>, %arg4: memref<256x256xbf16, #tpu.memory_space<vmem>>, %arg5: memref<1x256xf32, #tpu.memory_space<vmem>>, %arg6: memref<8x256xf32, #tpu.memory_space<vmem>>, %arg7: memref<8x256xf32, #tpu.memory_space<vmem>>) attributes {dimension_semantics = [#tpu.dimension_semantics<parallel>, #tpu.dimension_semantics<parallel>, #tpu.dimension_semantics<arbitrary>], iteration_bounds = array<i64: 1, 1, 1>, scalar_prefetch = 0 : i64, scratch_operands = 1 : i64, tpu.core_type = #tpu.core_type<tc>, window_params = [{transform_indices = @transform_0, window_bounds = array<i64: 8, 256>}, {transform_indices = @transform_1, window_bounds = array<i64: 256, 256>}, {transform_indices = @transform_2, window_bounds = array<i64: 1, 256>}, {transform_indices = @transform_3, window_bounds = array<i64: 8, 256>}]} {
    %c0_i32 = arith.constant 0 : i32
    %0 = arith.cmpi eq, %arg2, %c0_i32 : i32
    %1 = arith.extui %0 : i1 to i32
    %c0_i32_0 = arith.constant 0 : i32
    %2 = arith.cmpi ne, %1, %c0_i32_0 : i32
    scf.if %2 {
      %cst_10 = arith.constant 0.000000e+00 : f32
      %13 = vector.broadcast %cst_10 : f32 to vector<8x256xf32>
      %c0_11 = arith.constant 0 : index
      %c0_12 = arith.constant 0 : index
      %14 = vector.load %arg7[%c0_11, %c0_12] : memref<8x256xf32, #tpu.memory_space<vmem>>, vector<8x256xf32>
      tpu.vector_store %arg7[%c0_11, %c0_12], %13 {strides = array<i32>} : memref<8x256xf32, #tpu.memory_space<vmem>>, vector<8x256xf32>,
    } else {
    }
    %c0 = arith.constant 0 : index
    %c0_1 = arith.constant 0 : index
    %3 = vector.load %arg7[%c0, %c0_1] : memref<8x256xf32, #tpu.memory_space<vmem>>, vector<8x256xf32>
    %c0_2 = arith.constant 0 : index
    %c0_3 = arith.constant 0 : index
    %4 = vector.load %arg3[%c0_2, %c0_3] : memref<8x256xf32, #tpu.memory_space<vmem>>, vector<8x256xf32>
    %5 = arith.truncf %4 : vector<8x256xf32> to vector<8x256xbf16>
    %c0_4 = arith.constant 0 : index
    %c0_5 = arith.constant 0 : index
    %6 = vector.load %arg4[%c0_4, %c0_5] : memref<256x256xbf16, #tpu.memory_space<vmem>>, vector<256x256xbf16>
    %cst = arith.constant dense<0.000000e+00> : vector<8x256xf32>
    %7 = tpu.matmul %5, %6, %cst {dimension_numbers = #tpu.dot_dimension_numbers<[1], [0], [0], [1], [0, 0, 1, 1], [], []>} : vector<8x256xbf16>, vector<256x256xbf16>, vector<8x256xf32> -> vector<8x256xf32>
    %8 = arith.addf %3, %7 : vector<8x256xf32>
    %c0_6 = arith.constant 0 : index
    %c0_7 = arith.constant 0 : index
    %9 = vector.load %arg7[%c0_6, %c0_7] : memref<8x256xf32, #tpu.memory_space<vmem>>, vector<8x256xf32>
    tpu.vector_store %arg7[%c0_6, %c0_7], %8 {strides = array<i32>} : memref<8x256xf32, #tpu.memory_space<vmem>>, vector<8x256xf32>,
    %c0_i32_8 = arith.constant 0 : i32
    %10 = arith.cmpi eq, %arg2, %c0_i32_8 : i32
    %11 = arith.extui %10 : i1 to i32
    %c0_i32_9 = arith.constant 0 : i32
    %12 = arith.cmpi ne, %11, %c0_i32_9 : i32
    scf.if %12 {
      %c0_10 = arith.constant 0 : index
      %c0_11 = arith.constant 0 : index
      %13 = vector.load %arg7[%c0_10, %c0_11] : memref<8x256xf32, #tpu.memory_space<vmem>>, vector<8x256xf32>
      %c0_12 = arith.constant 0 : index
      %c0_13 = arith.constant 0 : index
      %14 = vector.load %arg5[%c0_12, %c0_13] : memref<1x256xf32, #tpu.memory_space<vmem>>, vector<1x256xf32>
      %15 = vector.broadcast %14 : vector<1x256xf32> to vector<8x256xf32>
      %16 = arith.addf %13, %15 : vector<8x256xf32>
      %17 = tpu.iota {dimensions = array<i32: 1>} : vector<8x256xi32>
      %c256_i32 = arith.constant 256 : i32
      %18 = arith.muli %arg0, %c256_i32 : i32
      %19 = vector.broadcast %18 : i32 to vector<8x256xi32>
      %20 = arith.addi %17, %19 : vector<8x256xi32>
      %c128_i32 = arith.constant 128 : i32
      %21 = vector.broadcast %c128_i32 : i32 to vector<8x256xi32>
      %22 = arith.cmpi sge, %20, %21 : vector<8x256xi32>
      %cst_14 = arith.constant 0.000000e+00 : f32
      %23 = vector.broadcast %cst_14 : f32 to vector<8x256xf32>
      %24 = arith.maximumf %16, %23 : vector<8x256xf32>
      %25 = math.absf %16 : vector<8x256xf32>
      %cst_15 = arith.constant 0.000000e+00 : f32
      %26 = vector.broadcast %cst_15 : f32 to vector<8x256xf32>
      %27 = arith.subf %26, %25 : vector<8x256xf32>
      %28 = math.exp %27 : vector<8x256xf32>
      %29 = math.log1p %28 : vector<8x256xf32>
      %30 = arith.addf %24, %29 : vector<8x256xf32>
      %31 = arith.select %22, %30, %16 : vector<8x256xi1>, vector<8x256xf32>
      %c0_16 = arith.constant 0 : index
      %c0_17 = arith.constant 0 : index
      %32 = vector.load %arg6[%c0_16, %c0_17] : memref<8x256xf32, #tpu.memory_space<vmem>>, vector<8x256xf32>
      tpu.vector_store %arg6[%c0_16, %c0_17], %31 {strides = array<i32>} : memref<8x256xf32, #tpu.memory_space<vmem>>, vector<8x256xf32>,
    } else {
    }
    return
  }
  func.func @transform_0(%arg0: i32, %arg1: i32, %arg2: i32) -> (i32, i32) {
    %c0_i32 = arith.constant 0 : i32
    return %arg1, %arg2 : i32, i32
  }
  func.func @transform_1(%arg0: i32, %arg1: i32, %arg2: i32) -> (i32, i32) {
    %c0_i32 = arith.constant 0 : i32
    return %arg2, %arg0 : i32, i32
  }
  func.func @transform_2(%arg0: i32, %arg1: i32, %arg2: i32) -> (i32, i32) {
    %c0_i32 = arith.constant 0 : i32
    %c0_i32_0 = arith.constant 0 : i32
    return %c0_i32, %arg0 : i32, i32
  }
  func.func @transform_3(%arg0: i32, %arg1: i32, %arg2: i32) -> (i32, i32) {
    %c0_i32 = arith.constant 0 : i32
    return %arg1, %arg0 : i32, i32
  }
}

module attributes {stable_mosaic.version = 11 : i64} {
  func.func @_bigru_kernel(%arg0: i32, %arg1: memref<32x128xf32, #tpu.memory_space<vmem>>, %arg2: memref<32x128xf32, #tpu.memory_space<vmem>>, %arg3: memref<128x384xbf16, #tpu.memory_space<vmem>>, %arg4: memref<1x384xf32, #tpu.memory_space<vmem>>, %arg5: memref<128x384xbf16, #tpu.memory_space<vmem>>, %arg6: memref<1x128xf32, #tpu.memory_space<vmem>>, %arg7: memref<128x384xbf16, #tpu.memory_space<vmem>>, %arg8: memref<1x384xf32, #tpu.memory_space<vmem>>, %arg9: memref<128x384xbf16, #tpu.memory_space<vmem>>, %arg10: memref<1x128xf32, #tpu.memory_space<vmem>>, %arg11: memref<8x256xf32, #tpu.memory_space<vmem>>, %arg12: memref<8x128xf32, #tpu.memory_space<vmem>>, %arg13: memref<8x128xf32, #tpu.memory_space<vmem>>, %arg14: memref<32x384xf32, #tpu.memory_space<vmem>>, %arg15: memref<32x384xf32, #tpu.memory_space<vmem>>) attributes {dimension_semantics = [#tpu.dimension_semantics<arbitrary>], iteration_bounds = array<i64: 2>, scalar_prefetch = 0 : i64, scratch_operands = 4 : i64, tpu.core_type = #tpu.core_type<tc>, window_params = [{transform_indices = @transform_0, window_bounds = array<i64: 32, 128>}, {transform_indices = @transform_1, window_bounds = array<i64: 32, 128>}, {pipeline_mode = #tpu.pipeline_mode<synchronous>, transform_indices = @transform_2, window_bounds = array<i64: 128, 384>}, {pipeline_mode = #tpu.pipeline_mode<synchronous>, transform_indices = @transform_3, window_bounds = array<i64: 1, 384>}, {pipeline_mode = #tpu.pipeline_mode<synchronous>, transform_indices = @transform_4, window_bounds = array<i64: 128, 384>}, {pipeline_mode = #tpu.pipeline_mode<synchronous>, transform_indices = @transform_5, window_bounds = array<i64: 1, 128>}, {pipeline_mode = #tpu.pipeline_mode<synchronous>, transform_indices = @transform_6, window_bounds = array<i64: 128, 384>}, {pipeline_mode = #tpu.pipeline_mode<synchronous>, transform_indices = @transform_7, window_bounds = array<i64: 1, 384>}, {pipeline_mode = #tpu.pipeline_mode<synchronous>, transform_indices = @transform_8, window_bounds = array<i64: 128, 384>}, {pipeline_mode = #tpu.pipeline_mode<synchronous>, transform_indices = @transform_9, window_bounds = array<i64: 1, 128>}, {pipeline_mode = #tpu.pipeline_mode<synchronous>, transform_indices = @transform_10, window_bounds = array<i64: 8, 256>}]} {
    %c0_i32 = arith.constant 0 : i32
    %0 = arith.cmpi eq, %arg0, %c0_i32 : i32
    %1 = arith.extui %0 : i1 to i32
    %c0_i32_0 = arith.constant 0 : i32
    %2 = arith.cmpi ne, %1, %c0_i32_0 : i32
    scf.if %2 {
      %cst_38 = arith.constant 0.000000e+00 : f32
      %31 = vector.broadcast %cst_38 : f32 to vector<8x128xf32>
      %c0_39 = arith.constant 0 : index
      %c0_40 = arith.constant 0 : index
      %32 = vector.load %arg12[%c0_39, %c0_40] : memref<8x128xf32, #tpu.memory_space<vmem>>, vector<8x128xf32>
      tpu.vector_store %arg12[%c0_39, %c0_40], %31 {strides = array<i32>} : memref<8x128xf32, #tpu.memory_space<vmem>>, vector<8x128xf32>,
      %cst_41 = arith.constant 0.000000e+00 : f32
      %33 = vector.broadcast %cst_41 : f32 to vector<8x128xf32>
      %c0_42 = arith.constant 0 : index
      %c0_43 = arith.constant 0 : index
      %34 = vector.load %arg13[%c0_42, %c0_43] : memref<8x128xf32, #tpu.memory_space<vmem>>, vector<8x128xf32>
      tpu.vector_store %arg13[%c0_42, %c0_43], %33 {strides = array<i32>} : memref<8x128xf32, #tpu.memory_space<vmem>>, vector<8x128xf32>,
    } else {
    }
    %c0 = arith.constant 0 : index
    %c0_1 = arith.constant 0 : index
    %3 = vector.load %arg1[%c0, %c0_1] : memref<32x128xf32, #tpu.memory_space<vmem>>, vector<32x128xf32>
    %4 = arith.truncf %3 : vector<32x128xf32> to vector<32x128xbf16>
    %c0_2 = arith.constant 0 : index
    %c0_3 = arith.constant 0 : index
    %5 = vector.load %arg3[%c0_2, %c0_3] : memref<128x384xbf16, #tpu.memory_space<vmem>>, vector<128x384xbf16>
    %cst = arith.constant dense<0.000000e+00> : vector<32x384xf32>
    %6 = tpu.matmul %4, %5, %cst {dimension_numbers = #tpu.dot_dimension_numbers<[1], [0], [0], [1], [0, 0, 1, 1], [], []>} : vector<32x128xbf16>, vector<128x384xbf16>, vector<32x384xf32> -> vector<32x384xf32>
    %c0_4 = arith.constant 0 : index
    %c0_5 = arith.constant 0 : index
    %7 = vector.load %arg4[%c0_4, %c0_5] : memref<1x384xf32, #tpu.memory_space<vmem>>, vector<1x384xf32>
    %8 = vector.broadcast %7 : vector<1x384xf32> to vector<32x384xf32>
    %9 = arith.addf %6, %8 : vector<32x384xf32>
    %c0_6 = arith.constant 0 : index
    %c0_7 = arith.constant 0 : index
    %10 = vector.load %arg14[%c0_6, %c0_7] : memref<32x384xf32, #tpu.memory_space<vmem>>, vector<32x384xf32>
    tpu.vector_store %arg14[%c0_6, %c0_7], %9 {strides = array<i32>} : memref<32x384xf32, #tpu.memory_space<vmem>>, vector<32x384xf32>,
    %c0_8 = arith.constant 0 : index
    %c0_9 = arith.constant 0 : index
    %11 = vector.load %arg2[%c0_8, %c0_9] : memref<32x128xf32, #tpu.memory_space<vmem>>, vector<32x128xf32>
    %12 = arith.truncf %11 : vector<32x128xf32> to vector<32x128xbf16>
    %c0_10 = arith.constant 0 : index
    %c0_11 = arith.constant 0 : index
    %13 = vector.load %arg7[%c0_10, %c0_11] : memref<128x384xbf16, #tpu.memory_space<vmem>>, vector<128x384xbf16>
    %cst_12 = arith.constant dense<0.000000e+00> : vector<32x384xf32>
    %14 = tpu.matmul %12, %13, %cst_12 {dimension_numbers = #tpu.dot_dimension_numbers<[1], [0], [0], [1], [0, 0, 1, 1], [], []>} : vector<32x128xbf16>, vector<128x384xbf16>, vector<32x384xf32> -> vector<32x384xf32>
    %c0_13 = arith.constant 0 : index
    %c0_14 = arith.constant 0 : index
    %15 = vector.load %arg8[%c0_13, %c0_14] : memref<1x384xf32, #tpu.memory_space<vmem>>, vector<1x384xf32>
    %16 = vector.broadcast %15 : vector<1x384xf32> to vector<32x384xf32>
    %17 = arith.addf %14, %16 : vector<32x384xf32>
    %c0_15 = arith.constant 0 : index
    %c0_16 = arith.constant 0 : index
    %18 = vector.load %arg15[%c0_15, %c0_16] : memref<32x384xf32, #tpu.memory_space<vmem>>, vector<32x384xf32>
    tpu.vector_store %arg15[%c0_15, %c0_16], %17 {strides = array<i32>} : memref<32x384xf32, #tpu.memory_space<vmem>>, vector<32x384xf32>,
    %c0_17 = arith.constant 0 : index
    %c0_18 = arith.constant 0 : index
    %19 = vector.load %arg5[%c0_17, %c0_18] : memref<128x384xbf16, #tpu.memory_space<vmem>>, vector<128x384xbf16>
    %c0_19 = arith.constant 0 : index
    %c0_20 = arith.constant 0 : index
    %20 = vector.load %arg9[%c0_19, %c0_20] : memref<128x384xbf16, #tpu.memory_space<vmem>>, vector<128x384xbf16>
    %c0_21 = arith.constant 0 : index
    %c0_22 = arith.constant 0 : index
    %21 = vector.load %arg6[%c0_21, %c0_22] : memref<1x128xf32, #tpu.memory_space<vmem>>, vector<1x128xf32>
    %c0_23 = arith.constant 0 : index
    %c0_24 = arith.constant 0 : index
    %22 = vector.load %arg10[%c0_23, %c0_24] : memref<1x128xf32, #tpu.memory_space<vmem>>, vector<1x128xf32>
    %c0_25 = arith.constant 0 : index
    %c0_26 = arith.constant 0 : index
    %23 = vector.load %arg12[%c0_25, %c0_26] : memref<8x128xf32, #tpu.memory_space<vmem>>, vector<8x128xf32>
    %c0_27 = arith.constant 0 : index
    %c0_28 = arith.constant 0 : index
    %24 = vector.load %arg13[%c0_27, %c0_28] : memref<8x128xf32, #tpu.memory_space<vmem>>, vector<8x128xf32>
    %c0_i32_29 = arith.constant 0 : i32
    %c4_i32 = arith.constant 4 : i32
    %25 = arith.addi %c0_i32_29, %c4_i32 : i32
    %c1_i32 = arith.constant 1 : i32
    %26:2 = scf.for %arg16 = %c0_i32_29 to %25 step %c1_i32 iter_args(%arg17 = %23, %arg18 = %24) -> (vector<8x128xf32>, vector<8x128xf32>)  : i32 {
      %c8_i32 = arith.constant 8 : i32
      %31 = arith.muli %arg16, %c8_i32 : i32
      %32 = arith.index_cast %31 : i32 to index
      %c0_38 = arith.constant 0 : index
      %33 = vector.load %arg14[%32, %c0_38] : memref<32x384xf32, #tpu.memory_space<vmem>>, vector<8x384xf32>
      %c3_i32 = arith.constant 3 : i32
      %34 = arith.subi %c3_i32, %arg16 : i32
      %c8_i32_39 = arith.constant 8 : i32
      %35 = arith.muli %34, %c8_i32_39 : i32
      %36 = arith.index_cast %35 : i32 to index
      %c0_40 = arith.constant 0 : index
      %37 = vector.load %arg15[%36, %c0_40] : memref<32x384xf32, #tpu.memory_space<vmem>>, vector<8x384xf32>
      %38 = arith.truncf %arg17 : vector<8x128xf32> to vector<8x128xbf16>
      %cst_41 = arith.constant dense<0.000000e+00> : vector<8x384xf32>
      %39 = tpu.matmul %38, %19, %cst_41 {dimension_numbers = #tpu.dot_dimension_numbers<[1], [0], [0], [1], [0, 0, 1, 1], [], []>} : vector<8x128xbf16>, vector<128x384xbf16>, vector<8x384xf32> -> vector<8x384xf32>
      %40 = vector.extract_strided_slice %33 {offsets = [0, 0], sizes = [8, 128], strides = [1, 1]} : vector<8x384xf32> to vector<8x128xf32>
      %41 = vector.extract_strided_slice %39 {offsets = [0, 0], sizes = [8, 128], strides = [1, 1]} : vector<8x384xf32> to vector<8x128xf32>
      %42 = arith.addf %40, %41 : vector<8x128xf32>
      %43 = arith.negf %42 : vector<8x128xf32>
      %44 = math.exp %43 : vector<8x128xf32>
      %cst_42 = arith.constant 1.000000e+00 : f32
      %45 = vector.broadcast %cst_42 : f32 to vector<8x128xf32>
      %46 = arith.addf %45, %44 : vector<8x128xf32>
      %47 = arith.divf %45, %46 : vector<8x128xf32>
      %48 = vector.extract_strided_slice %33 {offsets = [0, 128], sizes = [8, 128], strides = [1, 1]} : vector<8x384xf32> to vector<8x128xf32>
      %49 = vector.extract_strided_slice %39 {offsets = [0, 128], sizes = [8, 128], strides = [1, 1]} : vector<8x384xf32> to vector<8x128xf32>
      %50 = arith.addf %48, %49 : vector<8x128xf32>
      %51 = arith.negf %50 : vector<8x128xf32>
      %52 = math.exp %51 : vector<8x128xf32>
      %cst_43 = arith.constant 1.000000e+00 : f32
      %53 = vector.broadcast %cst_43 : f32 to vector<8x128xf32>
      %54 = arith.addf %53, %52 : vector<8x128xf32>
      %55 = arith.divf %53, %54 : vector<8x128xf32>
      %56 = vector.extract_strided_slice %33 {offsets = [0, 256], sizes = [8, 128], strides = [1, 1]} : vector<8x384xf32> to vector<8x128xf32>
      %57 = vector.extract_strided_slice %39 {offsets = [0, 256], sizes = [8, 128], strides = [1, 1]} : vector<8x384xf32> to vector<8x128xf32>
      %58 = vector.broadcast %21 : vector<1x128xf32> to vector<8x128xf32>
      %59 = arith.addf %57, %58 : vector<8x128xf32>
      %60 = arith.mulf %47, %59 : vector<8x128xf32>
      %61 = arith.addf %56, %60 : vector<8x128xf32>
      %62 = math.tanh %61 : vector<8x128xf32>
      %cst_44 = arith.constant 1.000000e+00 : f32
      %63 = vector.broadcast %cst_44 : f32 to vector<8x128xf32>
      %64 = arith.subf %63, %55 : vector<8x128xf32>
      %65 = arith.mulf %64, %62 : vector<8x128xf32>
      %66 = arith.mulf %55, %arg17 : vector<8x128xf32>
      %67 = arith.addf %65, %66 : vector<8x128xf32>
      %68 = arith.truncf %arg18 : vector<8x128xf32> to vector<8x128xbf16>
      %cst_45 = arith.constant dense<0.000000e+00> : vector<8x384xf32>
      %69 = tpu.matmul %68, %20, %cst_45 {dimension_numbers = #tpu.dot_dimension_numbers<[1], [0], [0], [1], [0, 0, 1, 1], [], []>} : vector<8x128xbf16>, vector<128x384xbf16>, vector<8x384xf32> -> vector<8x384xf32>
      %70 = vector.extract_strided_slice %37 {offsets = [0, 0], sizes = [8, 128], strides = [1, 1]} : vector<8x384xf32> to vector<8x128xf32>
      %71 = vector.extract_strided_slice %69 {offsets = [0, 0], sizes = [8, 128], strides = [1, 1]} : vector<8x384xf32> to vector<8x128xf32>
      %72 = arith.addf %70, %71 : vector<8x128xf32>
      %73 = arith.negf %72 : vector<8x128xf32>
      %74 = math.exp %73 : vector<8x128xf32>
      %cst_46 = arith.constant 1.000000e+00 : f32
      %75 = vector.broadcast %cst_46 : f32 to vector<8x128xf32>
      %76 = arith.addf %75, %74 : vector<8x128xf32>
      %77 = arith.divf %75, %76 : vector<8x128xf32>
      %78 = vector.extract_strided_slice %37 {offsets = [0, 128], sizes = [8, 128], strides = [1, 1]} : vector<8x384xf32> to vector<8x128xf32>
      %79 = vector.extract_strided_slice %69 {offsets = [0, 128], sizes = [8, 128], strides = [1, 1]} : vector<8x384xf32> to vector<8x128xf32>
      %80 = arith.addf %78, %79 : vector<8x128xf32>
      %81 = arith.negf %80 : vector<8x128xf32>
      %82 = math.exp %81 : vector<8x128xf32>
      %cst_47 = arith.constant 1.000000e+00 : f32
      %83 = vector.broadcast %cst_47 : f32 to vector<8x128xf32>
      %84 = arith.addf %83, %82 : vector<8x128xf32>
      %85 = arith.divf %83, %84 : vector<8x128xf32>
      %86 = vector.extract_strided_slice %37 {offsets = [0, 256], sizes = [8, 128], strides = [1, 1]} : vector<8x384xf32> to vector<8x128xf32>
      %87 = vector.extract_strided_slice %69 {offsets = [0, 256], sizes = [8, 128], strides = [1, 1]} : vector<8x384xf32> to vector<8x128xf32>
      %88 = vector.broadcast %22 : vector<1x128xf32> to vector<8x128xf32>
      %89 = arith.addf %87, %88 : vector<8x128xf32>
      %90 = arith.mulf %77, %89 : vector<8x128xf32>
      %91 = arith.addf %86, %90 : vector<8x128xf32>
      %92 = math.tanh %91 : vector<8x128xf32>
      %cst_48 = arith.constant 1.000000e+00 : f32
      %93 = vector.broadcast %cst_48 : f32 to vector<8x128xf32>
      %94 = arith.subf %93, %85 : vector<8x128xf32>
      %95 = arith.mulf %94, %92 : vector<8x128xf32>
      %96 = arith.mulf %85, %arg18 : vector<8x128xf32>
      %97 = arith.addf %95, %96 : vector<8x128xf32>
      scf.yield %67, %97 : vector<8x128xf32>, vector<8x128xf32>
    }
    %c4_i32_30 = arith.constant 4 : i32
    %c0_31 = arith.constant 0 : index
    %c0_32 = arith.constant 0 : index
    %27 = vector.load %arg12[%c0_31, %c0_32] : memref<8x128xf32, #tpu.memory_space<vmem>>, vector<8x128xf32>
    tpu.vector_store %arg12[%c0_31, %c0_32], %26#0 {strides = array<i32>} : memref<8x128xf32, #tpu.memory_space<vmem>>, vector<8x128xf32>,
    %c0_33 = arith.constant 0 : index
    %c0_34 = arith.constant 0 : index
    %28 = vector.load %arg13[%c0_33, %c0_34] : memref<8x128xf32, #tpu.memory_space<vmem>>, vector<8x128xf32>
    tpu.vector_store %arg13[%c0_33, %c0_34], %26#1 {strides = array<i32>} : memref<8x128xf32, #tpu.memory_space<vmem>>, vector<8x128xf32>,
    %c0_35 = arith.constant 0 : index
    %c0_36 = arith.constant 0 : index
    %29 = vector.load %arg11[%c0_35, %c0_36] : memref<8x256xf32, #tpu.memory_space<vmem>>, vector<8x128xf32>
    tpu.vector_store %arg11[%c0_35, %c0_36], %26#0 {strides = array<i32>} : memref<8x256xf32, #tpu.memory_space<vmem>>, vector<8x128xf32>,
    %c0_37 = arith.constant 0 : index
    %c128 = arith.constant 128 : index
    %30 = vector.load %arg11[%c0_37, %c128] : memref<8x256xf32, #tpu.memory_space<vmem>>, vector<8x128xf32>
    tpu.vector_store %arg11[%c0_37, %c128], %26#1 {strides = array<i32>} : memref<8x256xf32, #tpu.memory_space<vmem>>, vector<8x128xf32>,
    return
  }
  func.func @transform_0(%arg0: i32) -> (i32, i32) {
    %c0_i32 = arith.constant 0 : i32
    %c0_i32_0 = arith.constant 0 : i32
    return %arg0, %c0_i32 : i32, i32
  }
  func.func @transform_1(%arg0: i32) -> (i32, i32) {
    %c1_i32 = arith.constant 1 : i32
    %0 = arith.subi %c1_i32, %arg0 : i32
    %c0_i32 = arith.constant 0 : i32
    %c0_i32_0 = arith.constant 0 : i32
    return %0, %c0_i32 : i32, i32
  }
  func.func @transform_2(%arg0: i32) -> (i32, i32) {
    %c0_i32 = arith.constant 0 : i32
    %c0_i32_0 = arith.constant 0 : i32
    %c0_i32_1 = arith.constant 0 : i32
    return %c0_i32, %c0_i32_0 : i32, i32
  }
  func.func @transform_3(%arg0: i32) -> (i32, i32) {
    %c0_i32 = arith.constant 0 : i32
    %c0_i32_0 = arith.constant 0 : i32
    %c0_i32_1 = arith.constant 0 : i32
    return %c0_i32, %c0_i32_0 : i32, i32
  }
  func.func @transform_4(%arg0: i32) -> (i32, i32) {
    %c0_i32 = arith.constant 0 : i32
    %c0_i32_0 = arith.constant 0 : i32
    %c0_i32_1 = arith.constant 0 : i32
    return %c0_i32, %c0_i32_0 : i32, i32
  }
  func.func @transform_5(%arg0: i32) -> (i32, i32) {
    %c0_i32 = arith.constant 0 : i32
    %c0_i32_0 = arith.constant 0 : i32
    %c0_i32_1 = arith.constant 0 : i32
    return %c0_i32, %c0_i32_0 : i32, i32
  }
  func.func @transform_6(%arg0: i32) -> (i32, i32) {
    %c0_i32 = arith.constant 0 : i32
    %c0_i32_0 = arith.constant 0 : i32
    %c0_i32_1 = arith.constant 0 : i32
    return %c0_i32, %c0_i32_0 : i32, i32
  }
  func.func @transform_7(%arg0: i32) -> (i32, i32) {
    %c0_i32 = arith.constant 0 : i32
    %c0_i32_0 = arith.constant 0 : i32
    %c0_i32_1 = arith.constant 0 : i32
    return %c0_i32, %c0_i32_0 : i32, i32
  }
  func.func @transform_8(%arg0: i32) -> (i32, i32) {
    %c0_i32 = arith.constant 0 : i32
    %c0_i32_0 = arith.constant 0 : i32
    %c0_i32_1 = arith.constant 0 : i32
    return %c0_i32, %c0_i32_0 : i32, i32
  }
  func.func @transform_9(%arg0: i32) -> (i32, i32) {
    %c0_i32 = arith.constant 0 : i32
    %c0_i32_0 = arith.constant 0 : i32
    %c0_i32_1 = arith.constant 0 : i32
    return %c0_i32, %c0_i32_0 : i32, i32
  }
  func.func @transform_10(%arg0: i32) -> (i32, i32) {
    %c0_i32 = arith.constant 0 : i32
    %c0_i32_0 = arith.constant 0 : i32
    %c0_i32_1 = arith.constant 0 : i32
    return %c0_i32, %c0_i32_0 : i32, i32
  }
}

module attributes {stable_mosaic.version = 11 : i64} {
  func.func @_dense_kernel(%arg0: i32, %arg1: i32, %arg2: i32, %arg3: memref<8x128xf32, #tpu.memory_space<vmem>>, %arg4: memref<128x128xbf16, #tpu.memory_space<vmem>>, %arg5: memref<1x128xf32, #tpu.memory_space<vmem>>, %arg6: memref<8x128xf32, #tpu.memory_space<vmem>>, %arg7: memref<8x128xf32, #tpu.memory_space<vmem>>) attributes {dimension_semantics = [#tpu.dimension_semantics<parallel>, #tpu.dimension_semantics<parallel>, #tpu.dimension_semantics<arbitrary>], iteration_bounds = array<i64: 1, 1, 1>, scalar_prefetch = 0 : i64, scratch_operands = 1 : i64, tpu.core_type = #tpu.core_type<tc>, window_params = [{transform_indices = @transform_0, window_bounds = array<i64: 8, 128>}, {transform_indices = @transform_1, window_bounds = array<i64: 128, 128>}, {transform_indices = @transform_2, window_bounds = array<i64: 1, 128>}, {transform_indices = @transform_3, window_bounds = array<i64: 8, 128>}]} {
    %c0_i32 = arith.constant 0 : i32
    %0 = arith.cmpi eq, %arg2, %c0_i32 : i32
    %1 = arith.extui %0 : i1 to i32
    %c0_i32_0 = arith.constant 0 : i32
    %2 = arith.cmpi ne, %1, %c0_i32_0 : i32
    scf.if %2 {
      %cst_10 = arith.constant 0.000000e+00 : f32
      %13 = vector.broadcast %cst_10 : f32 to vector<8x128xf32>
      %c0_11 = arith.constant 0 : index
      %c0_12 = arith.constant 0 : index
      %14 = vector.load %arg7[%c0_11, %c0_12] : memref<8x128xf32, #tpu.memory_space<vmem>>, vector<8x128xf32>
      tpu.vector_store %arg7[%c0_11, %c0_12], %13 {strides = array<i32>} : memref<8x128xf32, #tpu.memory_space<vmem>>, vector<8x128xf32>,
    } else {
    }
    %c0 = arith.constant 0 : index
    %c0_1 = arith.constant 0 : index
    %3 = vector.load %arg7[%c0, %c0_1] : memref<8x128xf32, #tpu.memory_space<vmem>>, vector<8x128xf32>
    %c0_2 = arith.constant 0 : index
    %c0_3 = arith.constant 0 : index
    %4 = vector.load %arg3[%c0_2, %c0_3] : memref<8x128xf32, #tpu.memory_space<vmem>>, vector<8x128xf32>
    %5 = arith.truncf %4 : vector<8x128xf32> to vector<8x128xbf16>
    %c0_4 = arith.constant 0 : index
    %c0_5 = arith.constant 0 : index
    %6 = vector.load %arg4[%c0_4, %c0_5] : memref<128x128xbf16, #tpu.memory_space<vmem>>, vector<128x128xbf16>
    %cst = arith.constant dense<0.000000e+00> : vector<8x128xf32>
    %7 = tpu.matmul %5, %6, %cst {dimension_numbers = #tpu.dot_dimension_numbers<[1], [0], [0], [1], [0, 0, 1, 1], [], []>} : vector<8x128xbf16>, vector<128x128xbf16>, vector<8x128xf32> -> vector<8x128xf32>
    %8 = arith.addf %3, %7 : vector<8x128xf32>
    %c0_6 = arith.constant 0 : index
    %c0_7 = arith.constant 0 : index
    %9 = vector.load %arg7[%c0_6, %c0_7] : memref<8x128xf32, #tpu.memory_space<vmem>>, vector<8x128xf32>
    tpu.vector_store %arg7[%c0_6, %c0_7], %8 {strides = array<i32>} : memref<8x128xf32, #tpu.memory_space<vmem>>, vector<8x128xf32>,
    %c0_i32_8 = arith.constant 0 : i32
    %10 = arith.cmpi eq, %arg2, %c0_i32_8 : i32
    %11 = arith.extui %10 : i1 to i32
    %c0_i32_9 = arith.constant 0 : i32
    %12 = arith.cmpi ne, %11, %c0_i32_9 : i32
    scf.if %12 {
      %c0_10 = arith.constant 0 : index
      %c0_11 = arith.constant 0 : index
      %13 = vector.load %arg7[%c0_10, %c0_11] : memref<8x128xf32, #tpu.memory_space<vmem>>, vector<8x128xf32>
      %c0_12 = arith.constant 0 : index
      %c0_13 = arith.constant 0 : index
      %14 = vector.load %arg5[%c0_12, %c0_13] : memref<1x128xf32, #tpu.memory_space<vmem>>, vector<1x128xf32>
      %15 = vector.broadcast %14 : vector<1x128xf32> to vector<8x128xf32>
      %16 = arith.addf %13, %15 : vector<8x128xf32>
      %17 = math.tanh %16 : vector<8x128xf32>
      %c0_14 = arith.constant 0 : index
      %c0_15 = arith.constant 0 : index
      %18 = vector.load %arg6[%c0_14, %c0_15] : memref<8x128xf32, #tpu.memory_space<vmem>>, vector<8x128xf32>
      tpu.vector_store %arg6[%c0_14, %c0_15], %17 {strides = array<i32>} : memref<8x128xf32, #tpu.memory_space<vmem>>, vector<8x128xf32>,
    } else {
    }
    return
  }
  func.func @transform_0(%arg0: i32, %arg1: i32, %arg2: i32) -> (i32, i32) {
    %c0_i32 = arith.constant 0 : i32
    return %arg1, %arg2 : i32, i32
  }
  func.func @transform_1(%arg0: i32, %arg1: i32, %arg2: i32) -> (i32, i32) {
    %c0_i32 = arith.constant 0 : i32
    return %arg2, %arg0 : i32, i32
  }
  func.func @transform_2(%arg0: i32, %arg1: i32, %arg2: i32) -> (i32, i32) {
    %c0_i32 = arith.constant 0 : i32
    %c0_i32_0 = arith.constant 0 : i32
    return %c0_i32, %arg0 : i32, i32
  }
  func.func @transform_3(%arg0: i32, %arg1: i32, %arg2: i32) -> (i32, i32) {
    %c0_i32 = arith.constant 0 : i32
    return %arg1, %arg0 : i32, i32
  }
}

module attributes {stable_mosaic.version = 11 : i64} {
  func.func @_gru_seq_kernel(%arg0: i32, %arg1: memref<32x128xf32, #tpu.memory_space<vmem>>, %arg2: memref<8x128xf32, #tpu.memory_space<vmem>>, %arg3: memref<128x384xbf16, #tpu.memory_space<vmem>>, %arg4: memref<1x384xf32, #tpu.memory_space<vmem>>, %arg5: memref<128x384xbf16, #tpu.memory_space<vmem>>, %arg6: memref<1x128xf32, #tpu.memory_space<vmem>>, %arg7: memref<4x8x128xbf16, #tpu.memory_space<vmem>>, %arg8: memref<8x128xf32, #tpu.memory_space<vmem>>, %arg9: memref<32x384xf32, #tpu.memory_space<vmem>>) attributes {dimension_semantics = [#tpu.dimension_semantics<arbitrary>], iteration_bounds = array<i64: 2>, scalar_prefetch = 0 : i64, scratch_operands = 2 : i64, tpu.core_type = #tpu.core_type<tc>, window_params = [{transform_indices = @transform_0, window_bounds = array<i64: 32, 128>}, {pipeline_mode = #tpu.pipeline_mode<synchronous>, transform_indices = @transform_1, window_bounds = array<i64: 8, 128>}, {pipeline_mode = #tpu.pipeline_mode<synchronous>, transform_indices = @transform_2, window_bounds = array<i64: 128, 384>}, {pipeline_mode = #tpu.pipeline_mode<synchronous>, transform_indices = @transform_3, window_bounds = array<i64: 1, 384>}, {pipeline_mode = #tpu.pipeline_mode<synchronous>, transform_indices = @transform_4, window_bounds = array<i64: 128, 384>}, {pipeline_mode = #tpu.pipeline_mode<synchronous>, transform_indices = @transform_5, window_bounds = array<i64: 1, 128>}, {transform_indices = @transform_6, window_bounds = array<i64: 4, 8, 128>}]} {
    %c0_i32 = arith.constant 0 : i32
    %0 = arith.cmpi eq, %arg0, %c0_i32 : i32
    %1 = arith.extui %0 : i1 to i32
    %c0_i32_0 = arith.constant 0 : i32
    %2 = arith.cmpi ne, %1, %c0_i32_0 : i32
    scf.if %2 {
      %c0_18 = arith.constant 0 : index
      %c0_19 = arith.constant 0 : index
      %17 = vector.load %arg2[%c0_18, %c0_19] : memref<8x128xf32, #tpu.memory_space<vmem>>, vector<8x128xf32>
      %c0_20 = arith.constant 0 : index
      %c0_21 = arith.constant 0 : index
      %18 = vector.load %arg8[%c0_20, %c0_21] : memref<8x128xf32, #tpu.memory_space<vmem>>, vector<8x128xf32>
      tpu.vector_store %arg8[%c0_20, %c0_21], %17 {strides = array<i32>} : memref<8x128xf32, #tpu.memory_space<vmem>>, vector<8x128xf32>,
    } else {
    }
    %c0 = arith.constant 0 : index
    %c0_1 = arith.constant 0 : index
    %3 = vector.load %arg1[%c0, %c0_1] : memref<32x128xf32, #tpu.memory_space<vmem>>, vector<32x128xf32>
    %4 = arith.truncf %3 : vector<32x128xf32> to vector<32x128xbf16>
    %c0_2 = arith.constant 0 : index
    %c0_3 = arith.constant 0 : index
    %5 = vector.load %arg3[%c0_2, %c0_3] : memref<128x384xbf16, #tpu.memory_space<vmem>>, vector<128x384xbf16>
    %cst = arith.constant dense<0.000000e+00> : vector<32x384xf32>
    %6 = tpu.matmul %4, %5, %cst {dimension_numbers = #tpu.dot_dimension_numbers<[1], [0], [0], [1], [0, 0, 1, 1], [], []>} : vector<32x128xbf16>, vector<128x384xbf16>, vector<32x384xf32> -> vector<32x384xf32>
    %c0_4 = arith.constant 0 : index
    %c0_5 = arith.constant 0 : index
    %7 = vector.load %arg4[%c0_4, %c0_5] : memref<1x384xf32, #tpu.memory_space<vmem>>, vector<1x384xf32>
    %8 = vector.broadcast %7 : vector<1x384xf32> to vector<32x384xf32>
    %9 = arith.addf %6, %8 : vector<32x384xf32>
    %c0_6 = arith.constant 0 : index
    %c0_7 = arith.constant 0 : index
    %10 = vector.load %arg9[%c0_6, %c0_7] : memref<32x384xf32, #tpu.memory_space<vmem>>, vector<32x384xf32>
    tpu.vector_store %arg9[%c0_6, %c0_7], %9 {strides = array<i32>} : memref<32x384xf32, #tpu.memory_space<vmem>>, vector<32x384xf32>,
    %c0_8 = arith.constant 0 : index
    %c0_9 = arith.constant 0 : index
    %11 = vector.load %arg5[%c0_8, %c0_9] : memref<128x384xbf16, #tpu.memory_space<vmem>>, vector<128x384xbf16>
    %c0_10 = arith.constant 0 : index
    %c0_11 = arith.constant 0 : index
    %12 = vector.load %arg6[%c0_10, %c0_11] : memref<1x128xf32, #tpu.memory_space<vmem>>, vector<1x128xf32>
    %c0_12 = arith.constant 0 : index
    %c0_13 = arith.constant 0 : index
    %13 = vector.load %arg8[%c0_12, %c0_13] : memref<8x128xf32, #tpu.memory_space<vmem>>, vector<8x128xf32>
    %c0_i32_14 = arith.constant 0 : i32
    %c4_i32 = arith.constant 4 : i32
    %14 = arith.addi %c0_i32_14, %c4_i32 : i32
    %c1_i32 = arith.constant 1 : i32
    %15 = scf.for %arg10 = %c0_i32_14 to %14 step %c1_i32 iter_args(%arg11 = %13) -> (vector<8x128xf32>)  : i32 {
      %c8_i32 = arith.constant 8 : i32
      %17 = arith.muli %arg10, %c8_i32 : i32
      %18 = arith.index_cast %17 : i32 to index
      %c0_18 = arith.constant 0 : index
      %19 = vector.load %arg9[%18, %c0_18] : memref<32x384xf32, #tpu.memory_space<vmem>>, vector<8x384xf32>
      %20 = arith.truncf %arg11 : vector<8x128xf32> to vector<8x128xbf16>
      %cst_19 = arith.constant dense<0.000000e+00> : vector<8x384xf32>
      %21 = tpu.matmul %20, %11, %cst_19 {dimension_numbers = #tpu.dot_dimension_numbers<[1], [0], [0], [1], [0, 0, 1, 1], [], []>} : vector<8x128xbf16>, vector<128x384xbf16>, vector<8x384xf32> -> vector<8x384xf32>
      %22 = vector.extract_strided_slice %19 {offsets = [0, 0], sizes = [8, 128], strides = [1, 1]} : vector<8x384xf32> to vector<8x128xf32>
      %23 = vector.extract_strided_slice %21 {offsets = [0, 0], sizes = [8, 128], strides = [1, 1]} : vector<8x384xf32> to vector<8x128xf32>
      %24 = arith.addf %22, %23 : vector<8x128xf32>
      %25 = arith.negf %24 : vector<8x128xf32>
      %26 = math.exp %25 : vector<8x128xf32>
      %cst_20 = arith.constant 1.000000e+00 : f32
      %27 = vector.broadcast %cst_20 : f32 to vector<8x128xf32>
      %28 = arith.addf %27, %26 : vector<8x128xf32>
      %29 = arith.divf %27, %28 : vector<8x128xf32>
      %30 = vector.extract_strided_slice %19 {offsets = [0, 128], sizes = [8, 128], strides = [1, 1]} : vector<8x384xf32> to vector<8x128xf32>
      %31 = vector.extract_strided_slice %21 {offsets = [0, 128], sizes = [8, 128], strides = [1, 1]} : vector<8x384xf32> to vector<8x128xf32>
      %32 = arith.addf %30, %31 : vector<8x128xf32>
      %33 = arith.negf %32 : vector<8x128xf32>
      %34 = math.exp %33 : vector<8x128xf32>
      %cst_21 = arith.constant 1.000000e+00 : f32
      %35 = vector.broadcast %cst_21 : f32 to vector<8x128xf32>
      %36 = arith.addf %35, %34 : vector<8x128xf32>
      %37 = arith.divf %35, %36 : vector<8x128xf32>
      %38 = vector.extract_strided_slice %19 {offsets = [0, 256], sizes = [8, 128], strides = [1, 1]} : vector<8x384xf32> to vector<8x128xf32>
      %39 = vector.extract_strided_slice %21 {offsets = [0, 256], sizes = [8, 128], strides = [1, 1]} : vector<8x384xf32> to vector<8x128xf32>
      %40 = vector.broadcast %12 : vector<1x128xf32> to vector<8x128xf32>
      %41 = arith.addf %39, %40 : vector<8x128xf32>
      %42 = arith.mulf %29, %41 : vector<8x128xf32>
      %43 = arith.addf %38, %42 : vector<8x128xf32>
      %44 = math.tanh %43 : vector<8x128xf32>
      %cst_22 = arith.constant 1.000000e+00 : f32
      %45 = vector.broadcast %cst_22 : f32 to vector<8x128xf32>
      %46 = arith.subf %45, %37 : vector<8x128xf32>
      %47 = arith.mulf %46, %44 : vector<8x128xf32>
      %48 = arith.mulf %37, %arg11 : vector<8x128xf32>
      %49 = arith.addf %47, %48 : vector<8x128xf32>
      %50 = arith.truncf %49 : vector<8x128xf32> to vector<8x128xbf16>
      %51 = arith.index_cast %arg10 : i32 to index
      %c0_23 = arith.constant 0 : index
      %c0_24 = arith.constant 0 : index
      %52 = vector.load %arg7[%51, %c0_23, %c0_24] : memref<4x8x128xbf16, #tpu.memory_space<vmem>>, vector<1x8x128xbf16>
      %53 = vector.shape_cast %52 : vector<1x8x128xbf16> to vector<8x128xbf16>
      %54 = vector.shape_cast %50 : vector<8x128xbf16> to vector<1x8x128xbf16>
      tpu.vector_store %arg7[%51, %c0_23, %c0_24], %54 {strides = array<i32>} : memref<4x8x128xbf16, #tpu.memory_space<vmem>>, vector<1x8x128xbf16>,
      scf.yield %49 : vector<8x128xf32>
    }
    %c4_i32_15 = arith.constant 4 : i32
    %c0_16 = arith.constant 0 : index
    %c0_17 = arith.constant 0 : index
    %16 = vector.load %arg8[%c0_16, %c0_17] : memref<8x128xf32, #tpu.memory_space<vmem>>, vector<8x128xf32>
    tpu.vector_store %arg8[%c0_16, %c0_17], %15 {strides = array<i32>} : memref<8x128xf32, #tpu.memory_space<vmem>>, vector<8x128xf32>,
    return
  }
  func.func @transform_0(%arg0: i32) -> (i32, i32) {
    %c0_i32 = arith.constant 0 : i32
    %c0_i32_0 = arith.constant 0 : i32
    return %arg0, %c0_i32 : i32, i32
  }
  func.func @transform_1(%arg0: i32) -> (i32, i32) {
    %c0_i32 = arith.constant 0 : i32
    %c0_i32_0 = arith.constant 0 : i32
    %c0_i32_1 = arith.constant 0 : i32
    return %c0_i32, %c0_i32_0 : i32, i32
  }
  func.func @transform_2(%arg0: i32) -> (i32, i32) {
    %c0_i32 = arith.constant 0 : i32
    %c0_i32_0 = arith.constant 0 : i32
    %c0_i32_1 = arith.constant 0 : i32
    return %c0_i32, %c0_i32_0 : i32, i32
  }
  func.func @transform_3(%arg0: i32) -> (i32, i32) {
    %c0_i32 = arith.constant 0 : i32
    %c0_i32_0 = arith.constant 0 : i32
    %c0_i32_1 = arith.constant 0 : i32
    return %c0_i32, %c0_i32_0 : i32, i32
  }
  func.func @transform_4(%arg0: i32) -> (i32, i32) {
    %c0_i32 = arith.constant 0 : i32
    %c0_i32_0 = arith.constant 0 : i32
    %c0_i32_1 = arith.constant 0 : i32
    return %c0_i32, %c0_i32_0 : i32, i32
  }
  func.func @transform_5(%arg0: i32) -> (i32, i32) {
    %c0_i32 = arith.constant 0 : i32
    %c0_i32_0 = arith.constant 0 : i32
    %c0_i32_1 = arith.constant 0 : i32
    return %c0_i32, %c0_i32_0 : i32, i32
  }
  func.func @transform_6(%arg0: i32) -> (i32, i32, i32) {
    %c0_i32 = arith.constant 0 : i32
    %c0_i32_0 = arith.constant 0 : i32
    %c0_i32_1 = arith.constant 0 : i32
    return %arg0, %c0_i32, %c0_i32_0 : i32, i32, i32
  }
}

module attributes {stable_mosaic.version = 11 : i64} {
  func.func @_dense_kernel(%arg0: i32, %arg1: i32, %arg2: i32, %arg3: memref<64x128xbf16, #tpu.memory_space<vmem>>, %arg4: memref<128x512xbf16, #tpu.memory_space<vmem>>, %arg5: memref<1x512xf32, #tpu.memory_space<vmem>>, %arg6: memref<64x512xf32, #tpu.memory_space<vmem>>, %arg7: memref<64x512xf32, #tpu.memory_space<vmem>>) attributes {dimension_semantics = [#tpu.dimension_semantics<parallel>, #tpu.dimension_semantics<parallel>, #tpu.dimension_semantics<arbitrary>], iteration_bounds = array<i64: 1, 1, 1>, scalar_prefetch = 0 : i64, scratch_operands = 1 : i64, tpu.core_type = #tpu.core_type<tc>, window_params = [{transform_indices = @transform_0, window_bounds = array<i64: 64, 128>}, {transform_indices = @transform_1, window_bounds = array<i64: 128, 512>}, {transform_indices = @transform_2, window_bounds = array<i64: 1, 512>}, {transform_indices = @transform_3, window_bounds = array<i64: 64, 512>}]} {
    %c0_i32 = arith.constant 0 : i32
    %0 = arith.cmpi eq, %arg2, %c0_i32 : i32
    %1 = arith.extui %0 : i1 to i32
    %c0_i32_0 = arith.constant 0 : i32
    %2 = arith.cmpi ne, %1, %c0_i32_0 : i32
    scf.if %2 {
      %cst_10 = arith.constant 0.000000e+00 : f32
      %12 = vector.broadcast %cst_10 : f32 to vector<64x512xf32>
      %c0_11 = arith.constant 0 : index
      %c0_12 = arith.constant 0 : index
      %13 = vector.load %arg7[%c0_11, %c0_12] : memref<64x512xf32, #tpu.memory_space<vmem>>, vector<64x512xf32>
      tpu.vector_store %arg7[%c0_11, %c0_12], %12 {strides = array<i32>} : memref<64x512xf32, #tpu.memory_space<vmem>>, vector<64x512xf32>,
    } else {
    }
    %c0 = arith.constant 0 : index
    %c0_1 = arith.constant 0 : index
    %3 = vector.load %arg7[%c0, %c0_1] : memref<64x512xf32, #tpu.memory_space<vmem>>, vector<64x512xf32>
    %c0_2 = arith.constant 0 : index
    %c0_3 = arith.constant 0 : index
    %4 = vector.load %arg3[%c0_2, %c0_3] : memref<64x128xbf16, #tpu.memory_space<vmem>>, vector<64x128xbf16>
    %c0_4 = arith.constant 0 : index
    %c0_5 = arith.constant 0 : index
    %5 = vector.load %arg4[%c0_4, %c0_5] : memref<128x512xbf16, #tpu.memory_space<vmem>>, vector<128x512xbf16>
    %cst = arith.constant dense<0.000000e+00> : vector<64x512xf32>
    %6 = tpu.matmul %4, %5, %cst {dimension_numbers = #tpu.dot_dimension_numbers<[1], [0], [0], [1], [0, 0, 1, 1], [], []>} : vector<64x128xbf16>, vector<128x512xbf16>, vector<64x512xf32> -> vector<64x512xf32>
    %7 = arith.addf %3, %6 : vector<64x512xf32>
    %c0_6 = arith.constant 0 : index
    %c0_7 = arith.constant 0 : index
    %8 = vector.load %arg7[%c0_6, %c0_7] : memref<64x512xf32, #tpu.memory_space<vmem>>, vector<64x512xf32>
    tpu.vector_store %arg7[%c0_6, %c0_7], %7 {strides = array<i32>} : memref<64x512xf32, #tpu.memory_space<vmem>>, vector<64x512xf32>,
    %c0_i32_8 = arith.constant 0 : i32
    %9 = arith.cmpi eq, %arg2, %c0_i32_8 : i32
    %10 = arith.extui %9 : i1 to i32
    %c0_i32_9 = arith.constant 0 : i32
    %11 = arith.cmpi ne, %10, %c0_i32_9 : i32
    scf.if %11 {
      %c0_10 = arith.constant 0 : index
      %c0_11 = arith.constant 0 : index
      %12 = vector.load %arg7[%c0_10, %c0_11] : memref<64x512xf32, #tpu.memory_space<vmem>>, vector<64x512xf32>
      %c0_12 = arith.constant 0 : index
      %c0_13 = arith.constant 0 : index
      %13 = vector.load %arg5[%c0_12, %c0_13] : memref<1x512xf32, #tpu.memory_space<vmem>>, vector<1x512xf32>
      %14 = vector.broadcast %13 : vector<1x512xf32> to vector<64x512xf32>
      %15 = arith.addf %12, %14 : vector<64x512xf32>
      %c0_14 = arith.constant 0 : index
      %c0_15 = arith.constant 0 : index
      %16 = vector.load %arg6[%c0_14, %c0_15] : memref<64x512xf32, #tpu.memory_space<vmem>>, vector<64x512xf32>
      tpu.vector_store %arg6[%c0_14, %c0_15], %15 {strides = array<i32>} : memref<64x512xf32, #tpu.memory_space<vmem>>, vector<64x512xf32>,
    } else {
    }
    return
  }
  func.func @transform_0(%arg0: i32, %arg1: i32, %arg2: i32) -> (i32, i32) {
    %c0_i32 = arith.constant 0 : i32
    return %arg1, %arg2 : i32, i32
  }
  func.func @transform_1(%arg0: i32, %arg1: i32, %arg2: i32) -> (i32, i32) {
    %c0_i32 = arith.constant 0 : i32
    return %arg2, %arg0 : i32, i32
  }
  func.func @transform_2(%arg0: i32, %arg1: i32, %arg2: i32) -> (i32, i32) {
    %c0_i32 = arith.constant 0 : i32
    %c0_i32_0 = arith.constant 0 : i32
    return %c0_i32, %arg0 : i32, i32
  }
  func.func @transform_3(%arg0: i32, %arg1: i32, %arg2: i32) -> (i32, i32) {
    %c0_i32 = arith.constant 0 : i32
    return %arg1, %arg0 : i32, i32
  }
}

</mosaic_0001>

<llo_original>
// kernel: _lambda_.7
$region0: #{_lambda_.7}
  #allocation0 [shape = 'u32[]', space=smem, size = 0x4, offset = 0x4, fixed_abs, tag = 'smem constant byte address 0x4 - core index']
  #allocation1 [shape = 'u32[144,128]{1,0:T(1,128)}', space=vmem, size = 0x12000, scoped, tag = 'internal scratch']
  #allocation2 [shape = 'f32[8,128]{1,0:T(8,128)}', space=vmem, size = 0x1000, scoped, tag = 'scratch operand']
  %s0 = inlined_call_operand.vmem [shape: f32[8,128], index: 0, kind: input, shape index: {}]
  %s1 = inlined_call_operand.vmem [shape: bf16[128,128], index: 1, kind: input, shape index: {}]
  %s2 = inlined_call_operand.vmem [shape: f32[1,128], index: 2, kind: input, shape index: {}]
  %s3 = inlined_call_operand.vmem [shape: f32[8,128], index: 3, kind: output, shape index: {}]
  %s4 = sld [smem:[#allocation0]]
  $region30: #{_lambda_.7} parent=0
    _
  %s6 = ssub.s32 1, %s4
  %s7 = scalar_select 0, %s6, %s4
  // Predicated region
  $region2: #{_lambda_.7} parent=0 // pred_check
    _
  $region3: #{_lambda_.7} parent=0 // pred_check_branch
    %9 = sbr.rel (0) target = $region5
  $region4: #{_lambda_.7} parent=0 // pred_region
    _
  $region5: #{_lambda_.7} parent=0 // pred_fallthru
    _
  // Predicated region
  $region6: #{_lambda_.7} parent=0 // pred_check
    _
  $region7: #{_lambda_.7} parent=0 // pred_check_branch
    %11 = sbr.rel (0) target = $region9
  $region8: #{_lambda_.7} parent=0 // pred_region
    _
  $region9: #{_lambda_.7} parent=0 // pred_fallthru
    _
  // Predicated region
  $region10: #{_lambda_.7} parent=0 // pred_check
    _
  $region11: #{_lambda_.7} parent=0 // pred_check_branch
    %13 = sbr.rel (0) target = $region13
  $region12: #{_lambda_.7} parent=0 // pred_region
    _
  $region13: #{_lambda_.7} parent=0 // pred_fallthru
    _
  %p15 = scmp.eq.s32.totalorder 0, 0
  // Predicated region
  $region14: #{_lambda_.7} parent=0 // pred_check
    %p16 = pneg %p15
  $region15: #{_lambda_.7} parent=0 // pred_check_branch
    %18 = sbr.rel (%p16) target = $region17
  $region16: #{_lambda_.7} parent=0 // pred_region
    %19 = vst [vmem:[#allocation2] sm:$0xff] 0.0
  $region17: #{_lambda_.7} parent=0 // pred_fallthru
    _
  %v20 = vld [vmem:[#allocation2] sm:$0xff]
  %v21 = vld [vmem:[%s0] sm:$0xff]
  %v22 = vpack.c.bf16 %v21, %v21
  %v23 = vld [vmem:[%s1] sm:$0xf]
  %v24 = vld [vmem:[%s1 + $0x4] sm:$0xf]
  %v25 = vld [vmem:[%s1 + $0x8] sm:$0xf]
  %v26 = vld [vmem:[%s1 + $0xc] sm:$0xf]
  %v27 = vld [vmem:[%s1 + $0x10] sm:$0xf]
  %v28 = vld [vmem:[%s1 + $0x14] sm:$0xf]
  %v29 = vld [vmem:[%s1 + $0x18] sm:$0xf]
  %v30 = vld [vmem:[%s1 + $0x1c] sm:$0xf]
  %v31 = vld [vmem:[%s1 + $0x20] sm:$0xf]
  %v32 = vld [vmem:[%s1 + $0x24] sm:$0xf]
  %v33 = vld [vmem:[%s1 + $0x28] sm:$0xf]
  %v34 = vld [vmem:[%s1 + $0x2c] sm:$0xf]
  %v35 = vld [vmem:[%s1 + $0x30] sm:$0xf]
  %v36 = vld [vmem:[%s1 + $0x34] sm:$0xf]
  %v37 = vld [vmem:[%s1 + $0x38] sm:$0xf]
  %v38 = vld [vmem:[%s1 + $0x3c] sm:$0xf]
  %v55 = vunpack.c.l.b16 %v23
  %v56 = vunpack.c.l.b16 %v24
  %v57 = vunpack.c.l.b16 %v25
  %v58 = vunpack.c.l.b16 %v26
  %v59 = vunpack.c.l.b16 %v27
  %v60 = vunpack.c.l.b16 %v28
  %v61 = vunpack.c.l.b16 %v29
  %v62 = vunpack.c.l.b16 %v30
  %v63 = vunpack.c.l.b16 %v31
  %v64 = vunpack.c.l.b16 %v32
  %v65 = vunpack.c.l.b16 %v33
  %v66 = vunpack.c.l.b16 %v34
  %v67 = vunpack.c.l.b16 %v35
  %v68 = vunpack.c.l.b16 %v36
  %v69 = vunpack.c.l.b16 %v37
  %v70 = vunpack.c.l.b16 %v38
  %v71 = vpack.c.b16 %v56, %v55
  %v72 = vpack.c.b16 %v58, %v57
  %v73 = vpack.c.b16 %v60, %v59
  %v74 = vpack.c.b16 %v62, %v61
  %v75 = vpack.c.b16 %v64, %v63
  %v76 = vpack.c.b16 %v66, %v65
  %v77 = vpack.c.b16 %v68, %v67
  %v78 = vpack.c.b16 %v70, %v69
  %87 = vmatprep.subr.bf16.mxu0 0
  %88 = vmatpush1.bf16.msra.mxu0 %v78
  %89 = vmatprep.subr.bf16.mxu0 0
  %90 = vmatpush1.bf16.msra.mxu0 %v77
  %91 = vmatprep.subr.bf16.mxu0 0
  %92 = vmatpush1.bf16.msra.mxu0 %v76
  %93 = vmatprep.subr.bf16.mxu0 0
  %94 = vmatpush1.bf16.msra.mxu0 %v75
  %95 = vmatprep.subr.bf16.mxu0 0
  %96 = vmatpush1.bf16.msra.mxu0 %v74
  %97 = vmatprep.subr.bf16.mxu0 0
  %98 = vmatpush1.bf16.msra.mxu0 %v73
  %99 = vmatprep.subr.bf16.mxu0 0
  %100 = vmatpush1.bf16.msra.mxu0 %v72
  %101 = vmatprep.subr.bf16.mxu0 0
  %102 = vmatpush1.bf16.msra.mxu0 %v71
  %103 = vmatprep.subr.bf16.mxu0 0
  %104 = vmatpush2.bf16.msra.mxu0 0
  %105 = vmatprep.subr.bf16.mxu0 0
  %106 = vmatpush2.bf16.msra.mxu0 0
  %107 = vmatprep.subr.bf16.mxu0 0
  %108 = vmatpush2.bf16.msra.mxu0 0
  %109 = vmatprep.subr.bf16.mxu0 0
  %110 = vmatpush2.bf16.msra.mxu0 0
  %111 = vmatprep.subr.bf16.mxu0 0
  %112 = vmatpush2.bf16.msra.mxu0 0
  %113 = vmatprep.subr.bf16.mxu0 0
  %114 = vmatpush2.bf16.msra.mxu0 0
  %115 = vmatprep.subr.bf16.mxu0 0
  %116 = vmatpush2.bf16.msra.mxu0 0
  %117 = vmatprep.subr.bf16.mxu0 0
  %118 = vmatpush2.bf16.msra.mxu0 0
  %119 = vmatprep.mubr.bf16.mxu0 0
  %120 = vmatmul.mubr.bf16.gmra.mxu0 %v22
  %v121 = vpop.f32.mrf.mxu0
  %v122 = vadd.f32 0.0, %v121
  %v123 = vpop.f32.mrf.mxu0
  %v124 = vpop.f32.mrf.mxu0
  %v125 = vpop.f32.mrf.mxu0
  %126 = vdwg.mxu0
  %v127 = vadd.f32 %v20, %v122
  %128 = vst [vmem:[#allocation2] sm:$0xff] %v127
  // Predicated region
  $region18: #{_lambda_.7} parent=0 // pred_check
    %p129 = pneg %p15
  $region19: #{_lambda_.7} parent=0 // pred_check_branch
    %131 = sbr.rel (%p129) target = $region21
  $region20: #{_lambda_.7} parent=0 // pred_region
    %v132 = vld [vmem:[#allocation2] sm:$0xff]
    %v133 = vld [vmem:[%s2] sm:$0x1]
    %v135 = vlaneseq
    %v136 = vshrl.u32 %v135, 7
    %v137 = vsub.s32 0, %v136
    %v138 = vrot.slane %v133, %v137
    %v140 = vadd.f32 %v132, %v138
    %v141 = vtanh.pop %v140
    %142 = vst [vmem:[%s3] sm:$0xff] %v141
  $region21: #{_lambda_.7} parent=0 // pred_fallthru
    _
  // Predicated region
  $region22: #{_lambda_.7} parent=0 // pred_check
    _
  $region23: #{_lambda_.7} parent=0 // pred_check_branch
    %144 = sbr.rel (0) target = $region25
  $region24: #{_lambda_.7} parent=0 // pred_region
    _
  $region25: #{_lambda_.7} parent=0 // pred_fallthru
    _
  // Predicated region
  $region26: #{_lambda_.7} parent=0 // pred_check
    _
  $region27: #{_lambda_.7} parent=0 // pred_check_branch
    %146 = sbr.rel (0) target = $region29
  $region28: #{_lambda_.7} parent=0 // pred_region
    _
  $region29: #{_lambda_.7} parent=0 // pred_fallthru
    _

// kernel: _lambda_.6
$region0: #{_lambda_.6}
  #allocation0 [shape = 'u32[]', space=smem, size = 0x4, offset = 0x4, fixed_abs, tag = 'smem constant byte address 0x4 - core index']
  #allocation1 [shape = 'u32[144,128]{1,0:T(1,128)}', space=vmem, size = 0x12000, scoped, tag = 'internal scratch']
  #allocation2 [shape = 'f32[8,256]{1,0:T(8,128)}', space=vmem, size = 0x2000, scoped, tag = 'scratch operand']
  %s0 = inlined_call_operand.vmem [shape: f32[8,256], index: 0, kind: input, shape index: {}]
  %s1 = inlined_call_operand.vmem [shape: bf16[256,256], index: 1, kind: input, shape index: {}]
  %s2 = inlined_call_operand.vmem [shape: f32[1,256], index: 2, kind: input, shape index: {}]
  %s3 = inlined_call_operand.vmem [shape: f32[8,256], index: 3, kind: output, shape index: {}]
  %s4 = sld [smem:[#allocation0]]
  $region30: #{_lambda_.6} parent=0
    _
  %s6 = ssub.s32 1, %s4
  %s7 = scalar_select 0, %s6, %s4
  // Predicated region
  $region2: #{_lambda_.6} parent=0 // pred_check
    _
  $region3: #{_lambda_.6} parent=0 // pred_check_branch
    %9 = sbr.rel (0) target = $region5
  $region4: #{_lambda_.6} parent=0 // pred_region
    _
  $region5: #{_lambda_.6} parent=0 // pred_fallthru
    _
  // Predicated region
  $region6: #{_lambda_.6} parent=0 // pred_check
    _
  $region7: #{_lambda_.6} parent=0 // pred_check_branch
    %11 = sbr.rel (0) target = $region9
  $region8: #{_lambda_.6} parent=0 // pred_region
    _
  $region9: #{_lambda_.6} parent=0 // pred_fallthru
    _
  // Predicated region
  $region10: #{_lambda_.6} parent=0 // pred_check
    _
  $region11: #{_lambda_.6} parent=0 // pred_check_branch
    %13 = sbr.rel (0) target = $region13
  $region12: #{_lambda_.6} parent=0 // pred_region
    _
  $region13: #{_lambda_.6} parent=0 // pred_fallthru
    _
  %p14 = scmp.eq.s32.totalorder 0, 0
  // Predicated region
  $region14: #{_lambda_.6} parent=0 // pred_check
    %p15 = pneg %p14
  $region15: #{_lambda_.6} parent=0 // pred_check_branch
    %17 = sbr.rel (%p15) target = $region17
  $region16: #{_lambda_.6} parent=0 // pred_region
    %18 = vst [vmem:[#allocation2] sm:$0xff] 0.0
    %19 = vst [vmem:[#allocation2 + $0x8] sm:$0xff] 0.0
  $region17: #{_lambda_.6} parent=0 // pred_fallthru
    _
  %v20 = vld [vmem:[#allocation2] sm:$0xff]
  %v21 = vld [vmem:[#allocation2 + $0x8] sm:$0xff]
  %v22 = vld [vmem:[%s0] sm:$0xff]
  %v23 = vld [vmem:[%s0 + $0x8] sm:$0xff]
  %v24 = vpack.c.bf16 %v22, %v22
  %v25 = vpack.c.bf16 %v23, %v23
  %v26 = vld [vmem:[%s1] sm:$0xff]
  %v27 = vld [vmem:[%s1 + $0x8] sm:$0xff]
  %v28 = vld [vmem:[%s1 + $0x10] sm:$0xff]
  %v29 = vld [vmem:[%s1 + $0x18] sm:$0xff]
  %v30 = vld [vmem:[%s1 + $0x20] sm:$0xff]
  %v31 = vld [vmem:[%s1 + $0x28] sm:$0xff]
  %v32 = vld [vmem:[%s1 + $0x30] sm:$0xff]
  %v33 = vld [vmem:[%s1 + $0x38] sm:$0xff]
  %v34 = vld [vmem:[%s1 + $0x40] sm:$0xff]
  %v35 = vld [vmem:[%s1 + $0x48] sm:$0xff]
  %v36 = vld [vmem:[%s1 + $0x50] sm:$0xff]
  %v37 = vld [vmem:[%s1 + $0x58] sm:$0xff]
  %v38 = vld [vmem:[%s1 + $0x60] sm:$0xff]
  %v39 = vld [vmem:[%s1 + $0x68] sm:$0xff]
  %v40 = vld [vmem:[%s1 + $0x70] sm:$0xff]
  %v41 = vld [vmem:[%s1 + $0x78] sm:$0xff]
  %v42 = vld [vmem:[%s1 + $0x80] sm:$0xff]
  %v43 = vld [vmem:[%s1 + $0x88] sm:$0xff]
  %v44 = vld [vmem:[%s1 + $0x90] sm:$0xff]
  %v45 = vld [vmem:[%s1 + $0x98] sm:$0xff]
  %v46 = vld [vmem:[%s1 + $0xa0] sm:$0xff]
  %v47 = vld [vmem:[%s1 + $0xa8] sm:$0xff]
  %v48 = vld [vmem:[%s1 + $0xb0] sm:$0xff]
  %v49 = vld [vmem:[%s1 + $0xb8] sm:$0xff]
  %v50 = vld [vmem:[%s1 + $0xc0] sm:$0xff]
  %v51 = vld [vmem:[%s1 + $0xc8] sm:$0xff]
  %v52 = vld [vmem:[%s1 + $0xd0] sm:$0xff]
  %v53 = vld [vmem:[%s1 + $0xd8] sm:$0xff]
  %v54 = vld [vmem:[%s1 + $0xe0] sm:$0xff]
  %v55 = vld [vmem:[%s1 + $0xe8] sm:$0xff]
  %v56 = vld [vmem:[%s1 + $0xf0] sm:$0xff]
  %v57 = vld [vmem:[%s1 + $0xf8] sm:$0xff]
  %v90 = vunpack.c.l.b16 %v26
  %v91 = vunpack.c.h.b16 %v26
  %v92 = vunpack.c.l.b16 %v27
  %v93 = vunpack.c.h.b16 %v27
  %v94 = vunpack.c.l.b16 %v28
  %v95 = vunpack.c.h.b16 %v28
  %v96 = vunpack.c.l.b16 %v29
  %v97 = vunpack.c.h.b16 %v29
  %v98 = vunpack.c.l.b16 %v30
  %v99 = vunpack.c.h.b16 %v30
  %v100 = vunpack.c.l.b16 %v31
  %v101 = vunpack.c.h.b16 %v31
  %v102 = vunpack.c.l.b16 %v32
  %v103 = vunpack.c.h.b16 %v32
  %v104 = vunpack.c.l.b16 %v33
  %v105 = vunpack.c.h.b16 %v33
  %v106 = vunpack.c.l.b16 %v34
  %v107 = vunpack.c.h.b16 %v34
  %v108 = vunpack.c.l.b16 %v35
  %v109 = vunpack.c.h.b16 %v35
  %v110 = vunpack.c.l.b16 %v36
  %v111 = vunpack.c.h.b16 %v36
  %v112 = vunpack.c.l.b16 %v37
  %v113 = vunpack.c.h.b16 %v37
  %v114 = vunpack.c.l.b16 %v38
  %v115 = vunpack.c.h.b16 %v38
  %v116 = vunpack.c.l.b16 %v39
  %v117 = vunpack.c.h.b16 %v39
  %v118 = vunpack.c.l.b16 %v40
  %v119 = vunpack.c.h.b16 %v40
  %v120 = vunpack.c.l.b16 %v41
  %v121 = vunpack.c.h.b16 %v41
  %v122 = vunpack.c.l.b16 %v42
  %v123 = vunpack.c.h.b16 %v42
  %v124 = vunpack.c.l.b16 %v43
  %v125 = vunpack.c.h.b16 %v43
  %v126 = vunpack.c.l.b16 %v44
  %v127 = vunpack.c.h.b16 %v44
  %v128 = vunpack.c.l.b16 %v45
  %v129 = vunpack.c.h.b16 %v45
  %v130 = vunpack.c.l.b16 %v46
  %v131 = vunpack.c.h.b16 %v46
  %v132 = vunpack.c.l.b16 %v47
  %v133 = vunpack.c.h.b16 %v47
  %v134 = vunpack.c.l.b16 %v48
  %v135 = vunpack.c.h.b16 %v48
  %v136 = vunpack.c.l.b16 %v49
  %v137 = vunpack.c.h.b16 %v49
  %v138 = vunpack.c.l.b16 %v50
  %v139 = vunpack.c.h.b16 %v50
  %v140 = vunpack.c.l.b16 %v51
  %v141 = vunpack.c.h.b16 %v51
  %v142 = vunpack.c.l.b16 %v52
  %v143 = vunpack.c.h.b16 %v52
  %v144 = vunpack.c.l.b16 %v53
  %v145 = vunpack.c.h.b16 %v53
  %v146 = vunpack.c.l.b16 %v54
  %v147 = vunpack.c.h.b16 %v54
  %v148 = vunpack.c.l.b16 %v55
  %v149 = vunpack.c.h.b16 %v55
  %v150 = vunpack.c.l.b16 %v56
  %v151 = vunpack.c.h.b16 %v56
  %v152 = vunpack.c.l.b16 %v57
  %v153 = vunpack.c.h.b16 %v57
  %v154 = vpack.c.b16 %v92, %v90
  %v155 = vpack.c.b16 %v93, %v91
  %v156 = vpack.c.b16 %v96, %v94
  %v157 = vpack.c.b16 %v97, %v95
  %v158 = vpack.c.b16 %v100, %v98
  %v159 = vpack.c.b16 %v101, %v99
  %v160 = vpack.c.b16 %v104, %v102
  %v161 = vpack.c.b16 %v105, %v103
  %v162 = vpack.c.b16 %v108, %v106
  %v163 = vpack.c.b16 %v109, %v107
  %v164 = vpack.c.b16 %v112, %v110
  %v165 = vpack.c.b16 %v113, %v111
  %v166 = vpack.c.b16 %v116, %v114
  %v167 = vpack.c.b16 %v117, %v115
  %v168 = vpack.c.b16 %v120, %v118
  %v169 = vpack.c.b16 %v121, %v119
  %v170 = vpack.c.b16 %v124, %v122
  %v171 = vpack.c.b16 %v125, %v123
  %v172 = vpack.c.b16 %v128, %v126
  %v173 = vpack.c.b16 %v129, %v127
  %v174 = vpack.c.b16 %v132, %v130
  %v175 = vpack.c.b16 %v133, %v131
  %v176 = vpack.c.b16 %v136, %v134
  %v177 = vpack.c.b16 %v137, %v135
  %v178 = vpack.c.b16 %v140, %v138
  %v179 = vpack.c.b16 %v141, %v139
  %v180 = vpack.c.b16 %v144, %v142
  %v181 = vpack.c.b16 %v145, %v143
  %v182 = vpack.c.b16 %v148, %v146
  %v183 = vpack.c.b16 %v149, %v147
  %v184 = vpack.c.b16 %v152, %v150
  %v185 = vpack.c.b16 %v153, %v151
  %218 = vmatprep.subr.bf16.mxu0 %v169
  %219 = vmatpush1.bf16.msra.mxu0 %v168
  %220 = vmatprep.subr.bf16.mxu0 %v167
  %221 = vmatpush1.bf16.msra.mxu0 %v166
  %222 = vmatprep.subr.bf16.mxu0 %v165
  %223 = vmatpush1.bf16.msra.mxu0 %v164
  %224 = vmatprep.subr.bf16.mxu0 %v163
  %225 = vmatpush1.bf16.msra.mxu0 %v162
  %226 = vmatprep.subr.bf16.mxu0 %v161
  %227 = vmatpush1.bf16.msra.mxu0 %v160
  %228 = vmatprep.subr.bf16.mxu0 %v159
  %229 = vmatpush1.bf16.msra.mxu0 %v158
  %230 = vmatprep.subr.bf16.mxu0 %v157
  %231 = vmatpush1.bf16.msra.mxu0 %v156
  %232 = vmatprep.subr.bf16.mxu0 %v155
  %233 = vmatpush1.bf16.msra.mxu0 %v154
  %234 = vmatprep.subr.bf16.mxu0 %v185
  %235 = vmatpush2.bf16.msra.mxu0 %v184
  %236 = vmatprep.subr.bf16.mxu0 %v183
  %237 = vmatpush2.bf16.msra.mxu0 %v182
  %238 = vmatprep.subr.bf16.mxu0 %v181
  %239 = vmatpush2.bf16.msra.mxu0 %v180
  %240 = vmatprep.subr.bf16.mxu0 %v179
  %241 = vmatpush2.bf16.msra.mxu0 %v178
  %242 = vmatprep.subr.bf16.mxu0 %v177
  %243 = vmatpush2.bf16.msra.mxu0 %v176
  %244 = vmatprep.subr.bf16.mxu0 %v175
  %245 = vmatpush2.bf16.msra.mxu0 %v174
  %246 = vmatprep.subr.bf16.mxu0 %v173
  %247 = vmatpush2.bf16.msra.mxu0 %v172
  %248 = vmatprep.subr.bf16.mxu0 %v171
  %249 = vmatpush2.bf16.msra.mxu0 %v170
  %250 = vmatprep.mubr.bf16.mxu0 %v25
  %251 = vmatmul.mubr.bf16.gmra.mxu0 %v24
  %v252 = vpop.f32.mrf.mxu0
  %v253 = vadd.f32 0.0, %v252
  %v254 = vpop.f32.mrf.mxu0
  %v255 = vadd.f32 0.0, %v254
  %v256 = vpop.f32.mrf.mxu0
  %v257 = vpop.f32.mrf.mxu0
  %258 = vdwg.mxu0
  %v259 = vadd.f32 %v20, %v253
  %v260 = vadd.f32 %v21, %v255
  %261 = vst [vmem:[#allocation2] sm:$0xff] %v259
  %262 = vst [vmem:[#allocation2 + $0x8] sm:$0xff] %v260
  // Predicated region
  $region18: #{_lambda_.6} parent=0 // pred_check
    %p263 = pneg %p14
  $region19: #{_lambda_.6} parent=0 // pred_check_branch
    %265 = sbr.rel (%p263) target = $region21
  $region20: #{_lambda_.6} parent=0 // pred_region
    %v266 = vld [vmem:[#allocation2] sm:$0xff]
    %v267 = vld [vmem:[#allocation2 + $0x8] sm:$0xff]
    %v268 = vld [vmem:[%s2] sm:$0x3]
    %v270 = vlaneseq
    %v271 = vshrl.u32 %v270, 7
    %v272 = vsub.s32 0, %v271
    %v273 = vrot.slane %v268, %v272
    %v274 = vlaneseq
    %v275 = vshrl.u32 %v274, 7
    %v276 = vsub.s32 1, %v275
    %v277 = vrot.slane %v268, %v276
    %v280 = vadd.f32 %v266, %v273
    %v281 = vadd.f32 %v267, %v277
    %v282 = vlaneseq
    %v283 = vand.u32 %v282, 127
    %v284 = vadd.s32 %v283, 128
    %s285 = smul.u32 0, 256
    %v286 = vstv %s285
    %v287 = vadd.s32 %v283, %v286
    %v288 = vadd.s32 %v284, %v286
    %vm289 = vcmp.ge.s32.totalorder %v287, 128
    %vm290 = vcmp.ge.s32.totalorder %v288, 128
    %v291 = vmax.f32 %v280, 0.0
    %v292 = vmax.f32 %v281, 0.0
    %v293 = vand.u32 2147483647, %v280
    %v294 = vand.u32 2147483647, %v281
    %v295 = vsub.f32 0.0, %v293
    %v296 = vsub.f32 0.0, %v294
    %v297 = vmul.f32 %v295, 1.442695
    %v298 = vpow.pop %v297
    %v299 = vmul.f32 %v296, 1.442695
    %v300 = vpow.pop %v299
    %v301 = vadd.f32 %v298, 1.0
    %v302 = vlog2.pop %v301
    %v303 = vmul.f32 %v302, 0.6931472
    %v304 = vmul.f32 -0.5, %v298
    %v305 = vadd.f32 %v304, 1.0
    %v306 = vmul.f32 %v305, %v298
    %v307 = vand.u32 2147483647, %v298
    %vm308 = vcmp.lt.f32.partialorder %v307, 0.0004427343
    %v309 = vsel %vm308, %v306, %v303
    %v310 = vadd.f32 %v300, 1.0
    %v311 = vlog2.pop %v310
    %v312 = vmul.f32 %v311, 0.6931472
    %v313 = vmul.f32 -0.5, %v300
    %v314 = vadd.f32 %v313, 1.0
    %v315 = vmul.f32 %v314, %v300
    %v316 = vand.u32 2147483647, %v300
    %vm317 = vcmp.lt.f32.partialorder %v316, 0.0004427343
    %v318 = vsel %vm317, %v315, %v312
    %v319 = vadd.f32 %v291, %v309
    %v320 = vadd.f32 %v292, %v318
    %v321 = vsel %vm289, %v319, %v280
    %v322 = vsel %vm290, %v320, %v281
    %323 = vst [vmem:[%s3] sm:$0xff] %v321
    %324 = vst [vmem:[%s3 + $0x8] sm:$0xff] %v322
  $region21: #{_lambda_.6} parent=0 // pred_fallthru
    _
  // Predicated region
  $region22: #{_lambda_.6} parent=0 // pred_check
    _
  $region23: #{_lambda_.6} parent=0 // pred_check_branch
    %326 = sbr.rel (0) target = $region25
  $region24: #{_lambda_.6} parent=0 // pred_region
    _
  $region25: #{_lambda_.6} parent=0 // pred_fallthru
    _
  // Predicated region
  $region26: #{_lambda_.6} parent=0 // pred_check
    _
  $region27: #{_lambda_.6} parent=0 // pred_check_branch
    %328 = sbr.rel (0) target = $region29
  $region28: #{_lambda_.6} parent=0 // pred_region
    _
  $region29: #{_lambda_.6} parent=0 // pred_fallthru
    _

// kernel: _lambda_.8
$region0: #{_lambda_.8}
  #allocation0 [shape = 'u32[]', space=smem, size = 0x4, offset = 0x4, fixed_abs, tag = 'smem constant byte address 0x4 - core index']
  #allocation1 [shape = 'u32[144,128]{1,0:T(1,128)}', space=vmem, size = 0x12000, scoped, tag = 'internal scratch']
  #allocation2 [shape = 'f32[8,128]{1,0:T(8,128)}', space=vmem, size = 0x1000, scoped, tag = 'scratch operand']
  #allocation3 [shape = 'f32[32,384]{1,0:T(8,128)}', space=vmem, size = 0xc000, scoped, tag = 'scratch operand']
  %s0 = inlined_call_operand.vmem [shape: f32[64,128], index: 0, kind: input, shape index: {}]
  %s1 = inlined_call_operand.vmem [shape: f32[8,128], index: 1, kind: input, shape index: {}]
  %s2 = inlined_call_operand.vmem [shape: bf16[128,384], index: 2, kind: input, shape index: {}]
  %s3 = inlined_call_operand.vmem [shape: f32[1,384], index: 3, kind: input, shape index: {}]
  %s4 = inlined_call_operand.vmem [shape: bf16[128,384], index: 4, kind: input, shape index: {}]
  %s5 = inlined_call_operand.vmem [shape: f32[1,128], index: 5, kind: input, shape index: {}]
  %s6 = inlined_call_operand.vmem [shape: bf16[8,8,128], index: 6, kind: output, shape index: {}]
  %s7 = sld [smem:[#allocation0]]
  $region68: #{_lambda_.8} parent=0
    _
  %s9 = ssub.s32 1, %s7
  %s10 = scalar_select 0, %s9, %s7
  loop: start=0, step=1, limit=4
  $region2: #{_lambda_.8} parent=0 // loop_pre_header
    _
  $region3: #{_lambda_.8} parent=0 // loop_header
    %s12 = sphi 0, %s16
    %p13 = scmp.ge.s32.totalorder %s12, 4
    %s22 = sphi 0, %s24
    %s25 = sphi 0, %s22
    %s26 = sphi 0, %s25
    %s42 = sphi 0, %s26
    %s46 = sphi 0, %s46
    %s48 = sphi 0, %s46
    %s49 = sphi 0, %s48
    %s63 = sphi 0, %s49
    %s67 = sphi 0, %s67
    %s69 = sphi 0, %s67
    %s70 = sphi 0, %s69
    %s84 = sphi 0, %s70
    %s88 = sphi 0, %s88
    %s90 = sphi 0, %s88
    %s91 = sphi 0, %s90
    %s105 = sphi 0, %s91
    %s109 = sphi 0, %s109
    %s111 = sphi 0, %s109
    %s112 = sphi 0, %s111
    %s126 = sphi 0, %s112
    %s130 = sphi 0, %s130
    %s132 = sphi 0, %s130
    %s133 = sphi 0, %s132
    %s147 = sphi 0, %s133
    %s153 = sphi 0, %s155
    %s156 = sphi 0, %s153
    %s157 = sphi 0, %s156
    %s173 = sphi 0, %s157
  $region4: #{_lambda_.8} parent=0 // loop_header_branch
    %15 = sbr.rel (%p13) target = $region8
  $region5: #{_lambda_.8} parent=0 // loop_body
    %s17 = ssub.s32 %s12, 1
    %s18 = ssub.s32 %s12, 2
    %s19 = sadd.s32 %s12, 1
    %s20 = ssub.s32 %s12, %s19
    %p21 = scmp.eq.s32.totalorder %s20, 0
    %s23 = sadd.s32 %s22, 1
    %s24 = scalar_select %p21, %s22, %s23
    %p27 = pneg %p21
    %p28 = scmp.eq.s32.totalorder %s12, 1
    %p29 = por %p27, %p28
    %p30 = scmp.ne.s32.totalorder %s22, %s25
    %p31 = scmp.eq.s32.totalorder %s12, 0
    %p32 = por %p30, %p31
    %p33 = scmp.ne.s32.totalorder %s22, %s25
    %p34 = scmp.eq.s32.totalorder %s17, 1
    %p35 = por %p33, %p34
    %p36 = scmp.ne.s32.totalorder %s25, %s26
    %p37 = scmp.eq.s32.totalorder %s17, 0
    %p38 = por %p36, %p37
    %p39 = scmp.ne.s32.totalorder %s25, %s26
    %p40 = scmp.eq.s32.totalorder %s18, 1
    %p41 = por %p39, %p40
    %p43 = scmp.ne.s32.totalorder %s26, %s42
    %p44 = scmp.eq.s32.totalorder %s18, 0
    %p45 = por %p43, %p44
    %s47 = sadd.s32 %s46, 1
    %p50 = scmp.eq.s32.totalorder %s12, 1
    %p51 = scmp.ne.s32.totalorder %s46, %s48
    %p52 = scmp.eq.s32.totalorder %s12, 0
    %p53 = por %p51, %p52
    %p54 = scmp.ne.s32.totalorder %s46, %s48
    %p55 = scmp.eq.s32.totalorder %s17, 1
    %p56 = por %p54, %p55
    %p57 = scmp.ne.s32.totalorder %s48, %s49
    %p58 = scmp.eq.s32.totalorder %s17, 0
    %p59 = por %p57, %p58
    %p60 = scmp.ne.s32.totalorder %s48, %s49
    %p61 = scmp.eq.s32.totalorder %s18, 1
    %p62 = por %p60, %p61
    %p64 = scmp.ne.s32.totalorder %s49, %s63
    %p65 = scmp.eq.s32.totalorder %s18, 0
    %p66 = por %p64, %p65
    %s68 = sadd.s32 %s67, 1
    %p71 = scmp.eq.s32.totalorder %s12, 1
    %p72 = scmp.ne.s32.totalorder %s67, %s69
    %p73 = scmp.eq.s32.totalorder %s12, 0
    %p74 = por %p72, %p73
    %p75 = scmp.ne.s32.totalorder %s67, %s69
    %p76 = scmp.eq.s32.totalorder %s17, 1
    %p77 = por %p75, %p76
    %p78 = scmp.ne.s32.totalorder %s69, %s70
    %p79 = scmp.eq.s32.totalorder %s17, 0
    %p80 = por %p78, %p79
    %p81 = scmp.ne.s32.totalorder %s69, %s70
    %p82 = scmp.eq.s32.totalorder %s18, 1
    %p83 = por %p81, %p82
    %p85 = scmp.ne.s32.totalorder %s70, %s84
    %p86 = scmp.eq.s32.totalorder %s18, 0
    %p87 = por %p85, %p86
    %s89 = sadd.s32 %s88, 1
    %p92 = scmp.eq.s32.totalorder %s12, 1
    %p93 = scmp.ne.s32.totalorder %s88, %s90
    %p94 = scmp.eq.s32.totalorder %s12, 0
    %p95 = por %p93, %p94
    %p96 = scmp.ne.s32.totalorder %s88, %s90
    %p97 = scmp.eq.s32.totalorder %s17, 1
    %p98 = por %p96, %p97
    %p99 = scmp.ne.s32.totalorder %s90, %s91
    %p100 = scmp.eq.s32.totalorder %s17, 0
    %p101 = por %p99, %p100
    %p102 = scmp.ne.s32.totalorder %s90, %s91
    %p103 = scmp.eq.s32.totalorder %s18, 1
    %p104 = por %p102, %p103
    %p106 = scmp.ne.s32.totalorder %s91, %s105
    %p107 = scmp.eq.s32.totalorder %s18, 0
    %p108 = por %p106, %p107
    %s110 = sadd.s32 %s109, 1
    %p113 = scmp.eq.s32.totalorder %s12, 1
    %p114 = scmp.ne.s32.totalorder %s109, %s111
    %p115 = scmp.eq.s32.totalorder %s12, 0
    %p116 = por %p114, %p115
    %p117 = scmp.ne.s32.totalorder %s109, %s111
    %p118 = scmp.eq.s32.totalorder %s17, 1
    %p119 = por %p117, %p118
    %p120 = scmp.ne.s32.totalorder %s111, %s112
    %p121 = scmp.eq.s32.totalorder %s17, 0
    %p122 = por %p120, %p121
    %p123 = scmp.ne.s32.totalorder %s111, %s112
    %p124 = scmp.eq.s32.totalorder %s18, 1
    %p125 = por %p123, %p124
    %p127 = scmp.ne.s32.totalorder %s112, %s126
    %p128 = scmp.eq.s32.totalorder %s18, 0
    %p129 = por %p127, %p128
    %s131 = sadd.s32 %s130, 1
    %p134 = scmp.eq.s32.totalorder %s12, 1
    %p135 = scmp.ne.s32.totalorder %s130, %s132
    %p136 = scmp.eq.s32.totalorder %s12, 0
    %p137 = por %p135, %p136
    %p138 = scmp.ne.s32.totalorder %s130, %s132
    %p139 = scmp.eq.s32.totalorder %s17, 1
    %p140 = por %p138, %p139
    %p141 = scmp.ne.s32.totalorder %s132, %s133
    %p142 = scmp.eq.s32.totalorder %s17, 0
    %p143 = por %p141, %p142
    %p144 = scmp.ne.s32.totalorder %s132, %s133
    %p145 = scmp.eq.s32.totalorder %s18, 1
    %p146 = por %p144, %p145
    %p148 = scmp.ne.s32.totalorder %s133, %s147
    %p149 = scmp.eq.s32.totalorder %s18, 0
    %p150 = por %p148, %p149
    %s151 = ssub.s32 %s12, %s19
    %p152 = scmp.eq.s32.totalorder %s151, 0
    %s154 = sadd.s32 %s153, 1
    %s155 = scalar_select %p152, %s153, %s154
    %p158 = pneg %p152
    %p159 = scmp.eq.s32.totalorder %s12, 1
    %p160 = por %p158, %p159
    %p161 = scmp.ne.s32.totalorder %s153, %s156
    %p162 = scmp.eq.s32.totalorder %s12, 0
    %p163 = por %p161, %p162
    %p164 = scmp.ne.s32.totalorder %s153, %s156
    %p165 = scmp.eq.s32.totalorder %s17, 1
    %p166 = por %p164, %p165
    %p167 = scmp.ne.s32.totalorder %s156, %s157
    %p168 = scmp.eq.s32.totalorder %s17, 0
    %p169 = por %p167, %p168
    %p170 = scmp.ne.s32.totalorder %s156, %s157
    %p171 = scmp.eq.s32.totalorder %s18, 1
    %p172 = por %p170, %p171
    %p174 = scmp.ne.s32.totalorder %s157, %s173
    %p175 = scmp.eq.s32.totalorder %s18, 0
    %p176 = por %p174, %p175
    %p177 = scmp.le.s32.totalorder 1, %s12
    %p178 = scmp.lt.s32.totalorder %s12, 3
    %p179 = pnand %p177, %p178
    %p180 = pneg %p179
    // Predicated region
    $region9: #{_lambda_.8} parent=5 // pred_check
      _
    $region10: #{_lambda_.8} parent=5 // pred_check_branch
      %182 = sbr.rel (%p179) target = $region12
    $region11: #{_lambda_.8} parent=5 // pred_region
      %s183 = ssub.s32 %s12, 1
      // Predicated region
      $region13: #{_lambda_.8} parent=11 // pred_check
        %p184 = pneg %p59
      $region14: #{_lambda_.8} parent=11 // pred_check_branch
        %186 = sbr.rel (%p184) target = $region16
      $region15: #{_lambda_.8} parent=11 // pred_region
        _
      $region16: #{_lambda_.8} parent=11 // pred_fallthru
        _
      // Predicated region
      $region17: #{_lambda_.8} parent=11 // pred_check
        %p187 = pneg %p80
      $region18: #{_lambda_.8} parent=11 // pred_check_branch
        %189 = sbr.rel (%p187) target = $region20
      $region19: #{_lambda_.8} parent=11 // pred_region
        _
      $region20: #{_lambda_.8} parent=11 // pred_fallthru
        _
      // Predicated region
      $region21: #{_lambda_.8} parent=11 // pred_check
        %p190 = pneg %p101
      $region22: #{_lambda_.8} parent=11 // pred_check_branch
        %192 = sbr.rel (%p190) target = $region24
      $region23: #{_lambda_.8} parent=11 // pred_region
        _
      $region24: #{_lambda_.8} parent=11 // pred_fallthru
        _
      // Predicated region
      $region25: #{_lambda_.8} parent=11 // pred_check
        %p193 = pneg %p122
      $region26: #{_lambda_.8} parent=11 // pred_check_branch
        %195 = sbr.rel (%p193) target = $region28
      $region27: #{_lambda_.8} parent=11 // pred_region
        _
      $region28: #{_lambda_.8} parent=11 // pred_fallthru
        _
      // Predicated region
      $region29: #{_lambda_.8} parent=11 // pred_check
        %p196 = pneg %p143
      $region30: #{_lambda_.8} parent=11 // pred_check_branch
        %198 = sbr.rel (%p196) target = $region32
      $region31: #{_lambda_.8} parent=11 // pred_region
        _
      $region32: #{_lambda_.8} parent=11 // pred_fallthru
        _
    $region12: #{_lambda_.8} parent=5 // pred_fallthru
      _
    %p199 = scmp.lt.s32.totalorder %s12, 2
    // Predicated region
    $region33: #{_lambda_.8} parent=5 // pred_check
      %p200 = pneg %p199
    $region34: #{_lambda_.8} parent=5 // pred_check_branch
      %202 = sbr.rel (%p200) target = $region36
    $region35: #{_lambda_.8} parent=5 // pred_region
      // Predicated region
      $region37: #{_lambda_.8} parent=35 // pred_check
        %p203 = pneg %p32
      $region38: #{_lambda_.8} parent=35 // pred_check_branch
        %205 = sbr.rel (%p203) target = $region40
      $region39: #{_lambda_.8} parent=35 // pred_region
        %s206 = smul.u32 4, %s12
        %p207 = scmp.lt.s32.totalorder %s206, 7
        %s208 = scalar_select %p207, %s206, 7
        %s209 = smul.addr %s208, 8
        %s210 = scalar_lea.vmem %s0, %s209
        %s211 = smul.u32 4, %s12
      $region40: #{_lambda_.8} parent=35 // pred_fallthru
        _
    $region36: #{_lambda_.8} parent=5 // pred_fallthru
      _
    %p212 = scmp.le.s32.totalorder 1, %s12
    %p213 = scmp.lt.s32.totalorder %s12, 3
    %p214 = pnand %p212, %p213
    %p215 = pneg %p214
    // Predicated region
    $region41: #{_lambda_.8} parent=5 // pred_check
      _
    $region42: #{_lambda_.8} parent=5 // pred_check_branch
      %217 = sbr.rel (%p214) target = $region44
    $region43: #{_lambda_.8} parent=5 // pred_region
      %s218 = ssub.s32 %s12, 1
      %s219 = smul.u32 4, %s17
      %p220 = scmp.lt.s32.totalorder %s219, 7
      %s221 = scalar_select %p220, %s219, 7
      %s222 = smul.addr %s221, 8
      %s223 = scalar_lea.vmem %s0, %s222
      %p224 = pneg %p38
      %p225 = pneg %p35
      %p226 = pneg %p59
      %p227 = pneg %p56
      %p228 = pneg %p80
      %p229 = pneg %p77
      %p230 = pneg %p101
      %p231 = pneg %p98
      %p232 = pneg %p122
      %p233 = pneg %p119
      %p234 = pneg %p143
      %p235 = pneg %p140
      %p236 = pneg %p169
      %p237 = pneg %p166
      %s238 = smul.u32 4, %s17
      %p239 = scmp.lt.s32.totalorder %s238, 7
      %s240 = scalar_select %p239, %s238, 7
      %s241 = smul.addr %s240, 4
      %s242 = scalar_lea.vmem %s6, %s241
      %s243 = smul.u32 4, %s17
      %p244 = scmp.lt.s32.totalorder %s243, 7
      %s245 = scalar_select %p244, %s243, 7
      %s246 = smul.addr %s245, 8
      %s247 = scalar_lea.vmem %s0, %s246
      %s248 = smul.u32 4, %s17
      %s249 = smul.u32 4, %s17
      %p250 = scmp.lt.s32.totalorder %s249, 7
      %s251 = scalar_select %p250, %s249, 7
      %s252 = smul.addr %s251, 4
      %s253 = scalar_lea.vmem %s6, %s252
      %s254 = smul.u32 4, %s17
      %p256 = scmp.eq.s32.totalorder %s17, 0
      // Predicated region
      $region45: #{_lambda_.8} parent=43 // pred_check
        %p257 = pneg %p256
      $region46: #{_lambda_.8} parent=43 // pred_check_branch
        %259 = sbr.rel (%p257) target = $region48
      $region47: #{_lambda_.8} parent=43 // pred_region
        %v260 = vld [vmem:[%s1] sm:$0xff]
        %261 = vst [vmem:[#allocation2] sm:$0xff] %v260
      $region48: #{_lambda_.8} parent=43 // pred_fallthru
        _
      %v262 = vld [vmem:[%s247] sm:$0xff]
      %v263 = vld [vmem:[%s247 + $0x8] sm:$0xff]
      %v264 = vld [vmem:[%s247 + $0x10] sm:$0xff]
      %v265 = vld [vmem:[%s247 + $0x18] sm:$0xff]
      %v266 = vpack.c.bf16 %v263, %v262
      %v267 = vpack.c.bf16 %v265, %v264
      %v268 = vld [vmem:[%s2] sm:$0xff]
      %v269 = vld [vmem:[%s2 + $0x8] sm:$0xf]
      %v270 = vld [vmem:[%s2 + $0xc] sm:$0xff]
      %v271 = vld [vmem:[%s2 + $0x14] sm:$0xf]
      %v272 = vld [vmem:[%s2 + $0x18] sm:$0xff]
      %v273 = vld [vmem:[%s2 + $0x20] sm:$0xf]
      %v274 = vld [vmem:[%s2 + $0x24] sm:$0xff]
      %v275 = vld [vmem:[%s2 + $0x2c] sm:$0xf]
      %v276 = vld [vmem:[%s2 + $0x30] sm:$0xff]
      %v277 = vld [vmem:[%s2 + $0x38] sm:$0xf]
      %v278 = vld [vmem:[%s2 + $0x3c] sm:$0xff]
      %v279 = vld [vmem:[%s2 + $0x44] sm:$0xf]
      %v280 = vld [vmem:[%s2 + $0x48] sm:$0xff]
      %v281 = vld [vmem:[%s2 + $0x50] sm:$0xf]
      %v282 = vld [vmem:[%s2 + $0x54] sm:$0xff]
      %v283 = vld [vmem:[%s2 + $0x5c] sm:$0xf]
      %v284 = vld [vmem:[%s2 + $0x60] sm:$0xff]
      %v285 = vld [vmem:[%s2 + $0x68] sm:$0xf]
      %v286 = vld [vmem:[%s2 + $0x6c] sm:$0xff]
      %v287 = vld [vmem:[%s2 + $0x74] sm:$0xf]
      %v288 = vld [vmem:[%s2 + $0x78] sm:$0xff]
      %v289 = vld [vmem:[%s2 + $0x80] sm:$0xf]
      %v290 = vld [vmem:[%s2 + $0x84] sm:$0xff]
      %v291 = vld [vmem:[%s2 + $0x8c] sm:$0xf]
      %v292 = vld [vmem:[%s2 + $0x90] sm:$0xff]
      %v293 = vld [vmem:[%s2 + $0x98] sm:$0xf]
      %v294 = vld [vmem:[%s2 + $0x9c] sm:$0xff]
      %v295 = vld [vmem:[%s2 + $0xa4] sm:$0xf]
      %v296 = vld [vmem:[%s2 + $0xa8] sm:$0xff]
      %v297 = vld [vmem:[%s2 + $0xb0] sm:$0xf]
      %v298 = vld [vmem:[%s2 + $0xb4] sm:$0xff]
      %v299 = vld [vmem:[%s2 + $0xbc] sm:$0xf]
      %v300 = vld [vmem:[%s3] sm:$0x7]
      %v302 = vlaneseq
      %v303 = vshrl.u32 %v302, 7
      %v304 = vsub.s32 0, %v303
      %v305 = vrot.slane %v300, %v304
      %v306 = vlaneseq
      %v307 = vshrl.u32 %v306, 7
      %v308 = vsub.s32 1, %v307
      %v309 = vrot.slane %v300, %v308
      %v310 = vlaneseq
      %v311 = vshrl.u32 %v310, 7
      %v312 = vsub.s32 2, %v311
      %v313 = vrot.slane %v300, %v312
      %v349 = vunpack.c.l.b16 %v268
      %v350 = vunpack.c.h.b16 %v268
      %v351 = vunpack.c.l.b16 %v269
      %v352 = vunpack.c.l.b16 %v270
      %v353 = vunpack.c.h.b16 %v270
      %v354 = vunpack.c.l.b16 %v271
      %v355 = vunpack.c.l.b16 %v272
      %v356 = vunpack.c.h.b16 %v272
      %v357 = vunpack.c.l.b16 %v273
      %v358 = vunpack.c.l.b16 %v274
      %v359 = vunpack.c.h.b16 %v274
      %v360 = vunpack.c.l.b16 %v275
      %v361 = vunpack.c.l.b16 %v276
      %v362 = vunpack.c.h.b16 %v276
      %v363 = vunpack.c.l.b16 %v277
      %v364 = vunpack.c.l.b16 %v278
      %v365 = vunpack.c.h.b16 %v278
      %v366 = vunpack.c.l.b16 %v279
      %v367 = vunpack.c.l.b16 %v280
      %v368 = vunpack.c.h.b16 %v280
      %v369 = vunpack.c.l.b16 %v281
      %v370 = vunpack.c.l.b16 %v282
      %v371 = vunpack.c.h.b16 %v282
      %v372 = vunpack.c.l.b16 %v283
      %v373 = vunpack.c.l.b16 %v284
      %v374 = vunpack.c.h.b16 %v284
      %v375 = vunpack.c.l.b16 %v285
      %v376 = vunpack.c.l.b16 %v286
      %v377 = vunpack.c.h.b16 %v286
      %v378 = vunpack.c.l.b16 %v287
      %v379 = vunpack.c.l.b16 %v288
      %v380 = vunpack.c.h.b16 %v288
      %v381 = vunpack.c.l.b16 %v289
      %v382 = vunpack.c.l.b16 %v290
      %v383 = vunpack.c.h.b16 %v290
      %v384 = vunpack.c.l.b16 %v291
      %v385 = vunpack.c.l.b16 %v292
      %v386 = vunpack.c.h.b16 %v292
      %v387 = vunpack.c.l.b16 %v293
      %v388 = vunpack.c.l.b16 %v294
      %v389 = vunpack.c.h.b16 %v294
      %v390 = vunpack.c.l.b16 %v295
      %v391 = vunpack.c.l.b16 %v296
      %v392 = vunpack.c.h.b16 %v296
      %v393 = vunpack.c.l.b16 %v297
      %v394 = vunpack.c.l.b16 %v298
      %v395 = vunpack.c.h.b16 %v298
      %v396 = vunpack.c.l.b16 %v299
      %v397 = vpack.c.b16 %v352, %v349
      %v398 = vpack.c.b16 %v353, %v350
      %v399 = vpack.c.b16 %v354, %v351
      %v400 = vpack.c.b16 %v358, %v355
      %v401 = vpack.c.b16 %v359, %v356
      %v402 = vpack.c.b16 %v360, %v357
      %v403 = vpack.c.b16 %v364, %v361
      %v404 = vpack.c.b16 %v365, %v362
      %v405 = vpack.c.b16 %v366, %v363
      %v406 = vpack.c.b16 %v370, %v367
      %v407 = vpack.c.b16 %v371, %v368
      %v408 = vpack.c.b16 %v372, %v369
      %v409 = vpack.c.b16 %v376, %v373
      %v410 = vpack.c.b16 %v377, %v374
      %v411 = vpack.c.b16 %v378, %v375
      %v412 = vpack.c.b16 %v382, %v379
      %v413 = vpack.c.b16 %v383, %v380
      %v414 = vpack.c.b16 %v384, %v381
      %v415 = vpack.c.b16 %v388, %v385
      %v416 = vpack.c.b16 %v389, %v386
      %v417 = vpack.c.b16 %v390, %v387
      %v418 = vpack.c.b16 %v394, %v391
      %v419 = vpack.c.b16 %v395, %v392
      %v420 = vpack.c.b16 %v396, %v393
      %445 = vmatprep.subr.bf16.mxu0 %v419
      %446 = vmatpush1.bf16.msra.mxu0 %v418
      %447 = vmatprep.subr.bf16.mxu0 %v416
      %448 = vmatpush1.bf16.msra.mxu0 %v415
      %449 = vmatprep.subr.bf16.mxu0 %v413
      %450 = vmatpush1.bf16.msra.mxu0 %v412
      %451 = vmatprep.subr.bf16.mxu0 %v410
      %452 = vmatpush1.bf16.msra.mxu0 %v409
      %453 = vmatprep.subr.bf16.mxu0 %v407
      %454 = vmatpush1.bf16.msra.mxu0 %v406
      %455 = vmatprep.subr.bf16.mxu0 %v404
      %456 = vmatpush1.bf16.msra.mxu0 %v403
      %457 = vmatprep.subr.bf16.mxu0 %v401
      %458 = vmatpush1.bf16.msra.mxu0 %v400
      %459 = vmatprep.subr.bf16.mxu0 %v398
      %460 = vmatpush1.bf16.msra.mxu0 %v397
      %461 = vmatprep.subr.bf16.mxu0 0
      %462 = vmatpush2.bf16.msra.mxu0 0
      %463 = vmatprep.subr.bf16.mxu0 0
      %464 = vmatpush2.bf16.msra.mxu0 0
      %465 = vmatprep.subr.bf16.mxu0 0
      %466 = vmatpush2.bf16.msra.mxu0 0
      %467 = vmatprep.subr.bf16.mxu0 0
      %468 = vmatpush2.bf16.msra.mxu0 0
      %469 = vmatprep.subr.bf16.mxu0 0
      %470 = vmatpush2.bf16.msra.mxu0 0
      %471 = vmatprep.subr.bf16.mxu0 0
      %472 = vmatpush2.bf16.msra.mxu0 0
      %473 = vmatprep.subr.bf16.mxu0 0
      %474 = vmatpush2.bf16.msra.mxu0 0
      %475 = vmatprep.subr.bf16.mxu0 0
      %476 = vmatpush2.bf16.msra.mxu0 0
      %477 = vmatprep.mubr.bf16.mxu0 0
      %478 = vmatmul.mubr.bf16.gmra.mxu0 %v266
      %v479 = vpop.f32.mrf.mxu0
      %v480 = vadd.f32 %v305, %v479
      %v481 = vpop.f32.mrf.mxu0
      %v482 = vadd.f32 %v309, %v481
      %v483 = vpop.f32.mrf.mxu0
      %v484 = vadd.f32 %v305, %v483
      %v485 = vpop.f32.mrf.mxu0
      %v486 = vadd.f32 %v309, %v485
      %487 = vmatprep.mubr.bf16.mxu0 0
      %488 = vmatmul.mubr.bf16.gmra.mxu0 %v267
      %v489 = vpop.f32.mrf.mxu0
      %v490 = vadd.f32 %v305, %v489
      %v491 = vpop.f32.mrf.mxu0
      %v492 = vadd.f32 %v309, %v491
      %v493 = vpop.f32.mrf.mxu0
      %v494 = vadd.f32 %v305, %v493
      %v495 = vpop.f32.mrf.mxu0
      %v496 = vadd.f32 %v309, %v495
      %497 = vdwg.mxu0
      %498 = vmatprep.subr.bf16.mxu0 0
      %499 = vmatpush1.bf16.msra.mxu0 %v420
      %500 = vmatprep.subr.bf16.mxu0 0
      %501 = vmatpush1.bf16.msra.mxu0 %v417
      %502 = vmatprep.subr.bf16.mxu0 0
      %503 = vmatpush1.bf16.msra.mxu0 %v414
      %504 = vmatprep.subr.bf16.mxu0 0
      %505 = vmatpush1.bf16.msra.mxu0 %v411
      %506 = vmatprep.subr.bf16.mxu0 0
      %507 = vmatpush1.bf16.msra.mxu0 %v408
      %508 = vmatprep.subr.bf16.mxu0 0
      %509 = vmatpush1.bf16.msra.mxu0 %v405
      %510 = vmatprep.subr.bf16.mxu0 0
      %511 = vmatpush1.bf16.msra.mxu0 %v402
      %512 = vmatprep.subr.bf16.mxu0 0
      %513 = vmatpush1.bf16.msra.mxu0 %v399
      %514 = vmatprep.subr.bf16.mxu0 0
      %515 = vmatpush2.bf16.msra.mxu0 0
      %516 = vmatprep.subr.bf16.mxu0 0
      %517 = vmatpush2.bf16.msra.mxu0 0
      %518 = vmatprep.subr.bf16.mxu0 0
      %519 = vmatpush2.bf16.msra.mxu0 0
      %520 = vmatprep.subr.bf16.mxu0 0
      %521 = vmatpush2.bf16.msra.mxu0 0
      %522 = vmatprep.subr.bf16.mxu0 0
      %523 = vmatpush2.bf16.msra.mxu0 0
      %524 = vmatprep.subr.bf16.mxu0 0
      %525 = vmatpush2.bf16.msra.mxu0 0
      %526 = vmatprep.subr.bf16.mxu0 0
      %527 = vmatpush2.bf16.msra.mxu0 0
      %528 = vmatprep.subr.bf16.mxu0 0
      %529 = vmatpush2.bf16.msra.mxu0 0
      %530 = vmatprep.mubr.bf16.mxu0 0
      %531 = vmatmul.mubr.bf16.gmra.mxu0 %v266
      %v532 = vpop.f32.mrf.mxu0
      %v533 = vadd.f32 %v313, %v532
      %v534 = vpop.f32.mrf.mxu0
      %v535 = vpop.f32.mrf.mxu0
      %v536 = vadd.f32 %v313, %v535
      %v537 = vpop.f32.mrf.mxu0
      %538 = vmatprep.mubr.bf16.mxu0 0
      %539 = vmatmul.mubr.bf16.gmra.mxu0 %v267
      %v540 = vpop.f32.mrf.mxu0
      %v541 = vadd.f32 %v313, %v540
      %v542 = vpop.f32.mrf.mxu0
      %v543 = vpop.f32.mrf.mxu0
      %v544 = vadd.f32 %v313, %v543
      %v545 = vpop.f32.mrf.mxu0
      %546 = vdwg.mxu0
      %547 = vst [vmem:[#allocation3] sm:$0xff] %v480
      %548 = vst [vmem:[#allocation3 + $0x8] sm:$0xff] %v482
      %549 = vst [vmem:[#allocation3 + $0x10] sm:$0xff] %v533
      %550 = vst [vmem:[#allocation3 + $0x18] sm:$0xff] %v484
      %551 = vst [vmem:[#allocation3 + $0x20] sm:$0xff] %v486
      %552 = vst [vmem:[#allocation3 + $0x28] sm:$0xff] %v536
      %553 = vst [vmem:[#allocation3 + $0x30] sm:$0xff] %v490
      %554 = vst [vmem:[#allocation3 + $0x38] sm:$0xff] %v492
      %555 = vst [vmem:[#allocation3 + $0x40] sm:$0xff] %v541
      %556 = vst [vmem:[#allocation3 + $0x48] sm:$0xff] %v494
      %557 = vst [vmem:[#allocation3 + $0x50] sm:$0xff] %v496
      %558 = vst [vmem:[#allocation3 + $0x58] sm:$0xff] %v544
      %v559 = vld [vmem:[%s4] sm:$0xff]
      %v560 = vld [vmem:[%s4 + $0x8] sm:$0xf]
      %v561 = vld [vmem:[%s4 + $0xc] sm:$0xff]
      %v562 = vld [vmem:[%s4 + $0x14] sm:$0xf]
      %v563 = vld [vmem:[%s4 + $0x18] sm:$0xff]
      %v564 = vld [vmem:[%s4 + $0x20] sm:$0xf]
      %v565 = vld [vmem:[%s4 + $0x24] sm:$0xff]
      %v566 = vld [vmem:[%s4 + $0x2c] sm:$0xf]
      %v567 = vld [vmem:[%s4 + $0x30] sm:$0xff]
      %v568 = vld [vmem:[%s4 + $0x38] sm:$0xf]
      %v569 = vld [vmem:[%s4 + $0x3c] sm:$0xff]
      %v570 = vld [vmem:[%s4 + $0x44] sm:$0xf]
      %v571 = vld [vmem:[%s4 + $0x48] sm:$0xff]
      %v572 = vld [vmem:[%s4 + $0x50] sm:$0xf]
      %v573 = vld [vmem:[%s4 + $0x54] sm:$0xff]
      %v574 = vld [vmem:[%s4 + $0x5c] sm:$0xf]
      %v575 = vld [vmem:[%s4 + $0x60] sm:$0xff]
      %v576 = vld [vmem:[%s4 + $0x68] sm:$0xf]
      %v577 = vld [vmem:[%s4 + $0x6c] sm:$0xff]
      %v578 = vld [vmem:[%s4 + $0x74] sm:$0xf]
      %v579 = vld [vmem:[%s4 + $0x78] sm:$0xff]
      %v580 = vld [vmem:[%s4 + $0x80] sm:$0xf]
      %v581 = vld [vmem:[%s4 + $0x84] sm:$0xff]
      %v582 = vld [vmem:[%s4 + $0x8c] sm:$0xf]
      %v583 = vld [vmem:[%s4 + $0x90] sm:$0xff]
      %v584 = vld [vmem:[%s4 + $0x98] sm:$0xf]
      %v585 = vld [vmem:[%s4 + $0x9c] sm:$0xff]
      %v586 = vld [vmem:[%s4 + $0xa4] sm:$0xf]
      %v587 = vld [vmem:[%s4 + $0xa8] sm:$0xff]
      %v588 = vld [vmem:[%s4 + $0xb0] sm:$0xf]
      %v589 = vld [vmem:[%s4 + $0xb4] sm:$0xff]
      %v590 = vld [vmem:[%s4 + $0xbc] sm:$0xf]
      %v591 = vld [vmem:[%s5] sm:$0x1]
      %v592 = vld [vmem:[#allocation2] sm:$0xff]
      loop: start=0, step=1, limit=4
      $region49: #{_lambda_.8} parent=43 // loop_pre_header
        _
      $region50: #{_lambda_.8} parent=43 // loop_header
        %s594 = sphi 0, %s598
        %p595 = scmp.ge.s32.totalorder %s594, 4
        %v599 = vphi %v592, %v846
      $region51: #{_lambda_.8} parent=43 // loop_header_branch
        %597 = sbr.rel (%p595) target = $region55
      $region52: #{_lambda_.8} parent=43 // loop_body
        %s600 = smul.u32 %s594, 8
        %s601 = sshra.s32 %s600, 3
        %s602 = sand.u32 %s600, 7
        %s603 = smul.u32 %s601, 3
        %s604 = smul.addr %s603, 8
        %s605 = scalar_lea.vmem [#allocation3], %s604
        %v606 = vld [vmem:[%s605] sm:$0xff]
        %v607 = vld [vmem:[%s605 + $0x8] sm:$0xff]
        %v608 = vld [vmem:[%s605 + $0x10] sm:$0xff]
        %v609 = vpack.c.bf16 %v599, %v599
        %v642 = vunpack.c.l.b16 %v559
        %v643 = vunpack.c.h.b16 %v559
        %v644 = vunpack.c.l.b16 %v560
        %v645 = vunpack.c.l.b16 %v561
        %v646 = vunpack.c.h.b16 %v561
        %v647 = vunpack.c.l.b16 %v562
        %v648 = vunpack.c.l.b16 %v563
        %v649 = vunpack.c.h.b16 %v563
        %v650 = vunpack.c.l.b16 %v564
        %v651 = vunpack.c.l.b16 %v565
        %v652 = vunpack.c.h.b16 %v565
        %v653 = vunpack.c.l.b16 %v566
        %v654 = vunpack.c.l.b16 %v567
        %v655 = vunpack.c.h.b16 %v567
        %v656 = vunpack.c.l.b16 %v568
        %v657 = vunpack.c.l.b16 %v569
        %v658 = vunpack.c.h.b16 %v569
        %v659 = vunpack.c.l.b16 %v570
        %v660 = vunpack.c.l.b16 %v571
        %v661 = vunpack.c.h.b16 %v571
        %v662 = vunpack.c.l.b16 %v572
        %v663 = vunpack.c.l.b16 %v573
        %v664 = vunpack.c.h.b16 %v573
        %v665 = vunpack.c.l.b16 %v574
        %v666 = vunpack.c.l.b16 %v575
        %v667 = vunpack.c.h.b16 %v575
        %v668 = vunpack.c.l.b16 %v576
        %v669 = vunpack.c.l.b16 %v577
        %v670 = vunpack.c.h.b16 %v577
        %v671 = vunpack.c.l.b16 %v578
        %v672 = vunpack.c.l.b16 %v579
        %v673 = vunpack.c.h.b16 %v579
        %v674 = vunpack.c.l.b16 %v580
        %v675 = vunpack.c.l.b16 %v581
        %v676 = vunpack.c.h.b16 %v581
        %v677 = vunpack.c.l.b16 %v582
        %v678 = vunpack.c.l.b16 %v583
        %v679 = vunpack.c.h.b16 %v583
        %v680 = vunpack.c.l.b16 %v584
        %v681 = vunpack.c.l.b16 %v585
        %v682 = vunpack.c.h.b16 %v585
        %v683 = vunpack.c.l.b16 %v586
        %v684 = vunpack.c.l.b16 %v587
        %v685 = vunpack.c.h.b16 %v587
        %v686 = vunpack.c.l.b16 %v588
        %v687 = vunpack.c.l.b16 %v589
        %v688 = vunpack.c.h.b16 %v589
        %v689 = vunpack.c.l.b16 %v590
        %v690 = vpack.c.b16 %v645, %v642
        %v691 = vpack.c.b16 %v646, %v643
        %v692 = vpack.c.b16 %v647, %v644
        %v693 = vpack.c.b16 %v651, %v648
        %v694 = vpack.c.b16 %v652, %v649
        %v695 = vpack.c.b16 %v653, %v650
        %v696 = vpack.c.b16 %v657, %v654
        %v697 = vpack.c.b16 %v658, %v655
        %v698 = vpack.c.b16 %v659, %v656
        %v699 = vpack.c.b16 %v663, %v660
        %v700 = vpack.c.b16 %v664, %v661
        %v701 = vpack.c.b16 %v665, %v662
        %v702 = vpack.c.b16 %v669, %v666
        %v703 = vpack.c.b16 %v670, %v667
        %v704 = vpack.c.b16 %v671, %v668
        %v705 = vpack.c.b16 %v675, %v672
        %v706 = vpack.c.b16 %v676, %v673
        %v707 = vpack.c.b16 %v677, %v674
        %v708 = vpack.c.b16 %v681, %v678
        %v709 = vpack.c.b16 %v682, %v679
        %v710 = vpack.c.b16 %v683, %v680
        %v711 = vpack.c.b16 %v687, %v684
        %v712 = vpack.c.b16 %v688, %v685
        %v713 = vpack.c.b16 %v689, %v686
        %738 = vmatprep.subr.bf16.mxu0 %v712
        %739 = vmatpush1.bf16.msra.mxu0 %v711
        %740 = vmatprep.subr.bf16.mxu0 %v709
        %741 = vmatpush1.bf16.msra.mxu0 %v708
        %742 = vmatprep.subr.bf16.mxu0 %v706
        %743 = vmatpush1.bf16.msra.mxu0 %v705
        %744 = vmatprep.subr.bf16.mxu0 %v703
        %745 = vmatpush1.bf16.msra.mxu0 %v702
        %746 = vmatprep.subr.bf16.mxu0 %v700
        %747 = vmatpush1.bf16.msra.mxu0 %v699
        %748 = vmatprep.subr.bf16.mxu0 %v697
        %749 = vmatpush1.bf16.msra.mxu0 %v696
        %750 = vmatprep.subr.bf16.mxu0 %v694
        %751 = vmatpush1.bf16.msra.mxu0 %v693
        %752 = vmatprep.subr.bf16.mxu0 %v691
        %753 = vmatpush1.bf16.msra.mxu0 %v690
        %754 = vmatprep.subr.bf16.mxu0 0
        %755 = vmatpush2.bf16.msra.mxu0 0
        %756 = vmatprep.subr.bf16.mxu0 0
        %757 = vmatpush2.bf16.msra.mxu0 0
        %758 = vmatprep.subr.bf16.mxu0 0
        %759 = vmatpush2.bf16.msra.mxu0 0
        %760 = vmatprep.subr.bf16.mxu0 0
        %761 = vmatpush2.bf16.msra.mxu0 0
        %762 = vmatprep.subr.bf16.mxu0 0
        %763 = vmatpush2.bf16.msra.mxu0 0
        %764 = vmatprep.subr.bf16.mxu0 0
        %765 = vmatpush2.bf16.msra.mxu0 0
        %766 = vmatprep.subr.bf16.mxu0 0
        %767 = vmatpush2.bf16.msra.mxu0 0
        %768 = vmatprep.subr.bf16.mxu0 0
        %769 = vmatpush2.bf16.msra.mxu0 0
        %770 = vmatprep.mubr.bf16.mxu0 0
        %771 = vmatmul.mubr.bf16.gmra.mxu0 %v609
        %v772 = vpop.f32.mrf.mxu0
        %v773 = vadd.f32 0.0, %v772
        %v774 = vpop.f32.mrf.mxu0
        %v775 = vadd.f32 0.0, %v774
        %v776 = vpop.f32.mrf.mxu0
        %v777 = vpop.f32.mrf.mxu0
        %778 = vdwg.mxu0
        %779 = vmatprep.subr.bf16.mxu0 0
        %780 = vmatpush1.bf16.msra.mxu0 %v713
        %781 = vmatprep.subr.bf16.mxu0 0
        %782 = vmatpush1.bf16.msra.mxu0 %v710
        %783 = vmatprep.subr.bf16.mxu0 0
        %784 = vmatpush1.bf16.msra.mxu0 %v707
        %785 = vmatprep.subr.bf16.mxu0 0
        %786 = vmatpush1.bf16.msra.mxu0 %v704
        %787 = vmatprep.subr.bf16.mxu0 0
        %788 = vmatpush1.bf16.msra.mxu0 %v701
        %789 = vmatprep.subr.bf16.mxu0 0
        %790 = vmatpush1.bf16.msra.mxu0 %v698
        %791 = vmatprep.subr.bf16.mxu0 0
        %792 = vmatpush1.bf16.msra.mxu0 %v695
        %793 = vmatprep.subr.bf16.mxu0 0
        %794 = vmatpush1.bf16.msra.mxu0 %v692
        %795 = vmatprep.subr.bf16.mxu0 0
        %796 = vmatpush2.bf16.msra.mxu0 0
        %797 = vmatprep.subr.bf16.mxu0 0
        %798 = vmatpush2.bf16.msra.mxu0 0
        %799 = vmatprep.subr.bf16.mxu0 0
        %800 = vmatpush2.bf16.msra.mxu0 0
        %801 = vmatprep.subr.bf16.mxu0 0
        %802 = vmatpush2.bf16.msra.mxu0 0
        %803 = vmatprep.subr.bf16.mxu0 0
        %804 = vmatpush2.bf16.msra.mxu0 0
        %805 = vmatprep.subr.bf16.mxu0 0
        %806 = vmatpush2.bf16.msra.mxu0 0
        %807 = vmatprep.subr.bf16.mxu0 0
        %808 = vmatpush2.bf16.msra.mxu0 0
        %809 = vmatprep.subr.bf16.mxu0 0
        %810 = vmatpush2.bf16.msra.mxu0 0
        %811 = vmatprep.mubr.bf16.mxu0 0
        %812 = vmatmul.mubr.bf16.gmra.mxu0 %v609
        %v813 = vpop.f32.mrf.mxu0
        %v814 = vadd.f32 0.0, %v813
        %v815 = vpop.f32.mrf.mxu0
        %v816 = vpop.f32.mrf.mxu0
        %v817 = vpop.f32.mrf.mxu0
        %818 = vdwg.mxu0
        %v819 = vadd.f32 %v606, %v773
        %v820 = vxor.u32 %v819, 2147483648
        %v821 = vmul.f32 %v820, 1.442695
        %v822 = vpow.pop %v821
        %v823 = vadd.f32 %v822, 1.0
        %v824 = vrcp.pop %v823
        %v825 = vmul.f32 1.0, %v824
        %v826 = vadd.f32 %v607, %v775
        %v827 = vxor.u32 %v826, 2147483648
        %v828 = vmul.f32 %v827, 1.442695
        %v829 = vpow.pop %v828
        %v830 = vadd.f32 %v829, 1.0
        %v831 = vrcp.pop %v830
        %v832 = vmul.f32 1.0, %v831
        %v834 = vlaneseq
        %v835 = vshrl.u32 %v834, 7
        %v836 = vsub.s32 0, %v835
        %v837 = vrot.slane %v591, %v836
        %v839 = vadd.f32 %v814, %v837
        %v840 = vmul.f32 %v825, %v839
        %v841 = vadd.f32 %v608, %v840
        %v842 = vtanh.pop %v841
        %v843 = vsub.f32 1.0, %v832
        %v844 = vmul.f32 %v843, %v842
        %v845 = vmul.f32 %v832, %v599
        %v846 = vadd.f32 %v844, %v845
        %v847 = vpack.c.bf16 %v846, %v846
        %s848 = smul.addr %s594, 4
        %s849 = scalar_lea.vmem %s253, %s848
        %850 = vst [vmem:[%s849] sm:$0xf] %v847
      $region53: #{_lambda_.8} parent=43 // loop_footer
        %s598 = sadd.s32 1, %s594
      $region54: #{_lambda_.8} parent=43 // loop_footer_branch
        %593 = sbr.rel target = $region50
      $region55: #{_lambda_.8} parent=43 // loop_exit
        _
      %851 = vst [vmem:[#allocation2] sm:$0xff] %v599
      %s852 = smul.u32 4, %s17
      %p853 = scmp.lt.s32.totalorder %s852, 7
      %s854 = scalar_select %p853, %s852, 7
      %s855 = smul.addr %s854, 4
      %s856 = scalar_lea.vmem %s6, %s855
      // Predicated region
      $region56: #{_lambda_.8} parent=43 // pred_check
        %p857 = pneg %p166
      $region57: #{_lambda_.8} parent=43 // pred_check_branch
        %859 = sbr.rel (%p857) target = $region59
      $region58: #{_lambda_.8} parent=43 // pred_region
        %s860 = smul.u32 4, %s17
      $region59: #{_lambda_.8} parent=43 // pred_fallthru
        _
    $region44: #{_lambda_.8} parent=5 // pred_fallthru
      _
    %p861 = scmp.le.s32.totalorder 2, %s12
    // Predicated region
    $region60: #{_lambda_.8} parent=5 // pred_check
      %p862 = pneg %p861
    $region61: #{_lambda_.8} parent=5 // pred_check_branch
      %864 = sbr.rel (%p862) target = $region63
    $region62: #{_lambda_.8} parent=5 // pred_region
      %s865 = ssub.s32 %s12, 2
      // Predicated region
      $region64: #{_lambda_.8} parent=62 // pred_check
        %p866 = pneg %p172
      $region65: #{_lambda_.8} parent=62 // pred_check_branch
        %868 = sbr.rel (%p866) target = $region67
      $region66: #{_lambda_.8} parent=62 // pred_region
        %s869 = smul.u32 4, %s18
        %p870 = scmp.lt.s32.totalorder %s869, 7
        %s871 = scalar_select %p870, %s869, 7
        %s872 = smul.addr %s871, 4
        %s873 = scalar_lea.vmem %s6, %s872
      $region67: #{_lambda_.8} parent=62 // pred_fallthru
        _
    $region63: #{_lambda_.8} parent=5 // pred_fallthru
      _
  $region6: #{_lambda_.8} parent=0 // loop_footer
    %s16 = sadd.s32 1, %s12
  $region7: #{_lambda_.8} parent=0 // loop_footer_branch
    %11 = sbr.rel target = $region3
  $region8: #{_lambda_.8} parent=0 // loop_exit
    _

// kernel: _lambda_.5
$region0: #{_lambda_.5}
  #allocation0 [shape = 'u32[]', space=smem, size = 0x4, offset = 0x4, fixed_abs, tag = 'smem constant byte address 0x4 - core index']
  #allocation1 [shape = 'u32[144,128]{1,0:T(1,128)}', space=vmem, size = 0x12000, scoped, tag = 'internal scratch']
  #allocation2 [shape = 'f32[8,128]{1,0:T(8,128)}', space=vmem, size = 0x1000, scoped, tag = 'scratch operand']
  #allocation3 [shape = 'f32[8,128]{1,0:T(8,128)}', space=vmem, size = 0x1000, scoped, tag = 'scratch operand']
  #allocation4 [shape = 'f32[32,384]{1,0:T(8,128)}', space=vmem, size = 0xc000, scoped, tag = 'scratch operand']
  #allocation5 [shape = 'f32[32,384]{1,0:T(8,128)}', space=vmem, size = 0xc000, scoped, tag = 'scratch operand']
  %s0 = inlined_call_operand.vmem [shape: f32[64,128], index: 0, kind: input, shape index: {}, may-alias: {0,1}]
  %s1 = inlined_call_operand.vmem [shape: f32[64,128], index: 1, kind: input, shape index: {}, may-alias: {0,1}]
  %s2 = inlined_call_operand.hbm [shape: bf16[128,384], index: 2, kind: input, shape index: {}]
  %s3 = inlined_call_operand.vmem [shape: f32[1,384], index: 3, kind: input, shape index: {}]
  %s4 = inlined_call_operand.hbm [shape: bf16[128,384], index: 4, kind: input, shape index: {}]
  %s5 = inlined_call_operand.vmem [shape: f32[1,128], index: 5, kind: input, shape index: {}]
  %s6 = inlined_call_operand.hbm [shape: bf16[128,384], index: 6, kind: input, shape index: {}]
  %s7 = inlined_call_operand.vmem [shape: f32[1,384], index: 7, kind: input, shape index: {}]
  %s8 = inlined_call_operand.vmem [shape: bf16[128,384], index: 8, kind: input, shape index: {}]
  %s9 = inlined_call_operand.vmem [shape: f32[1,128], index: 9, kind: input, shape index: {}]
  %s10 = inlined_call_operand.vmem [shape: f32[8,256], index: 10, kind: output, shape index: {}]
  %s11 = sld [smem:[#allocation0]]
  $region96: #{_lambda_.5} parent=0
    _
  %s13 = ssub.s32 1, %s11
  %s14 = scalar_select 0, %s13, %s11
  $region1: #{_lambda_.5} parent=0
    #allocation6 [shape = 'u8[98304]{0}', space=vmem, size = 0x18000, scoped, tag = 'input window, operand 2, single buffered']
    #allocation7 [shape = 's32[2]{0}', space=sflag, size = 0x8, scoped, tag = 'scoped memory for _lambda_.5']
    #allocation8 [shape = 'u8[98304]{0}', space=vmem, size = 0x18000, scoped, tag = 'input window, operand 4, single buffered']
    #allocation9 [shape = 's32[1]{0}', space=sflag, size = 0x4, scoped, tag = 'scoped memory for _lambda_.5']
    #allocation10 [shape = 'u8[98304]{0}', space=vmem, size = 0x18000, scoped, tag = 'input window, operand 6, single buffered']
    %15 = vsyncpa [#allocation7], 0
    %16 = vsyncpa [#allocation9], 0
    loop: start=0, step=1, limit=4
    $region2: #{_lambda_.5} parent=1 // loop_pre_header
      _
    $region3: #{_lambda_.5} parent=1 // loop_header
      %s18 = sphi 0, %s22
      %p19 = scmp.ge.s32.totalorder %s18, 4
      %s28 = sphi 0, %s30
      %s31 = sphi 0, %s28
      %s32 = sphi 0, %s31
      %s48 = sphi 0, %s32
      %s56 = sphi 0, %s58
      %s59 = sphi 0, %s56
      %s60 = sphi 0, %s59
      %s76 = sphi 0, %s60
      %s80 = sphi 0, %s80
      %s82 = sphi 0, %s80
      %s83 = sphi 0, %s82
      %s97 = sphi 0, %s83
      %s101 = sphi 0, %s101
      %s103 = sphi 0, %s101
      %s104 = sphi 0, %s103
      %s118 = sphi 0, %s104
      %s122 = sphi 0, %s122
      %s124 = sphi 0, %s122
      %s125 = sphi 0, %s124
      %s139 = sphi 0, %s125
      %s143 = sphi 0, %s143
      %s145 = sphi 0, %s143
      %s146 = sphi 0, %s145
      %s160 = sphi 0, %s146
      %s164 = sphi 0, %s164
      %s166 = sphi 0, %s164
      %s167 = sphi 0, %s166
      %s181 = sphi 0, %s167
      %s185 = sphi 0, %s185
      %s187 = sphi 0, %s185
      %s188 = sphi 0, %s187
      %s202 = sphi 0, %s188
      %s206 = sphi 0, %s206
      %s208 = sphi 0, %s206
      %s209 = sphi 0, %s208
      %s223 = sphi 0, %s209
      %s227 = sphi 0, %s227
      %s229 = sphi 0, %s227
      %s230 = sphi 0, %s229
      %s244 = sphi 0, %s230
      %s248 = sphi 0, %s248
      %s250 = sphi 0, %s248
      %s251 = sphi 0, %s250
      %s265 = sphi 0, %s251
    $region4: #{_lambda_.5} parent=1 // loop_header_branch
      %21 = sbr.rel (%p19) target = $region8
    $region5: #{_lambda_.5} parent=1 // loop_body
      %s23 = ssub.s32 %s18, 1
      %s24 = ssub.s32 %s18, 2
      %s25 = sadd.s32 %s18, 1
      %s26 = ssub.s32 %s18, %s25
      %p27 = scmp.eq.s32.totalorder %s26, 0
      %s29 = sadd.s32 %s28, 1
      %s30 = scalar_select %p27, %s28, %s29
      %p33 = pneg %p27
      %p34 = scmp.eq.s32.totalorder %s18, 1
      %p35 = por %p33, %p34
      %p36 = scmp.ne.s32.totalorder %s28, %s31
      %p37 = scmp.eq.s32.totalorder %s18, 0
      %p38 = por %p36, %p37
      %p39 = scmp.ne.s32.totalorder %s28, %s31
      %p40 = scmp.eq.s32.totalorder %s23, 1
      %p41 = por %p39, %p40
      %p42 = scmp.ne.s32.totalorder %s31, %s32
      %p43 = scmp.eq.s32.totalorder %s23, 0
      %p44 = por %p42, %p43
      %p45 = scmp.ne.s32.totalorder %s31, %s32
      %p46 = scmp.eq.s32.totalorder %s24, 1
      %p47 = por %p45, %p46
      %p49 = scmp.ne.s32.totalorder %s32, %s48
      %p50 = scmp.eq.s32.totalorder %s24, 0
      %p51 = por %p49, %p50
      %s52 = ssub.s32 1, %s18
      %s53 = ssub.s32 1, %s25
      %s54 = ssub.s32 %s52, %s53
      %p55 = scmp.eq.s32.totalorder %s54, 0
      %s57 = sadd.s32 %s56, 1
      %s58 = scalar_select %p55, %s56, %s57
      %p61 = pneg %p55
      %p62 = scmp.eq.s32.totalorder %s18, 1
      %p63 = por %p61, %p62
      %p64 = scmp.ne.s32.totalorder %s56, %s59
      %p65 = scmp.eq.s32.totalorder %s18, 0
      %p66 = por %p64, %p65
      %p67 = scmp.ne.s32.totalorder %s56, %s59
      %p68 = scmp.eq.s32.totalorder %s23, 1
      %p69 = por %p67, %p68
      %p70 = scmp.ne.s32.totalorder %s59, %s60
      %p71 = scmp.eq.s32.totalorder %s23, 0
      %p72 = por %p70, %p71
      %p73 = scmp.ne.s32.totalorder %s59, %s60
      %p74 = scmp.eq.s32.totalorder %s24, 1
      %p75 = por %p73, %p74
      %p77 = scmp.ne.s32.totalorder %s60, %s76
      %p78 = scmp.eq.s32.totalorder %s24, 0
      %p79 = por %p77, %p78
      %s81 = sadd.s32 %s80, 1
      %p84 = scmp.eq.s32.totalorder %s18, 1
      %p85 = scmp.ne.s32.totalorder %s80, %s82
      %p86 = scmp.eq.s32.totalorder %s18, 0
      %p87 = por %p85, %p86
      %p88 = scmp.ne.s32.totalorder %s80, %s82
      %p89 = scmp.eq.s32.totalorder %s23, 1
      %p90 = por %p88, %p89
      %p91 = scmp.ne.s32.totalorder %s82, %s83
      %p92 = scmp.eq.s32.totalorder %s23, 0
      %p93 = por %p91, %p92
      %p94 = scmp.ne.s32.totalorder %s82, %s83
      %p95 = scmp.eq.s32.totalorder %s24, 1
      %p96 = por %p94, %p95
      %p98 = scmp.ne.s32.totalorder %s83, %s97
      %p99 = scmp.eq.s32.totalorder %s24, 0
      %p100 = por %p98, %p99
      %s102 = sadd.s32 %s101, 1
      %p105 = scmp.eq.s32.totalorder %s18, 1
      %p106 = scmp.ne.s32.totalorder %s101, %s103
      %p107 = scmp.eq.s32.totalorder %s18, 0
      %p108 = por %p106, %p107
      %p109 = scmp.ne.s32.totalorder %s101, %s103
      %p110 = scmp.eq.s32.totalorder %s23, 1
      %p111 = por %p109, %p110
      %p112 = scmp.ne.s32.totalorder %s103, %s104
      %p113 = scmp.eq.s32.totalorder %s23, 0
      %p114 = por %p112, %p113
      %p115 = scmp.ne.s32.totalorder %s103, %s104
      %p116 = scmp.eq.s32.totalorder %s24, 1
      %p117 = por %p115, %p116
      %p119 = scmp.ne.s32.totalorder %s104, %s118
      %p120 = scmp.eq.s32.totalorder %s24, 0
      %p121 = por %p119, %p120
      %s123 = sadd.s32 %s122, 1
      %p126 = scmp.eq.s32.totalorder %s18, 1
      %p127 = scmp.ne.s32.totalorder %s122, %s124
      %p128 = scmp.eq.s32.totalorder %s18, 0
      %p129 = por %p127, %p128
      %p130 = scmp.ne.s32.totalorder %s122, %s124
      %p131 = scmp.eq.s32.totalorder %s23, 1
      %p132 = por %p130, %p131
      %p133 = scmp.ne.s32.totalorder %s124, %s125
      %p134 = scmp.eq.s32.totalorder %s23, 0
      %p135 = por %p133, %p134
      %p136 = scmp.ne.s32.totalorder %s124, %s125
      %p137 = scmp.eq.s32.totalorder %s24, 1
      %p138 = por %p136, %p137
      %p140 = scmp.ne.s32.totalorder %s125, %s139
      %p141 = scmp.eq.s32.totalorder %s24, 0
      %p142 = por %p140, %p141
      %s144 = sadd.s32 %s143, 1
      %p147 = scmp.eq.s32.totalorder %s18, 1
      %p148 = scmp.ne.s32.totalorder %s143, %s145
      %p149 = scmp.eq.s32.totalorder %s18, 0
      %p150 = por %p148, %p149
      %p151 = scmp.ne.s32.totalorder %s143, %s145
      %p152 = scmp.eq.s32.totalorder %s23, 1
      %p153 = por %p151, %p152
      %p154 = scmp.ne.s32.totalorder %s145, %s146
      %p155 = scmp.eq.s32.totalorder %s23, 0
      %p156 = por %p154, %p155
      %p157 = scmp.ne.s32.totalorder %s145, %s146
      %p158 = scmp.eq.s32.totalorder %s24, 1
      %p159 = por %p157, %p158
      %p161 = scmp.ne.s32.totalorder %s146, %s160
      %p162 = scmp.eq.s32.totalorder %s24, 0
      %p163 = por %p161, %p162
      %s165 = sadd.s32 %s164, 1
      %p168 = scmp.eq.s32.totalorder %s18, 1
      %p169 = scmp.ne.s32.totalorder %s164, %s166
      %p170 = scmp.eq.s32.totalorder %s18, 0
      %p171 = por %p169, %p170
      %p172 = scmp.ne.s32.totalorder %s164, %s166
      %p173 = scmp.eq.s32.totalorder %s23, 1
      %p174 = por %p172, %p173
      %p175 = scmp.ne.s32.totalorder %s166, %s167
      %p176 = scmp.eq.s32.totalorder %s23, 0
      %p177 = por %p175, %p176
      %p178 = scmp.ne.s32.totalorder %s166, %s167
      %p179 = scmp.eq.s32.totalorder %s24, 1
      %p180 = por %p178, %p179
      %p182 = scmp.ne.s32.totalorder %s167, %s181
      %p183 = scmp.eq.s32.totalorder %s24, 0
      %p184 = por %p182, %p183
      %s186 = sadd.s32 %s185, 1
      %p189 = scmp.eq.s32.totalorder %s18, 1
      %p190 = scmp.ne.s32.totalorder %s185, %s187
      %p191 = scmp.eq.s32.totalorder %s18, 0
      %p192 = por %p190, %p191
      %p193 = scmp.ne.s32.totalorder %s185, %s187
      %p194 = scmp.eq.s32.totalorder %s23, 1
      %p195 = por %p193, %p194
      %p196 = scmp.ne.s32.totalorder %s187, %s188
      %p197 = scmp.eq.s32.totalorder %s23, 0
      %p198 = por %p196, %p197
      %p199 = scmp.ne.s32.totalorder %s187, %s188
      %p200 = scmp.eq.s32.totalorder %s24, 1
      %p201 = por %p199, %p200
      %p203 = scmp.ne.s32.totalorder %s188, %s202
      %p204 = scmp.eq.s32.totalorder %s24, 0
      %p205 = por %p203, %p204
      %s207 = sadd.s32 %s206, 1
      %p210 = scmp.eq.s32.totalorder %s18, 1
      %p211 = scmp.ne.s32.totalorder %s206, %s208
      %p212 = scmp.eq.s32.totalorder %s18, 0
      %p213 = por %p211, %p212
      %p214 = scmp.ne.s32.totalorder %s206, %s208
      %p215 = scmp.eq.s32.totalorder %s23, 1
      %p216 = por %p214, %p215
      %p217 = scmp.ne.s32.totalorder %s208, %s209
      %p218 = scmp.eq.s32.totalorder %s23, 0
      %p219 = por %p217, %p218
      %p220 = scmp.ne.s32.totalorder %s208, %s209
      %p221 = scmp.eq.s32.totalorder %s24, 1
      %p222 = por %p220, %p221
      %p224 = scmp.ne.s32.totalorder %s209, %s223
      %p225 = scmp.eq.s32.totalorder %s24, 0
      %p226 = por %p224, %p225
      %s228 = sadd.s32 %s227, 1
      %p231 = scmp.eq.s32.totalorder %s18, 1
      %p232 = scmp.ne.s32.totalorder %s227, %s229
      %p233 = scmp.eq.s32.totalorder %s18, 0
      %p234 = por %p232, %p233
      %p235 = scmp.ne.s32.totalorder %s227, %s229
      %p236 = scmp.eq.s32.totalorder %s23, 1
      %p237 = por %p235, %p236
      %p238 = scmp.ne.s32.totalorder %s229, %s230
      %p239 = scmp.eq.s32.totalorder %s23, 0
      %p240 = por %p238, %p239
      %p241 = scmp.ne.s32.totalorder %s229, %s230
      %p242 = scmp.eq.s32.totalorder %s24, 1
      %p243 = por %p241, %p242
      %p245 = scmp.ne.s32.totalorder %s230, %s244
      %p246 = scmp.eq.s32.totalorder %s24, 0
      %p247 = por %p245, %p246
      %s249 = sadd.s32 %s248, 1
      %p252 = scmp.eq.s32.totalorder %s18, 1
      %p253 = scmp.ne.s32.totalorder %s248, %s250
      %p254 = scmp.eq.s32.totalorder %s18, 0
      %p255 = por %p253, %p254
      %p256 = scmp.ne.s32.totalorder %s248, %s250
      %p257 = scmp.eq.s32.totalorder %s23, 1
      %p258 = por %p256, %p257
      %p259 = scmp.ne.s32.totalorder %s250, %s251
      %p260 = scmp.eq.s32.totalorder %s23, 0
      %p261 = por %p259, %p260
      %p262 = scmp.ne.s32.totalorder %s250, %s251
      %p263 = scmp.eq.s32.totalorder %s24, 1
      %p264 = por %p262, %p263
      %p266 = scmp.ne.s32.totalorder %s251, %s265
      %p267 = scmp.eq.s32.totalorder %s24, 0
      %p268 = por %p266, %p267
      %p269 = scmp.le.s32.totalorder 1, %s18
      %p270 = scmp.lt.s32.totalorder %s18, 3
      %p271 = pnand %p269, %p270
      %p272 = pneg %p271
      // Predicated region
      $region9: #{_lambda_.5} parent=5 // pred_check
        _
      $region10: #{_lambda_.5} parent=5 // pred_check_branch
        %274 = sbr.rel (%p271) target = $region12
      $region11: #{_lambda_.5} parent=5 // pred_region
        %s275 = ssub.s32 %s18, 1
        // Predicated region
        $region13: #{_lambda_.5} parent=11 // pred_check
          %p276 = pneg %p93
        $region14: #{_lambda_.5} parent=11 // pred_check_branch
          %278 = sbr.rel (%p276) target = $region16
        $region15: #{_lambda_.5} parent=11 // pred_region
          %s280 = ssub.s32 3072, 3072
          %281 = vsyncadd [#allocation7], %s280
          %s282 = sshll.u32 [#allocation6], 4
          %s283 = int_to_ptr.vmem [resolvable:$true] %s282
          %288 = dma.hbm_to_vmem [thread:$0]  %s2, 3072, %s283, [#allocation7], 192, 192, 12
        $region16: #{_lambda_.5} parent=11 // pred_fallthru
          _
        // Predicated region
        $region17: #{_lambda_.5} parent=11 // pred_check
          %p289 = pneg %p114
        $region18: #{_lambda_.5} parent=11 // pred_check_branch
          %291 = sbr.rel (%p289) target = $region20
        $region19: #{_lambda_.5} parent=11 // pred_region
          _
        $region20: #{_lambda_.5} parent=11 // pred_fallthru
          _
        // Predicated region
        $region21: #{_lambda_.5} parent=11 // pred_check
          %p292 = pneg %p135
        $region22: #{_lambda_.5} parent=11 // pred_check_branch
          %294 = sbr.rel (%p292) target = $region24
        $region23: #{_lambda_.5} parent=11 // pred_region
          %s296 = ssub.s32 3072, 3072
          %297 = vsyncadd [#allocation9], %s296
          %s298 = sshll.u32 [#allocation8], 4
          %s299 = int_to_ptr.vmem [resolvable:$true] %s298
          %304 = dma.hbm_to_vmem [thread:$0]  %s4, 3072, %s299, [#allocation9], 192, 192, 12
        $region24: #{_lambda_.5} parent=11 // pred_fallthru
          _
        // Predicated region
        $region25: #{_lambda_.5} parent=11 // pred_check
          %p305 = pneg %p156
        $region26: #{_lambda_.5} parent=11 // pred_check_branch
          %307 = sbr.rel (%p305) target = $region28
        $region27: #{_lambda_.5} parent=11 // pred_region
          _
        $region28: #{_lambda_.5} parent=11 // pred_fallthru
          _
        // Predicated region
        $region29: #{_lambda_.5} parent=11 // pred_check
          %p308 = pneg %p177
        $region30: #{_lambda_.5} parent=11 // pred_check_branch
          %310 = sbr.rel (%p308) target = $region32
        $region31: #{_lambda_.5} parent=11 // pred_region
          %s312 = ssub.s32 3072, 3072
          %313 = vsyncadd [#allocation9], %s312
          %s314 = sshll.u32 [#allocation10], 4
          %s315 = int_to_ptr.vmem [resolvable:$true] %s314
          %320 = dma.hbm_to_vmem [thread:$0]  %s6, 3072, %s315, [#allocation9], 192, 192, 12
        $region32: #{_lambda_.5} parent=11 // pred_fallthru
          _
        // Predicated region
        $region33: #{_lambda_.5} parent=11 // pred_check
          %p321 = pneg %p198
        $region34: #{_lambda_.5} parent=11 // pred_check_branch
          %323 = sbr.rel (%p321) target = $region36
        $region35: #{_lambda_.5} parent=11 // pred_region
          _
        $region36: #{_lambda_.5} parent=11 // pred_fallthru
          _
        // Predicated region
        $region37: #{_lambda_.5} parent=11 // pred_check
          %p324 = pneg %p219
        $region38: #{_lambda_.5} parent=11 // pred_check_branch
          %326 = sbr.rel (%p324) target = $region40
        $region39: #{_lambda_.5} parent=11 // pred_region
          _
        $region40: #{_lambda_.5} parent=11 // pred_fallthru
          _
        // Predicated region
        $region41: #{_lambda_.5} parent=11 // pred_check
          %p327 = pneg %p240
        $region42: #{_lambda_.5} parent=11 // pred_check_branch
          %329 = sbr.rel (%p327) target = $region44
        $region43: #{_lambda_.5} parent=11 // pred_region
          _
        $region44: #{_lambda_.5} parent=11 // pred_fallthru
          _
      $region12: #{_lambda_.5} parent=5 // pred_fallthru
        _
      %p330 = scmp.lt.s32.totalorder %s18, 2
      // Predicated region
      $region45: #{_lambda_.5} parent=5 // pred_check
        %p331 = pneg %p330
      $region46: #{_lambda_.5} parent=5 // pred_check_branch
        %333 = sbr.rel (%p331) target = $region48
      $region47: #{_lambda_.5} parent=5 // pred_region
        // Predicated region
        $region49: #{_lambda_.5} parent=47 // pred_check
          %p334 = pneg %p38
        $region50: #{_lambda_.5} parent=47 // pred_check_branch
          %336 = sbr.rel (%p334) target = $region52
        $region51: #{_lambda_.5} parent=47 // pred_region
          %s337 = smul.u32 4, %s18
          %p338 = scmp.lt.s32.totalorder %s337, 7
          %s339 = scalar_select %p338, %s337, 7
          %s340 = smul.addr %s339, 8
          %s341 = scalar_lea.vmem %s0, %s340
          %s342 = smul.u32 4, %s18
        $region52: #{_lambda_.5} parent=47 // pred_fallthru
          _
        // Predicated region
        $region53: #{_lambda_.5} parent=47 // pred_check
          %p343 = pneg %p66
        $region54: #{_lambda_.5} parent=47 // pred_check_branch
          %345 = sbr.rel (%p343) target = $region56
        $region55: #{_lambda_.5} parent=47 // pred_region
          %s346 = ssub.s32 1, %s18
          %s347 = smul.u32 4, %s346
          %p348 = scmp.lt.s32.totalorder %s347, 7
          %s349 = scalar_select %p348, %s347, 7
          %s350 = smul.addr %s349, 8
          %s351 = scalar_lea.vmem %s1, %s350
          %s352 = ssub.s32 1, %s18
          %s353 = smul.u32 4, %s352
        $region56: #{_lambda_.5} parent=47 // pred_fallthru
          _
      $region48: #{_lambda_.5} parent=5 // pred_fallthru
        _
      %p354 = scmp.le.s32.totalorder 1, %s18
      %p355 = scmp.lt.s32.totalorder %s18, 3
      %p356 = pnand %p354, %p355
      %p357 = pneg %p356
      // Predicated region
      $region57: #{_lambda_.5} parent=5 // pred_check
        _
      $region58: #{_lambda_.5} parent=5 // pred_check_branch
        %359 = sbr.rel (%p356) target = $region60
      $region59: #{_lambda_.5} parent=5 // pred_region
        %s360 = ssub.s32 %s18, 1
        // Predicated region
        $region61: #{_lambda_.5} parent=59 // pred_check
          %p361 = pneg %p93
        $region62: #{_lambda_.5} parent=59 // pred_check_branch
          %363 = sbr.rel (%p361) target = $region64
        $region63: #{_lambda_.5} parent=59 // pred_region
          %364 = dma.done [#allocation7], 3072
        $region64: #{_lambda_.5} parent=59 // pred_fallthru
          _
        // Predicated region
        $region65: #{_lambda_.5} parent=59 // pred_check
          %p365 = pneg %p135
        $region66: #{_lambda_.5} parent=59 // pred_check_branch
          %367 = sbr.rel (%p365) target = $region68
        $region67: #{_lambda_.5} parent=59 // pred_region
          %368 = dma.done [#allocation9], 3072
        $region68: #{_lambda_.5} parent=59 // pred_fallthru
          _
        // Predicated region
        $region69: #{_lambda_.5} parent=59 // pred_check
          %p369 = pneg %p177
        $region70: #{_lambda_.5} parent=59 // pred_check_branch
          %371 = sbr.rel (%p369) target = $region72
        $region71: #{_lambda_.5} parent=59 // pred_region
          %372 = dma.done [#allocation9], 3072
        $region72: #{_lambda_.5} parent=59 // pred_fallthru
          _
        %s373 = smul.u32 4, %s23
        %p374 = scmp.lt.s32.totalorder %s373, 7
        %s375 = scalar_select %p374, %s373, 7
        %s376 = smul.addr %s375, 8
        %s377 = scalar_lea.vmem %s0, %s376
        %p378 = pneg %p44
        %p379 = pneg %p41
        %s380 = ssub.s32 1, %s23
        %s381 = smul.u32 4, %s380
        %p382 = scmp.lt.s32.totalorder %s381, 7
        %s383 = scalar_select %p382, %s381, 7
        %s384 = smul.addr %s383, 8
        %s385 = scalar_lea.vmem %s1, %s384
        %p386 = pneg %p72
        %p387 = pneg %p69
        %p388 = pneg %p93
        %p389 = pneg %p90
        %p390 = pneg %p114
        %p391 = pneg %p111
        %p392 = pneg %p135
        %p393 = pneg %p132
        %p394 = pneg %p156
        %p395 = pneg %p153
        %p396 = pneg %p177
        %p397 = pneg %p174
        %p398 = pneg %p198
        %p399 = pneg %p195
        %p400 = pneg %p219
        %p401 = pneg %p216
        %p402 = pneg %p240
        %p403 = pneg %p237
        %p404 = pneg %p261
        %p405 = pneg %p258
        %s406 = smul.u32 4, %s23
        %p407 = scmp.lt.s32.totalorder %s406, 7
        %s408 = scalar_select %p407, %s406, 7
        %s409 = smul.addr %s408, 8
        %s410 = scalar_lea.vmem %s0, %s409
        %s411 = smul.u32 4, %s23
        %s412 = ssub.s32 1, %s23
        %s413 = smul.u32 4, %s412
        %p414 = scmp.lt.s32.totalorder %s413, 7
        %s415 = scalar_select %p414, %s413, 7
        %s416 = smul.addr %s415, 8
        %s417 = scalar_lea.vmem %s1, %s416
        %s418 = ssub.s32 1, %s23
        %s419 = smul.u32 4, %s418
        %p421 = scmp.eq.s32.totalorder %s23, 0
        // Predicated region
        $region73: #{_lambda_.5} parent=59 // pred_check
          %p422 = pneg %p421
        $region74: #{_lambda_.5} parent=59 // pred_check_branch
          %424 = sbr.rel (%p422) target = $region76
        $region75: #{_lambda_.5} parent=59 // pred_region
          %425 = vst [vmem:[#allocation2] sm:$0xff] 0.0
          %426 = vst [vmem:[#allocation3] sm:$0xff] 0.0
        $region76: #{_lambda_.5} parent=59 // pred_fallthru
          _
        %v427 = vld [vmem:[%s410] sm:$0xff]
        %v428 = vld [vmem:[%s410 + $0x8] sm:$0xff]
        %v429 = vld [vmem:[%s410 + $0x10] sm:$0xff]
        %v430 = vld [vmem:[%s410 + $0x18] sm:$0xff]
        %v431 = vpack.c.bf16 %v428, %v427
        %v432 = vpack.c.bf16 %v430, %v429
        %v433 = vld [vmem:[#allocation6] sm:$0xff]
        %v434 = vld [vmem:[#allocation6 + $0x8] sm:$0xf]
        %v435 = vld [vmem:[#allocation6 + $0xc] sm:$0xff]
        %v436 = vld [vmem:[#allocation6 + $0x14] sm:$0xf]
        %v437 = vld [vmem:[#allocation6 + $0x18] sm:$0xff]
        %v438 = vld [vmem:[#allocation6 + $0x20] sm:$0xf]
        %v439 = vld [vmem:[#allocation6 + $0x24] sm:$0xff]
        %v440 = vld [vmem:[#allocation6 + $0x2c] sm:$0xf]
        %v441 = vld [vmem:[#allocation6 + $0x30] sm:$0xff]
        %v442 = vld [vmem:[#allocation6 + $0x38] sm:$0xf]
        %v443 = vld [vmem:[#allocation6 + $0x3c] sm:$0xff]
        %v444 = vld [vmem:[#allocation6 + $0x44] sm:$0xf]
        %v445 = vld [vmem:[#allocation6 + $0x48] sm:$0xff]
        %v446 = vld [vmem:[#allocation6 + $0x50] sm:$0xf]
        %v447 = vld [vmem:[#allocation6 + $0x54] sm:$0xff]
        %v448 = vld [vmem:[#allocation6 + $0x5c] sm:$0xf]
        %v449 = vld [vmem:[#allocation6 + $0x60] sm:$0xff]
        %v450 = vld [vmem:[#allocation6 + $0x68] sm:$0xf]
        %v451 = vld [vmem:[#allocation6 + $0x6c] sm:$0xff]
        %v452 = vld [vmem:[#allocation6 + $0x74] sm:$0xf]
        %v453 = vld [vmem:[#allocation6 + $0x78] sm:$0xff]
        %v454 = vld [vmem:[#allocation6 + $0x80] sm:$0xf]
        %v455 = vld [vmem:[#allocation6 + $0x84] sm:$0xff]
        %v456 = vld [vmem:[#allocation6 + $0x8c] sm:$0xf]
        %v457 = vld [vmem:[#allocation6 + $0x90] sm:$0xff]
        %v458 = vld [vmem:[#allocation6 + $0x98] sm:$0xf]
        %v459 = vld [vmem:[#allocation6 + $0x9c] sm:$0xff]
        %v460 = vld [vmem:[#allocation6 + $0xa4] sm:$0xf]
        %v461 = vld [vmem:[#allocation6 + $0xa8] sm:$0xff]
        %v462 = vld [vmem:[#allocation6 + $0xb0] sm:$0xf]
        %v463 = vld [vmem:[#allocation6 + $0xb4] sm:$0xff]
        %v464 = vld [vmem:[#allocation6 + $0xbc] sm:$0xf]
        %v465 = vld [vmem:[%s3] sm:$0x7]
        %v467 = vlaneseq
        %v468 = vshrl.u32 %v467, 7
        %v469 = vsub.s32 0, %v468
        %v470 = vrot.slane %v465, %v469
        %v471 = vlaneseq
        %v472 = vshrl.u32 %v471, 7
        %v473 = vsub.s32 1, %v472
        %v474 = vrot.slane %v465, %v473
        %v475 = vlaneseq
        %v476 = vshrl.u32 %v475, 7
        %v477 = vsub.s32 2, %v476
        %v478 = vrot.slane %v465, %v477
        %v514 = vunpack.c.l.b16 %v433
        %v515 = vunpack.c.h.b16 %v433
        %v516 = vunpack.c.l.b16 %v434
        %v517 = vunpack.c.l.b16 %v435
        %v518 = vunpack.c.h.b16 %v435
        %v519 = vunpack.c.l.b16 %v436
        %v520 = vunpack.c.l.b16 %v437
        %v521 = vunpack.c.h.b16 %v437
        %v522 = vunpack.c.l.b16 %v438
        %v523 = vunpack.c.l.b16 %v439
        %v524 = vunpack.c.h.b16 %v439
        %v525 = vunpack.c.l.b16 %v440
        %v526 = vunpack.c.l.b16 %v441
        %v527 = vunpack.c.h.b16 %v441
        %v528 = vunpack.c.l.b16 %v442
        %v529 = vunpack.c.l.b16 %v443
        %v530 = vunpack.c.h.b16 %v443
        %v531 = vunpack.c.l.b16 %v444
        %v532 = vunpack.c.l.b16 %v445
        %v533 = vunpack.c.h.b16 %v445
        %v534 = vunpack.c.l.b16 %v446
        %v535 = vunpack.c.l.b16 %v447
        %v536 = vunpack.c.h.b16 %v447
        %v537 = vunpack.c.l.b16 %v448
        %v538 = vunpack.c.l.b16 %v449
        %v539 = vunpack.c.h.b16 %v449
        %v540 = vunpack.c.l.b16 %v450
        %v541 = vunpack.c.l.b16 %v451
        %v542 = vunpack.c.h.b16 %v451
        %v543 = vunpack.c.l.b16 %v452
        %v544 = vunpack.c.l.b16 %v453
        %v545 = vunpack.c.h.b16 %v453
        %v546 = vunpack.c.l.b16 %v454
        %v547 = vunpack.c.l.b16 %v455
        %v548 = vunpack.c.h.b16 %v455
        %v549 = vunpack.c.l.b16 %v456
        %v550 = vunpack.c.l.b16 %v457
        %v551 = vunpack.c.h.b16 %v457
        %v552 = vunpack.c.l.b16 %v458
        %v553 = vunpack.c.l.b16 %v459
        %v554 = vunpack.c.h.b16 %v459
        %v555 = vunpack.c.l.b16 %v460
        %v556 = vunpack.c.l.b16 %v461
        %v557 = vunpack.c.h.b16 %v461
        %v558 = vunpack.c.l.b16 %v462
        %v559 = vunpack.c.l.b16 %v463
        %v560 = vunpack.c.h.b16 %v463
        %v561 = vunpack.c.l.b16 %v464
        %v562 = vpack.c.b16 %v517, %v514
        %v563 = vpack.c.b16 %v518, %v515
        %v564 = vpack.c.b16 %v519, %v516
        %v565 = vpack.c.b16 %v523, %v520
        %v566 = vpack.c.b16 %v524, %v521
        %v567 = vpack.c.b16 %v525, %v522
        %v568 = vpack.c.b16 %v529, %v526
        %v569 = vpack.c.b16 %v530, %v527
        %v570 = vpack.c.b16 %v531, %v528
        %v571 = vpack.c.b16 %v535, %v532
        %v572 = vpack.c.b16 %v536, %v533
        %v573 = vpack.c.b16 %v537, %v534
        %v574 = vpack.c.b16 %v541, %v538
        %v575 = vpack.c.b16 %v542, %v539
        %v576 = vpack.c.b16 %v543, %v540
        %v577 = vpack.c.b16 %v547, %v544
        %v578 = vpack.c.b16 %v548, %v545
        %v579 = vpack.c.b16 %v549, %v546
        %v580 = vpack.c.b16 %v553, %v550
        %v581 = vpack.c.b16 %v554, %v551
        %v582 = vpack.c.b16 %v555, %v552
        %v583 = vpack.c.b16 %v559, %v556
        %v584 = vpack.c.b16 %v560, %v557
        %v585 = vpack.c.b16 %v561, %v558
        %610 = vmatprep.subr.bf16.mxu0 %v584
        %611 = vmatpush1.bf16.msra.mxu0 %v583
        %612 = vmatprep.subr.bf16.mxu0 %v581
        %613 = vmatpush1.bf16.msra.mxu0 %v580
        %614 = vmatprep.subr.bf16.mxu0 %v578
        %615 = vmatpush1.bf16.msra.mxu0 %v577
        %616 = vmatprep.subr.bf16.mxu0 %v575
        %617 = vmatpush1.bf16.msra.mxu0 %v574
        %618 = vmatprep.subr.bf16.mxu0 %v572
        %619 = vmatpush1.bf16.msra.mxu0 %v571
        %620 = vmatprep.subr.bf16.mxu0 %v569
        %621 = vmatpush1.bf16.msra.mxu0 %v568
        %622 = vmatprep.subr.bf16.mxu0 %v566
        %623 = vmatpush1.bf16.msra.mxu0 %v565
        %624 = vmatprep.subr.bf16.mxu0 %v563
        %625 = vmatpush1.bf16.msra.mxu0 %v562
        %626 = vmatprep.subr.bf16.mxu0 0
        %627 = vmatpush2.bf16.msra.mxu0 0
        %628 = vmatprep.subr.bf16.mxu0 0
        %629 = vmatpush2.bf16.msra.mxu0 0
        %630 = vmatprep.subr.bf16.mxu0 0
        %631 = vmatpush2.bf16.msra.mxu0 0
        %632 = vmatprep.subr.bf16.mxu0 0
        %633 = vmatpush2.bf16.msra.mxu0 0
        %634 = vmatprep.subr.bf16.mxu0 0
        %635 = vmatpush2.bf16.msra.mxu0 0
        %636 = vmatprep.subr.bf16.mxu0 0
        %637 = vmatpush2.bf16.msra.mxu0 0
        %638 = vmatprep.subr.bf16.mxu0 0
        %639 = vmatpush2.bf16.msra.mxu0 0
        %640 = vmatprep.subr.bf16.mxu0 0
        %641 = vmatpush2.bf16.msra.mxu0 0
        %642 = vmatprep.mubr.bf16.mxu0 0
        %643 = vmatmul.mubr.bf16.gmra.mxu0 %v431
        %v644 = vpop.f32.mrf.mxu0
        %v645 = vadd.f32 %v470, %v644
        %v646 = vpop.f32.mrf.mxu0
        %v647 = vadd.f32 %v474, %v646
        %v648 = vpop.f32.mrf.mxu0
        %v649 = vadd.f32 %v470, %v648
        %v650 = vpop.f32.mrf.mxu0
        %v651 = vadd.f32 %v474, %v650
        %652 = vmatprep.mubr.bf16.mxu0 0
        %653 = vmatmul.mubr.bf16.gmra.mxu0 %v432
        %v654 = vpop.f32.mrf.mxu0
        %v655 = vadd.f32 %v470, %v654
        %v656 = vpop.f32.mrf.mxu0
        %v657 = vadd.f32 %v474, %v656
        %v658 = vpop.f32.mrf.mxu0
        %v659 = vadd.f32 %v470, %v658
        %v660 = vpop.f32.mrf.mxu0
        %v661 = vadd.f32 %v474, %v660
        %662 = vdwg.mxu0
        %663 = vmatprep.subr.bf16.mxu0 0
        %664 = vmatpush1.bf16.msra.mxu0 %v585
        %665 = vmatprep.subr.bf16.mxu0 0
        %666 = vmatpush1.bf16.msra.mxu0 %v582
        %667 = vmatprep.subr.bf16.mxu0 0
        %668 = vmatpush1.bf16.msra.mxu0 %v579
        %669 = vmatprep.subr.bf16.mxu0 0
        %670 = vmatpush1.bf16.msra.mxu0 %v576
        %671 = vmatprep.subr.bf16.mxu0 0
        %672 = vmatpush1.bf16.msra.mxu0 %v573
        %673 = vmatprep.subr.bf16.mxu0 0
        %674 = vmatpush1.bf16.msra.mxu0 %v570
        %675 = vmatprep.subr.bf16.mxu0 0
        %676 = vmatpush1.bf16.msra.mxu0 %v567
        %677 = vmatprep.subr.bf16.mxu0 0
        %678 = vmatpush1.bf16.msra.mxu0 %v564
        %679 = vmatprep.subr.bf16.mxu0 0
        %680 = vmatpush2.bf16.msra.mxu0 0
        %681 = vmatprep.subr.bf16.mxu0 0
        %682 = vmatpush2.bf16.msra.mxu0 0
        %683 = vmatprep.subr.bf16.mxu0 0
        %684 = vmatpush2.bf16.msra.mxu0 0
        %685 = vmatprep.subr.bf16.mxu0 0
        %686 = vmatpush2.bf16.msra.mxu0 0
        %687 = vmatprep.subr.bf16.mxu0 0
        %688 = vmatpush2.bf16.msra.mxu0 0
        %689 = vmatprep.subr.bf16.mxu0 0
        %690 = vmatpush2.bf16.msra.mxu0 0
        %691 = vmatprep.subr.bf16.mxu0 0
        %692 = vmatpush2.bf16.msra.mxu0 0
        %693 = vmatprep.subr.bf16.mxu0 0
        %694 = vmatpush2.bf16.msra.mxu0 0
        %695 = vmatprep.mubr.bf16.mxu0 0
        %696 = vmatmul.mubr.bf16.gmra.mxu0 %v431
        %v697 = vpop.f32.mrf.mxu0
        %v698 = vadd.f32 %v478, %v697
        %v699 = vpop.f32.mrf.mxu0
        %v700 = vpop.f32.mrf.mxu0
        %v701 = vadd.f32 %v478, %v700
        %v702 = vpop.f32.mrf.mxu0
        %703 = vmatprep.mubr.bf16.mxu0 0
        %704 = vmatmul.mubr.bf16.gmra.mxu0 %v432
        %v705 = vpop.f32.mrf.mxu0
        %v706 = vadd.f32 %v478, %v705
        %v707 = vpop.f32.mrf.mxu0
        %v708 = vpop.f32.mrf.mxu0
        %v709 = vadd.f32 %v478, %v708
        %v710 = vpop.f32.mrf.mxu0
        %711 = vdwg.mxu0
        %712 = vst [vmem:[#allocation4] sm:$0xff] %v645
        %713 = vst [vmem:[#allocation4 + $0x8] sm:$0xff] %v647
        %714 = vst [vmem:[#allocation4 + $0x10] sm:$0xff] %v698
        %715 = vst [vmem:[#allocation4 + $0x18] sm:$0xff] %v649
        %716 = vst [vmem:[#allocation4 + $0x20] sm:$0xff] %v651
        %717 = vst [vmem:[#allocation4 + $0x28] sm:$0xff] %v701
        %718 = vst [vmem:[#allocation4 + $0x30] sm:$0xff] %v655
        %719 = vst [vmem:[#allocation4 + $0x38] sm:$0xff] %v657
        %720 = vst [vmem:[#allocation4 + $0x40] sm:$0xff] %v706
        %721 = vst [vmem:[#allocation4 + $0x48] sm:$0xff] %v659
        %722 = vst [vmem:[#allocation4 + $0x50] sm:$0xff] %v661
        %723 = vst [vmem:[#allocation4 + $0x58] sm:$0xff] %v709
        %v724 = vld [vmem:[%s417] sm:$0xff]
        %v725 = vld [vmem:[%s417 + $0x8] sm:$0xff]
        %v726 = vld [vmem:[%s417 + $0x10] sm:$0xff]
        %v727 = vld [vmem:[%s417 + $0x18] sm:$0xff]
        %v728 = vpack.c.bf16 %v725, %v724
        %v729 = vpack.c.bf16 %v727, %v726
        %v730 = vld [vmem:[#allocation10] sm:$0xff]
        %v731 = vld [vmem:[#allocation10 + $0x8] sm:$0xf]
        %v732 = vld [vmem:[#allocation10 + $0xc] sm:$0xff]
        %v733 = vld [vmem:[#allocation10 + $0x14] sm:$0xf]
        %v734 = vld [vmem:[#allocation10 + $0x18] sm:$0xff]
        %v735 = vld [vmem:[#allocation10 + $0x20] sm:$0xf]
        %v736 = vld [vmem:[#allocation10 + $0x24] sm:$0xff]
        %v737 = vld [vmem:[#allocation10 + $0x2c] sm:$0xf]
        %v738 = vld [vmem:[#allocation10 + $0x30] sm:$0xff]
        %v739 = vld [vmem:[#allocation10 + $0x38] sm:$0xf]
        %v740 = vld [vmem:[#allocation10 + $0x3c] sm:$0xff]
        %v741 = vld [vmem:[#allocation10 + $0x44] sm:$0xf]
        %v742 = vld [vmem:[#allocation10 + $0x48] sm:$0xff]
        %v743 = vld [vmem:[#allocation10 + $0x50] sm:$0xf]
        %v744 = vld [vmem:[#allocation10 + $0x54] sm:$0xff]
        %v745 = vld [vmem:[#allocation10 + $0x5c] sm:$0xf]
        %v746 = vld [vmem:[#allocation10 + $0x60] sm:$0xff]
        %v747 = vld [vmem:[#allocation10 + $0x68] sm:$0xf]
        %v748 = vld [vmem:[#allocation10 + $0x6c] sm:$0xff]
        %v749 = vld [vmem:[#allocation10 + $0x74] sm:$0xf]
        %v750 = vld [vmem:[#allocation10 + $0x78] sm:$0xff]
        %v751 = vld [vmem:[#allocation10 + $0x80] sm:$0xf]
        %v752 = vld [vmem:[#allocation10 + $0x84] sm:$0xff]
        %v753 = vld [vmem:[#allocation10 + $0x8c] sm:$0xf]
        %v754 = vld [vmem:[#allocation10 + $0x90] sm:$0xff]
        %v755 = vld [vmem:[#allocation10 + $0x98] sm:$0xf]
        %v756 = vld [vmem:[#allocation10 + $0x9c] sm:$0xff]
        %v757 = vld [vmem:[#allocation10 + $0xa4] sm:$0xf]
        %v758 = vld [vmem:[#allocation10 + $0xa8] sm:$0xff]
        %v759 = vld [vmem:[#allocation10 + $0xb0] sm:$0xf]
        %v760 = vld [vmem:[#allocation10 + $0xb4] sm:$0xff]
        %v761 = vld [vmem:[#allocation10 + $0xbc] sm:$0xf]
        %v762 = vld [vmem:[%s7] sm:$0x7]
        %v764 = vlaneseq
        %v765 = vshrl.u32 %v764, 7
        %v766 = vsub.s32 0, %v765
        %v767 = vrot.slane %v762, %v766
        %v768 = vlaneseq
        %v769 = vshrl.u32 %v768, 7
        %v770 = vsub.s32 1, %v769
        %v771 = vrot.slane %v762, %v770
        %v772 = vlaneseq
        %v773 = vshrl.u32 %v772, 7
        %v774 = vsub.s32 2, %v773
        %v775 = vrot.slane %v762, %v774
        %v811 = vunpack.c.l.b16 %v730
        %v812 = vunpack.c.h.b16 %v730
        %v813 = vunpack.c.l.b16 %v731
        %v814 = vunpack.c.l.b16 %v732
        %v815 = vunpack.c.h.b16 %v732
        %v816 = vunpack.c.l.b16 %v733
        %v817 = vunpack.c.l.b16 %v734
        %v818 = vunpack.c.h.b16 %v734
        %v819 = vunpack.c.l.b16 %v735
        %v820 = vunpack.c.l.b16 %v736
        %v821 = vunpack.c.h.b16 %v736
        %v822 = vunpack.c.l.b16 %v737
        %v823 = vunpack.c.l.b16 %v738
        %v824 = vunpack.c.h.b16 %v738
        %v825 = vunpack.c.l.b16 %v739
        %v826 = vunpack.c.l.b16 %v740
        %v827 = vunpack.c.h.b16 %v740
        %v828 = vunpack.c.l.b16 %v741
        %v829 = vunpack.c.l.b16 %v742
        %v830 = vunpack.c.h.b16 %v742
        %v831 = vunpack.c.l.b16 %v743
        %v832 = vunpack.c.l.b16 %v744
        %v833 = vunpack.c.h.b16 %v744
        %v834 = vunpack.c.l.b16 %v745
        %v835 = vunpack.c.l.b16 %v746
        %v836 = vunpack.c.h.b16 %v746
        %v837 = vunpack.c.l.b16 %v747
        %v838 = vunpack.c.l.b16 %v748
        %v839 = vunpack.c.h.b16 %v748
        %v840 = vunpack.c.l.b16 %v749
        %v841 = vunpack.c.l.b16 %v750
        %v842 = vunpack.c.h.b16 %v750
        %v843 = vunpack.c.l.b16 %v751
        %v844 = vunpack.c.l.b16 %v752
        %v845 = vunpack.c.h.b16 %v752
        %v846 = vunpack.c.l.b16 %v753
        %v847 = vunpack.c.l.b16 %v754
        %v848 = vunpack.c.h.b16 %v754
        %v849 = vunpack.c.l.b16 %v755
        %v850 = vunpack.c.l.b16 %v756
        %v851 = vunpack.c.h.b16 %v756
        %v852 = vunpack.c.l.b16 %v757
        %v853 = vunpack.c.l.b16 %v758
        %v854 = vunpack.c.h.b16 %v758
        %v855 = vunpack.c.l.b16 %v759
        %v856 = vunpack.c.l.b16 %v760
        %v857 = vunpack.c.h.b16 %v760
        %v858 = vunpack.c.l.b16 %v761
        %v859 = vpack.c.b16 %v814, %v811
        %v860 = vpack.c.b16 %v815, %v812
        %v861 = vpack.c.b16 %v816, %v813
        %v862 = vpack.c.b16 %v820, %v817
        %v863 = vpack.c.b16 %v821, %v818
        %v864 = vpack.c.b16 %v822, %v819
        %v865 = vpack.c.b16 %v826, %v823
        %v866 = vpack.c.b16 %v827, %v824
        %v867 = vpack.c.b16 %v828, %v825
        %v868 = vpack.c.b16 %v832, %v829
        %v869 = vpack.c.b16 %v833, %v830
        %v870 = vpack.c.b16 %v834, %v831
        %v871 = vpack.c.b16 %v838, %v835
        %v872 = vpack.c.b16 %v839, %v836
        %v873 = vpack.c.b16 %v840, %v837
        %v874 = vpack.c.b16 %v844, %v841
        %v875 = vpack.c.b16 %v845, %v842
        %v876 = vpack.c.b16 %v846, %v843
        %v877 = vpack.c.b16 %v850, %v847
        %v878 = vpack.c.b16 %v851, %v848
        %v879 = vpack.c.b16 %v852, %v849
        %v880 = vpack.c.b16 %v856, %v853
        %v881 = vpack.c.b16 %v857, %v854
        %v882 = vpack.c.b16 %v858, %v855
        %907 = vmatprep.subr.bf16.mxu0 %v881
        %908 = vmatpush1.bf16.msra.mxu0 %v880
        %909 = vmatprep.subr.bf16.mxu0 %v878
        %910 = vmatpush1.bf16.msra.mxu0 %v877
        %911 = vmatprep.subr.bf16.mxu0 %v875
        %912 = vmatpush1.bf16.msra.mxu0 %v874
        %913 = vmatprep.subr.bf16.mxu0 %v872
        %914 = vmatpush1.bf16.msra.mxu0 %v871
        %915 = vmatprep.subr.bf16.mxu0 %v869
        %916 = vmatpush1.bf16.msra.mxu0 %v868
        %917 = vmatprep.subr.bf16.mxu0 %v866
        %918 = vmatpush1.bf16.msra.mxu0 %v865
        %919 = vmatprep.subr.bf16.mxu0 %v863
        %920 = vmatpush1.bf16.msra.mxu0 %v862
        %921 = vmatprep.subr.bf16.mxu0 %v860
        %922 = vmatpush1.bf16.msra.mxu0 %v859
        %923 = vmatprep.subr.bf16.mxu0 0
        %924 = vmatpush2.bf16.msra.mxu0 0
        %925 = vmatprep.subr.bf16.mxu0 0
        %926 = vmatpush2.bf16.msra.mxu0 0
        %927 = vmatprep.subr.bf16.mxu0 0
        %928 = vmatpush2.bf16.msra.mxu0 0
        %929 = vmatprep.subr.bf16.mxu0 0
        %930 = vmatpush2.bf16.msra.mxu0 0
        %931 = vmatprep.subr.bf16.mxu0 0
        %932 = vmatpush2.bf16.msra.mxu0 0
        %933 = vmatprep.subr.bf16.mxu0 0
        %934 = vmatpush2.bf16.msra.mxu0 0
        %935 = vmatprep.subr.bf16.mxu0 0
        %936 = vmatpush2.bf16.msra.mxu0 0
        %937 = vmatprep.subr.bf16.mxu0 0
        %938 = vmatpush2.bf16.msra.mxu0 0
        %939 = vmatprep.mubr.bf16.mxu0 0
        %940 = vmatmul.mubr.bf16.gmra.mxu0 %v728
        %v941 = vpop.f32.mrf.mxu0
        %v942 = vadd.f32 %v767, %v941
        %v943 = vpop.f32.mrf.mxu0
        %v944 = vadd.f32 %v771, %v943
        %v945 = vpop.f32.mrf.mxu0
        %v946 = vadd.f32 %v767, %v945
        %v947 = vpop.f32.mrf.mxu0
        %v948 = vadd.f32 %v771, %v947
        %949 = vmatprep.mubr.bf16.mxu0 0
        %950 = vmatmul.mubr.bf16.gmra.mxu0 %v729
        %v951 = vpop.f32.mrf.mxu0
        %v952 = vadd.f32 %v767, %v951
        %v953 = vpop.f32.mrf.mxu0
        %v954 = vadd.f32 %v771, %v953
        %v955 = vpop.f32.mrf.mxu0
        %v956 = vadd.f32 %v767, %v955
        %v957 = vpop.f32.mrf.mxu0
        %v958 = vadd.f32 %v771, %v957
        %959 = vdwg.mxu0
        %960 = vmatprep.subr.bf16.mxu0 0
        %961 = vmatpush1.bf16.msra.mxu0 %v882
        %962 = vmatprep.subr.bf16.mxu0 0
        %963 = vmatpush1.bf16.msra.mxu0 %v879
        %964 = vmatprep.subr.bf16.mxu0 0
        %965 = vmatpush1.bf16.msra.mxu0 %v876
        %966 = vmatprep.subr.bf16.mxu0 0
        %967 = vmatpush1.bf16.msra.mxu0 %v873
        %968 = vmatprep.subr.bf16.mxu0 0
        %969 = vmatpush1.bf16.msra.mxu0 %v870
        %970 = vmatprep.subr.bf16.mxu0 0
        %971 = vmatpush1.bf16.msra.mxu0 %v867
        %972 = vmatprep.subr.bf16.mxu0 0
        %973 = vmatpush1.bf16.msra.mxu0 %v864
        %974 = vmatprep.subr.bf16.mxu0 0
        %975 = vmatpush1.bf16.msra.mxu0 %v861
        %976 = vmatprep.subr.bf16.mxu0 0
        %977 = vmatpush2.bf16.msra.mxu0 0
        %978 = vmatprep.subr.bf16.mxu0 0
        %979 = vmatpush2.bf16.msra.mxu0 0
        %980 = vmatprep.subr.bf16.mxu0 0
        %981 = vmatpush2.bf16.msra.mxu0 0
        %982 = vmatprep.subr.bf16.mxu0 0
        %983 = vmatpush2.bf16.msra.mxu0 0
        %984 = vmatprep.subr.bf16.mxu0 0
        %985 = vmatpush2.bf16.msra.mxu0 0
        %986 = vmatprep.subr.bf16.mxu0 0
        %987 = vmatpush2.bf16.msra.mxu0 0
        %988 = vmatprep.subr.bf16.mxu0 0
        %989 = vmatpush2.bf16.msra.mxu0 0
        %990 = vmatprep.subr.bf16.mxu0 0
        %991 = vmatpush2.bf16.msra.mxu0 0
        %992 = vmatprep.mubr.bf16.mxu0 0
        %993 = vmatmul.mubr.bf16.gmra.mxu0 %v728
        %v994 = vpop.f32.mrf.mxu0
        %v995 = vadd.f32 %v775, %v994
        %v996 = vpop.f32.mrf.mxu0
        %v997 = vpop.f32.mrf.mxu0
        %v998 = vadd.f32 %v775, %v997
        %v999 = vpop.f32.mrf.mxu0
        %1000 = vmatprep.mubr.bf16.mxu0 0
        %1001 = vmatmul.mubr.bf16.gmra.mxu0 %v729
        %v1002 = vpop.f32.mrf.mxu0
        %v1003 = vadd.f32 %v775, %v1002
        %v1004 = vpop.f32.mrf.mxu0
        %v1005 = vpop.f32.mrf.mxu0
        %v1006 = vadd.f32 %v775, %v1005
        %v1007 = vpop.f32.mrf.mxu0
        %1008 = vdwg.mxu0
        %1009 = vst [vmem:[#allocation5] sm:$0xff] %v942
        %1010 = vst [vmem:[#allocation5 + $0x8] sm:$0xff] %v944
        %1011 = vst [vmem:[#allocation5 + $0x10] sm:$0xff] %v995
        %1012 = vst [vmem:[#allocation5 + $0x18] sm:$0xff] %v946
        %1013 = vst [vmem:[#allocation5 + $0x20] sm:$0xff] %v948
        %1014 = vst [vmem:[#allocation5 + $0x28] sm:$0xff] %v998
        %1015 = vst [vmem:[#allocation5 + $0x30] sm:$0xff] %v952
        %1016 = vst [vmem:[#allocation5 + $0x38] sm:$0xff] %v954
        %1017 = vst [vmem:[#allocation5 + $0x40] sm:$0xff] %v1003
        %1018 = vst [vmem:[#allocation5 + $0x48] sm:$0xff] %v956
        %1019 = vst [vmem:[#allocation5 + $0x50] sm:$0xff] %v958
        %1020 = vst [vmem:[#allocation5 + $0x58] sm:$0xff] %v1006
        %v1021 = vld [vmem:[#allocation8] sm:$0xff]
        %v1022 = vld [vmem:[#allocation8 + $0x8] sm:$0xf]
        %v1023 = vld [vmem:[#allocation8 + $0xc] sm:$0xff]
        %v1024 = vld [vmem:[#allocation8 + $0x14] sm:$0xf]
        %v1025 = vld [vmem:[#allocation8 + $0x18] sm:$0xff]
        %v1026 = vld [vmem:[#allocation8 + $0x20] sm:$0xf]
        %v1027 = vld [vmem:[#allocation8 + $0x24] sm:$0xff]
        %v1028 = vld [vmem:[#allocation8 + $0x2c] sm:$0xf]
        %v1029 = vld [vmem:[#allocation8 + $0x30] sm:$0xff]
        %v1030 = vld [vmem:[#allocation8 + $0x38] sm:$0xf]
        %v1031 = vld [vmem:[#allocation8 + $0x3c] sm:$0xff]
        %v1032 = vld [vmem:[#allocation8 + $0x44] sm:$0xf]
        %v1033 = vld [vmem:[#allocation8 + $0x48] sm:$0xff]
        %v1034 = vld [vmem:[#allocation8 + $0x50] sm:$0xf]
        %v1035 = vld [vmem:[#allocation8 + $0x54] sm:$0xff]
        %v1036 = vld [vmem:[#allocation8 + $0x5c] sm:$0xf]
        %v1037 = vld [vmem:[#allocation8 + $0x60] sm:$0xff]
        %v1038 = vld [vmem:[#allocation8 + $0x68] sm:$0xf]
        %v1039 = vld [vmem:[#allocation8 + $0x6c] sm:$0xff]
        %v1040 = vld [vmem:[#allocation8 + $0x74] sm:$0xf]
        %v1041 = vld [vmem:[#allocation8 + $0x78] sm:$0xff]
        %v1042 = vld [vmem:[#allocation8 + $0x80] sm:$0xf]
        %v1043 = vld [vmem:[#allocation8 + $0x84] sm:$0xff]
        %v1044 = vld [vmem:[#allocation8 + $0x8c] sm:$0xf]
        %v1045 = vld [vmem:[#allocation8 + $0x90] sm:$0xff]
        %v1046 = vld [vmem:[#allocation8 + $0x98] sm:$0xf]
        %v1047 = vld [vmem:[#allocation8 + $0x9c] sm:$0xff]
        %v1048 = vld [vmem:[#allocation8 + $0xa4] sm:$0xf]
        %v1049 = vld [vmem:[#allocation8 + $0xa8] sm:$0xff]
        %v1050 = vld [vmem:[#allocation8 + $0xb0] sm:$0xf]
        %v1051 = vld [vmem:[#allocation8 + $0xb4] sm:$0xff]
        %v1052 = vld [vmem:[#allocation8 + $0xbc] sm:$0xf]
        %v1053 = vld [vmem:[%s8] sm:$0xff]
        %v1054 = vld [vmem:[%s8 + $0x8] sm:$0xf]
        %v1055 = vld [vmem:[%s8 + $0xc] sm:$0xff]
        %v1056 = vld [vmem:[%s8 + $0x14] sm:$0xf]
        %v1057 = vld [vmem:[%s8 + $0x18] sm:$0xff]
        %v1058 = vld [vmem:[%s8 + $0x20] sm:$0xf]
        %v1059 = vld [vmem:[%s8 + $0x24] sm:$0xff]
        %v1060 = vld [vmem:[%s8 + $0x2c] sm:$0xf]
        %v1061 = vld [vmem:[%s8 + $0x30] sm:$0xff]
        %v1062 = vld [vmem:[%s8 + $0x38] sm:$0xf]
        %v1063 = vld [vmem:[%s8 + $0x3c] sm:$0xff]
        %v1064 = vld [vmem:[%s8 + $0x44] sm:$0xf]
        %v1065 = vld [vmem:[%s8 + $0x48] sm:$0xff]
        %v1066 = vld [vmem:[%s8 + $0x50] sm:$0xf]
        %v1067 = vld [vmem:[%s8 + $0x54] sm:$0xff]
        %v1068 = vld [vmem:[%s8 + $0x5c] sm:$0xf]
        %v1069 = vld [vmem:[%s8 + $0x60] sm:$0xff]
        %v1070 = vld [vmem:[%s8 + $0x68] sm:$0xf]
        %v1071 = vld [vmem:[%s8 + $0x6c] sm:$0xff]
        %v1072 = vld [vmem:[%s8 + $0x74] sm:$0xf]
        %v1073 = vld [vmem:[%s8 + $0x78] sm:$0xff]
        %v1074 = vld [vmem:[%s8 + $0x80] sm:$0xf]
        %v1075 = vld [vmem:[%s8 + $0x84] sm:$0xff]
        %v1076 = vld [vmem:[%s8 + $0x8c] sm:$0xf]
        %v1077 = vld [vmem:[%s8 + $0x90] sm:$0xff]
        %v1078 = vld [vmem:[%s8 + $0x98] sm:$0xf]
        %v1079 = vld [vmem:[%s8 + $0x9c] sm:$0xff]
        %v1080 = vld [vmem:[%s8 + $0xa4] sm:$0xf]
        %v1081 = vld [vmem:[%s8 + $0xa8] sm:$0xff]
        %v1082 = vld [vmem:[%s8 + $0xb0] sm:$0xf]
        %v1083 = vld [vmem:[%s8 + $0xb4] sm:$0xff]
        %v1084 = vld [vmem:[%s8 + $0xbc] sm:$0xf]
        %v1085 = vld [vmem:[%s5] sm:$0x1]
        %v1086 = vld [vmem:[%s9] sm:$0x1]
        %v1087 = vld [vmem:[#allocation2] sm:$0xff]
        %v1088 = vld [vmem:[#allocation3] sm:$0xff]
        loop: start=0, step=1, limit=4
        $region77: #{_lambda_.5} parent=59 // loop_pre_header
          _
        $region78: #{_lambda_.5} parent=59 // loop_header
          %s1090 = sphi 0, %s1094
          %p1091 = scmp.ge.s32.totalorder %s1090, 4
          %v1095 = vphi %v1087, %v1353
          %v1096 = vphi %v1088, %v1591
        $region79: #{_lambda_.5} parent=59 // loop_header_branch
          %1093 = sbr.rel (%p1091) target = $region83
        $region80: #{_lambda_.5} parent=59 // loop_body
          %s1097 = smul.u32 %s1090, 8
          %s1098 = sshra.s32 %s1097, 3
          %s1099 = sand.u32 %s1097, 7
          %s1100 = smul.u32 %s1098, 3
          %s1101 = smul.addr %s1100, 8
          %s1102 = scalar_lea.vmem [#allocation4], %s1101
          %v1103 = vld [vmem:[%s1102] sm:$0xff]
          %v1104 = vld [vmem:[%s1102 + $0x8] sm:$0xff]
          %v1105 = vld [vmem:[%s1102 + $0x10] sm:$0xff]
          %s1106 = ssub.s32 3, %s1090
          %s1107 = smul.u32 %s1106, 8
          %s1108 = sshra.s32 %s1107, 3
          %s1109 = sand.u32 %s1107, 7
          %s1110 = smul.u32 %s1108, 3
          %s1111 = smul.addr %s1110, 8
          %s1112 = scalar_lea.vmem [#allocation5], %s1111
          %v1113 = vld [vmem:[%s1112] sm:$0xff]
          %v1114 = vld [vmem:[%s1112 + $0x8] sm:$0xff]
          %v1115 = vld [vmem:[%s1112 + $0x10] sm:$0xff]
          %v1116 = vpack.c.bf16 %v1095, %v1095
          %v1149 = vunpack.c.l.b16 %v1021
          %v1150 = vunpack.c.h.b16 %v1021
          %v1151 = vunpack.c.l.b16 %v1022
          %v1152 = vunpack.c.l.b16 %v1023
          %v1153 = vunpack.c.h.b16 %v1023
          %v1154 = vunpack.c.l.b16 %v1024
          %v1155 = vunpack.c.l.b16 %v1025
          %v1156 = vunpack.c.h.b16 %v1025
          %v1157 = vunpack.c.l.b16 %v1026
          %v1158 = vunpack.c.l.b16 %v1027
          %v1159 = vunpack.c.h.b16 %v1027
          %v1160 = vunpack.c.l.b16 %v1028
          %v1161 = vunpack.c.l.b16 %v1029
          %v1162 = vunpack.c.h.b16 %v1029
          %v1163 = vunpack.c.l.b16 %v1030
          %v1164 = vunpack.c.l.b16 %v1031
          %v1165 = vunpack.c.h.b16 %v1031
          %v1166 = vunpack.c.l.b16 %v1032
          %v1167 = vunpack.c.l.b16 %v1033
          %v1168 = vunpack.c.h.b16 %v1033
          %v1169 = vunpack.c.l.b16 %v1034
          %v1170 = vunpack.c.l.b16 %v1035
          %v1171 = vunpack.c.h.b16 %v1035
          %v1172 = vunpack.c.l.b16 %v1036
          %v1173 = vunpack.c.l.b16 %v1037
          %v1174 = vunpack.c.h.b16 %v1037
          %v1175 = vunpack.c.l.b16 %v1038
          %v1176 = vunpack.c.l.b16 %v1039
          %v1177 = vunpack.c.h.b16 %v1039
          %v1178 = vunpack.c.l.b16 %v1040
          %v1179 = vunpack.c.l.b16 %v1041
          %v1180 = vunpack.c.h.b16 %v1041
          %v1181 = vunpack.c.l.b16 %v1042
          %v1182 = vunpack.c.l.b16 %v1043
          %v1183 = vunpack.c.h.b16 %v1043
          %v1184 = vunpack.c.l.b16 %v1044
          %v1185 = vunpack.c.l.b16 %v1045
          %v1186 = vunpack.c.h.b16 %v1045
          %v1187 = vunpack.c.l.b16 %v1046
          %v1188 = vunpack.c.l.b16 %v1047
          %v1189 = vunpack.c.h.b16 %v1047
          %v1190 = vunpack.c.l.b16 %v1048
          %v1191 = vunpack.c.l.b16 %v1049
          %v1192 = vunpack.c.h.b16 %v1049
          %v1193 = vunpack.c.l.b16 %v1050
          %v1194 = vunpack.c.l.b16 %v1051
          %v1195 = vunpack.c.h.b16 %v1051
          %v1196 = vunpack.c.l.b16 %v1052
          %v1197 = vpack.c.b16 %v1152, %v1149
          %v1198 = vpack.c.b16 %v1153, %v1150
          %v1199 = vpack.c.b16 %v1154, %v1151
          %v1200 = vpack.c.b16 %v1158, %v1155
          %v1201 = vpack.c.b16 %v1159, %v1156
          %v1202 = vpack.c.b16 %v1160, %v1157
          %v1203 = vpack.c.b16 %v1164, %v1161
          %v1204 = vpack.c.b16 %v1165, %v1162
          %v1205 = vpack.c.b16 %v1166, %v1163
          %v1206 = vpack.c.b16 %v1170, %v1167
          %v1207 = vpack.c.b16 %v1171, %v1168
          %v1208 = vpack.c.b16 %v1172, %v1169
          %v1209 = vpack.c.b16 %v1176, %v1173
          %v1210 = vpack.c.b16 %v1177, %v1174
          %v1211 = vpack.c.b16 %v1178, %v1175
          %v1212 = vpack.c.b16 %v1182, %v1179
          %v1213 = vpack.c.b16 %v1183, %v1180
          %v1214 = vpack.c.b16 %v1184, %v1181
          %v1215 = vpack.c.b16 %v1188, %v1185
          %v1216 = vpack.c.b16 %v1189, %v1186
          %v1217 = vpack.c.b16 %v1190, %v1187
          %v1218 = vpack.c.b16 %v1194, %v1191
          %v1219 = vpack.c.b16 %v1195, %v1192
          %v1220 = vpack.c.b16 %v1196, %v1193
          %1245 = vmatprep.subr.bf16.mxu0 %v1219
          %1246 = vmatpush1.bf16.msra.mxu0 %v1218
          %1247 = vmatprep.subr.bf16.mxu0 %v1216
          %1248 = vmatpush1.bf16.msra.mxu0 %v1215
          %1249 = vmatprep.subr.bf16.mxu0 %v1213
          %1250 = vmatpush1.bf16.msra.mxu0 %v1212
          %1251 = vmatprep.subr.bf16.mxu0 %v1210
          %1252 = vmatpush1.bf16.msra.mxu0 %v1209
          %1253 = vmatprep.subr.bf16.mxu0 %v1207
          %1254 = vmatpush1.bf16.msra.mxu0 %v1206
          %1255 = vmatprep.subr.bf16.mxu0 %v1204
          %1256 = vmatpush1.bf16.msra.mxu0 %v1203
          %1257 = vmatprep.subr.bf16.mxu0 %v1201
          %1258 = vmatpush1.bf16.msra.mxu0 %v1200
          %1259 = vmatprep.subr.bf16.mxu0 %v1198
          %1260 = vmatpush1.bf16.msra.mxu0 %v1197
          %1261 = vmatprep.subr.bf16.mxu0 0
          %1262 = vmatpush2.bf16.msra.mxu0 0
          %1263 = vmatprep.subr.bf16.mxu0 0
          %1264 = vmatpush2.bf16.msra.mxu0 0
          %1265 = vmatprep.subr.bf16.mxu0 0
          %1266 = vmatpush2.bf16.msra.mxu0 0
          %1267 = vmatprep.subr.bf16.mxu0 0
          %1268 = vmatpush2.bf16.msra.mxu0 0
          %1269 = vmatprep.subr.bf16.mxu0 0
          %1270 = vmatpush2.bf16.msra.mxu0 0
          %1271 = vmatprep.subr.bf16.mxu0 0
          %1272 = vmatpush2.bf16.msra.mxu0 0
          %1273 = vmatprep.subr.bf16.mxu0 0
          %1274 = vmatpush2.bf16.msra.mxu0 0
          %1275 = vmatprep.subr.bf16.mxu0 0
          %1276 = vmatpush2.bf16.msra.mxu0 0
          %1277 = vmatprep.mubr.bf16.mxu0 0
          %1278 = vmatmul.mubr.bf16.gmra.mxu0 %v1116
          %v1279 = vpop.f32.mrf.mxu0
          %v1280 = vadd.f32 0.0, %v1279
          %v1281 = vpop.f32.mrf.mxu0
          %v1282 = vadd.f32 0.0, %v1281
          %v1283 = vpop.f32.mrf.mxu0
          %v1284 = vpop.f32.mrf.mxu0
          %1285 = vdwg.mxu0
          %1286 = vmatprep.subr.bf16.mxu0 0
          %1287 = vmatpush1.bf16.msra.mxu0 %v1220
          %1288 = vmatprep.subr.bf16.mxu0 0
          %1289 = vmatpush1.bf16.msra.mxu0 %v1217
          %1290 = vmatprep.subr.bf16.mxu0 0
          %1291 = vmatpush1.bf16.msra.mxu0 %v1214
          %1292 = vmatprep.subr.bf16.mxu0 0
          %1293 = vmatpush1.bf16.msra.mxu0 %v1211
          %1294 = vmatprep.subr.bf16.mxu0 0
          %1295 = vmatpush1.bf16.msra.mxu0 %v1208
          %1296 = vmatprep.subr.bf16.mxu0 0
          %1297 = vmatpush1.bf16.msra.mxu0 %v1205
          %1298 = vmatprep.subr.bf16.mxu0 0
          %1299 = vmatpush1.bf16.msra.mxu0 %v1202
          %1300 = vmatprep.subr.bf16.mxu0 0
          %1301 = vmatpush1.bf16.msra.mxu0 %v1199
          %1302 = vmatprep.subr.bf16.mxu0 0
          %1303 = vmatpush2.bf16.msra.mxu0 0
          %1304 = vmatprep.subr.bf16.mxu0 0
          %1305 = vmatpush2.bf16.msra.mxu0 0
          %1306 = vmatprep.subr.bf16.mxu0 0
          %1307 = vmatpush2.bf16.msra.mxu0 0
          %1308 = vmatprep.subr.bf16.mxu0 0
          %1309 = vmatpush2.bf16.msra.mxu0 0
          %1310 = vmatprep.subr.bf16.mxu0 0
          %1311 = vmatpush2.bf16.msra.mxu0 0
          %1312 = vmatprep.subr.bf16.mxu0 0
          %1313 = vmatpush2.bf16.msra.mxu0 0
          %1314 = vmatprep.subr.bf16.mxu0 0
          %1315 = vmatpush2.bf16.msra.mxu0 0
          %1316 = vmatprep.subr.bf16.mxu0 0
          %1317 = vmatpush2.bf16.msra.mxu0 0
          %1318 = vmatprep.mubr.bf16.mxu0 0
          %1319 = vmatmul.mubr.bf16.gmra.mxu0 %v1116
          %v1320 = vpop.f32.mrf.mxu0
          %v1321 = vadd.f32 0.0, %v1320
          %v1322 = vpop.f32.mrf.mxu0
          %v1323 = vpop.f32.mrf.mxu0
          %v1324 = vpop.f32.mrf.mxu0
          %1325 = vdwg.mxu0
          %v1326 = vadd.f32 %v1103, %v1280
          %v1327 = vxor.u32 %v1326, 2147483648
          %v1328 = vmul.f32 %v1327, 1.442695
          %v1329 = vpow.pop %v1328
          %v1330 = vadd.f32 %v1329, 1.0
          %v1331 = vrcp.pop %v1330
          %v1332 = vmul.f32 1.0, %v1331
          %v1333 = vadd.f32 %v1104, %v1282
          %v1334 = vxor.u32 %v1333, 2147483648
          %v1335 = vmul.f32 %v1334, 1.442695
          %v1336 = vpow.pop %v1335
          %v1337 = vadd.f32 %v1336, 1.0
          %v1338 = vrcp.pop %v1337
          %v1339 = vmul.f32 1.0, %v1338
          %v1341 = vlaneseq
          %v1342 = vshrl.u32 %v1341, 7
          %v1343 = vsub.s32 0, %v1342
          %v1344 = vrot.slane %v1085, %v1343
          %v1346 = vadd.f32 %v1321, %v1344
          %v1347 = vmul.f32 %v1332, %v1346
          %v1348 = vadd.f32 %v1105, %v1347
          %v1349 = vtanh.pop %v1348
          %v1350 = vsub.f32 1.0, %v1339
          %v1351 = vmul.f32 %v1350, %v1349
          %v1352 = vmul.f32 %v1339, %v1095
          %v1353 = vadd.f32 %v1351, %v1352
          %v1354 = vpack.c.bf16 %v1096, %v1096
          %v1387 = vunpack.c.l.b16 %v1053
          %v1388 = vunpack.c.h.b16 %v1053
          %v1389 = vunpack.c.l.b16 %v1054
          %v1390 = vunpack.c.l.b16 %v1055
          %v1391 = vunpack.c.h.b16 %v1055
          %v1392 = vunpack.c.l.b16 %v1056
          %v1393 = vunpack.c.l.b16 %v1057
          %v1394 = vunpack.c.h.b16 %v1057
          %v1395 = vunpack.c.l.b16 %v1058
          %v1396 = vunpack.c.l.b16 %v1059
          %v1397 = vunpack.c.h.b16 %v1059
          %v1398 = vunpack.c.l.b16 %v1060
          %v1399 = vunpack.c.l.b16 %v1061
          %v1400 = vunpack.c.h.b16 %v1061
          %v1401 = vunpack.c.l.b16 %v1062
          %v1402 = vunpack.c.l.b16 %v1063
          %v1403 = vunpack.c.h.b16 %v1063
          %v1404 = vunpack.c.l.b16 %v1064
          %v1405 = vunpack.c.l.b16 %v1065
          %v1406 = vunpack.c.h.b16 %v1065
          %v1407 = vunpack.c.l.b16 %v1066
          %v1408 = vunpack.c.l.b16 %v1067
          %v1409 = vunpack.c.h.b16 %v1067
          %v1410 = vunpack.c.l.b16 %v1068
          %v1411 = vunpack.c.l.b16 %v1069
          %v1412 = vunpack.c.h.b16 %v1069
          %v1413 = vunpack.c.l.b16 %v1070
          %v1414 = vunpack.c.l.b16 %v1071
          %v1415 = vunpack.c.h.b16 %v1071
          %v1416 = vunpack.c.l.b16 %v1072
          %v1417 = vunpack.c.l.b16 %v1073
          %v1418 = vunpack.c.h.b16 %v1073
          %v1419 = vunpack.c.l.b16 %v1074
          %v1420 = vunpack.c.l.b16 %v1075
          %v1421 = vunpack.c.h.b16 %v1075
          %v1422 = vunpack.c.l.b16 %v1076
          %v1423 = vunpack.c.l.b16 %v1077
          %v1424 = vunpack.c.h.b16 %v1077
          %v1425 = vunpack.c.l.b16 %v1078
          %v1426 = vunpack.c.l.b16 %v1079
          %v1427 = vunpack.c.h.b16 %v1079
          %v1428 = vunpack.c.l.b16 %v1080
          %v1429 = vunpack.c.l.b16 %v1081
          %v1430 = vunpack.c.h.b16 %v1081
          %v1431 = vunpack.c.l.b16 %v1082
          %v1432 = vunpack.c.l.b16 %v1083
          %v1433 = vunpack.c.h.b16 %v1083
          %v1434 = vunpack.c.l.b16 %v1084
          %v1435 = vpack.c.b16 %v1390, %v1387
          %v1436 = vpack.c.b16 %v1391, %v1388
          %v1437 = vpack.c.b16 %v1392, %v1389
          %v1438 = vpack.c.b16 %v1396, %v1393
          %v1439 = vpack.c.b16 %v1397, %v1394
          %v1440 = vpack.c.b16 %v1398, %v1395
          %v1441 = vpack.c.b16 %v1402, %v1399
          %v1442 = vpack.c.b16 %v1403, %v1400
          %v1443 = vpack.c.b16 %v1404, %v1401
          %v1444 = vpack.c.b16 %v1408, %v1405
          %v1445 = vpack.c.b16 %v1409, %v1406
          %v1446 = vpack.c.b16 %v1410, %v1407
          %v1447 = vpack.c.b16 %v1414, %v1411
          %v1448 = vpack.c.b16 %v1415, %v1412
          %v1449 = vpack.c.b16 %v1416, %v1413
          %v1450 = vpack.c.b16 %v1420, %v1417
          %v1451 = vpack.c.b16 %v1421, %v1418
          %v1452 = vpack.c.b16 %v1422, %v1419
          %v1453 = vpack.c.b16 %v1426, %v1423
          %v1454 = vpack.c.b16 %v1427, %v1424
          %v1455 = vpack.c.b16 %v1428, %v1425
          %v1456 = vpack.c.b16 %v1432, %v1429
          %v1457 = vpack.c.b16 %v1433, %v1430
          %v1458 = vpack.c.b16 %v1434, %v1431
          %1483 = vmatprep.subr.bf16.mxu0 %v1457
          %1484 = vmatpush1.bf16.msra.mxu0 %v1456
          %1485 = vmatprep.subr.bf16.mxu0 %v1454
          %1486 = vmatpush1.bf16.msra.mxu0 %v1453
          %1487 = vmatprep.subr.bf16.mxu0 %v1451
          %1488 = vmatpush1.bf16.msra.mxu0 %v1450
          %1489 = vmatprep.subr.bf16.mxu0 %v1448
          %1490 = vmatpush1.bf16.msra.mxu0 %v1447
          %1491 = vmatprep.subr.bf16.mxu0 %v1445
          %1492 = vmatpush1.bf16.msra.mxu0 %v1444
          %1493 = vmatprep.subr.bf16.mxu0 %v1442
          %1494 = vmatpush1.bf16.msra.mxu0 %v1441
          %1495 = vmatprep.subr.bf16.mxu0 %v1439
          %1496 = vmatpush1.bf16.msra.mxu0 %v1438
          %1497 = vmatprep.subr.bf16.mxu0 %v1436
          %1498 = vmatpush1.bf16.msra.mxu0 %v1435
          %1499 = vmatprep.subr.bf16.mxu0 0
          %1500 = vmatpush2.bf16.msra.mxu0 0
          %1501 = vmatprep.subr.bf16.mxu0 0
          %1502 = vmatpush2.bf16.msra.mxu0 0
          %1503 = vmatprep.subr.bf16.mxu0 0
          %1504 = vmatpush2.bf16.msra.mxu0 0
          %1505 = vmatprep.subr.bf16.mxu0 0
          %1506 = vmatpush2.bf16.msra.mxu0 0
          %1507 = vmatprep.subr.bf16.mxu0 0
          %1508 = vmatpush2.bf16.msra.mxu0 0
          %1509 = vmatprep.subr.bf16.mxu0 0
          %1510 = vmatpush2.bf16.msra.mxu0 0
          %1511 = vmatprep.subr.bf16.mxu0 0
          %1512 = vmatpush2.bf16.msra.mxu0 0
          %1513 = vmatprep.subr.bf16.mxu0 0
          %1514 = vmatpush2.bf16.msra.mxu0 0
          %1515 = vmatprep.mubr.bf16.mxu0 0
          %1516 = vmatmul.mubr.bf16.gmra.mxu0 %v1354
          %v1517 = vpop.f32.mrf.mxu0
          %v1518 = vadd.f32 0.0, %v1517
          %v1519 = vpop.f32.mrf.mxu0
          %v1520 = vadd.f32 0.0, %v1519
          %v1521 = vpop.f32.mrf.mxu0
          %v1522 = vpop.f32.mrf.mxu0
          %1523 = vdwg.mxu0
          %1524 = vmatprep.subr.bf16.mxu0 0
          %1525 = vmatpush1.bf16.msra.mxu0 %v1458
          %1526 = vmatprep.subr.bf16.mxu0 0
          %1527 = vmatpush1.bf16.msra.mxu0 %v1455
          %1528 = vmatprep.subr.bf16.mxu0 0
          %1529 = vmatpush1.bf16.msra.mxu0 %v1452
          %1530 = vmatprep.subr.bf16.mxu0 0
          %1531 = vmatpush1.bf16.msra.mxu0 %v1449
          %1532 = vmatprep.subr.bf16.mxu0 0
          %1533 = vmatpush1.bf16.msra.mxu0 %v1446
          %1534 = vmatprep.subr.bf16.mxu0 0
          %1535 = vmatpush1.bf16.msra.mxu0 %v1443
          %1536 = vmatprep.subr.bf16.mxu0 0
          %1537 = vmatpush1.bf16.msra.mxu0 %v1440
          %1538 = vmatprep.subr.bf16.mxu0 0
          %1539 = vmatpush1.bf16.msra.mxu0 %v1437
          %1540 = vmatprep.subr.bf16.mxu0 0
          %1541 = vmatpush2.bf16.msra.mxu0 0
          %1542 = vmatprep.subr.bf16.mxu0 0
          %1543 = vmatpush2.bf16.msra.mxu0 0
          %1544 = vmatprep.subr.bf16.mxu0 0
          %1545 = vmatpush2.bf16.msra.mxu0 0
          %1546 = vmatprep.subr.bf16.mxu0 0
          %1547 = vmatpush2.bf16.msra.mxu0 0
          %1548 = vmatprep.subr.bf16.mxu0 0
          %1549 = vmatpush2.bf16.msra.mxu0 0
          %1550 = vmatprep.subr.bf16.mxu0 0
          %1551 = vmatpush2.bf16.msra.mxu0 0
          %1552 = vmatprep.subr.bf16.mxu0 0
          %1553 = vmatpush2.bf16.msra.mxu0 0
          %1554 = vmatprep.subr.bf16.mxu0 0
          %1555 = vmatpush2.bf16.msra.mxu0 0
          %1556 = vmatprep.mubr.bf16.mxu0 0
          %1557 = vmatmul.mubr.bf16.gmra.mxu0 %v1354
          %v1558 = vpop.f32.mrf.mxu0
          %v1559 = vadd.f32 0.0, %v1558
          %v1560 = vpop.f32.mrf.mxu0
          %v1561 = vpop.f32.mrf.mxu0
          %v1562 = vpop.f32.mrf.mxu0
          %1563 = vdwg.mxu0
          %v1564 = vadd.f32 %v1113, %v1518
          %v1565 = vxor.u32 %v1564, 2147483648
          %v1566 = vmul.f32 %v1565, 1.442695
          %v1567 = vpow.pop %v1566
          %v1568 = vadd.f32 %v1567, 1.0
          %v1569 = vrcp.pop %v1568
          %v1570 = vmul.f32 1.0, %v1569
          %v1571 = vadd.f32 %v1114, %v1520
          %v1572 = vxor.u32 %v1571, 2147483648
          %v1573 = vmul.f32 %v1572, 1.442695
          %v1574 = vpow.pop %v1573
          %v1575 = vadd.f32 %v1574, 1.0
          %v1576 = vrcp.pop %v1575
          %v1577 = vmul.f32 1.0, %v1576
          %v1579 = vlaneseq
          %v1580 = vshrl.u32 %v1579, 7
          %v1581 = vsub.s32 0, %v1580
          %v1582 = vrot.slane %v1086, %v1581
          %v1584 = vadd.f32 %v1559, %v1582
          %v1585 = vmul.f32 %v1570, %v1584
          %v1586 = vadd.f32 %v1115, %v1585
          %v1587 = vtanh.pop %v1586
          %v1588 = vsub.f32 1.0, %v1577
          %v1589 = vmul.f32 %v1588, %v1587
          %v1590 = vmul.f32 %v1577, %v1096
          %v1591 = vadd.f32 %v1589, %v1590
        $region81: #{_lambda_.5} parent=59 // loop_footer
          %s1094 = sadd.s32 1, %s1090
        $region82: #{_lambda_.5} parent=59 // loop_footer_branch
          %1089 = sbr.rel target = $region78
        $region83: #{_lambda_.5} parent=59 // loop_exit
          _
        %1592 = vst [vmem:[#allocation2] sm:$0xff] %v1095
        %1593 = vst [vmem:[#allocation3] sm:$0xff] %v1096
        %1594 = vst [vmem:[%s10] sm:$0xff] %v1095
        %1595 = vst [vmem:[%s10 + $0x8] sm:$0xff] %v1096
        // Predicated region
        $region84: #{_lambda_.5} parent=59 // pred_check
          %p1596 = pneg %p258
        $region85: #{_lambda_.5} parent=59 // pred_check_branch
          %1598 = sbr.rel (%p1596) target = $region87
        $region86: #{_lambda_.5} parent=59 // pred_region
          _
        $region87: #{_lambda_.5} parent=59 // pred_fallthru
          _
        // Predicated region
        $region88: #{_lambda_.5} parent=59 // pred_check
          %p1599 = pneg %p258
        $region89: #{_lambda_.5} parent=59 // pred_check_branch
          %1601 = sbr.rel (%p1599) target = $region91
        $region90: #{_lambda_.5} parent=59 // pred_region
          _
        $region91: #{_lambda_.5} parent=59 // pred_fallthru
          _
      $region60: #{_lambda_.5} parent=5 // pred_fallthru
        _
      %p1602 = scmp.le.s32.totalorder 2, %s18
      // Predicated region
      $region92: #{_lambda_.5} parent=5 // pred_check
        %p1603 = pneg %p1602
      $region93: #{_lambda_.5} parent=5 // pred_check_branch
        %1605 = sbr.rel (%p1603) target = $region95
      $region94: #{_lambda_.5} parent=5 // pred_region
        %s1606 = ssub.s32 %s18, 2
      $region95: #{_lambda_.5} parent=5 // pred_fallthru
        _
    $region6: #{_lambda_.5} parent=1 // loop_footer
      %s22 = sadd.s32 1, %s18
    $region7: #{_lambda_.5} parent=1 // loop_footer_branch
      %17 = sbr.rel target = $region3
    $region8: #{_lambda_.5} parent=1 // loop_exit
      _
    %1607 = vsyncpa [#allocation7], 1
    %s1608 = scalar_lea.sflag [#allocation7], 1
    %1609 = vsyncpa %s1608, 1
    %1610 = vsyncpa [#allocation9], 1

// kernel: _lambda_.9
$region0: #{_lambda_.9}
  #allocation0 [shape = 'u32[]', space=smem, size = 0x4, offset = 0x4, fixed_abs, tag = 'smem constant byte address 0x4 - core index']
  #allocation1 [shape = 'u32[144,128]{1,0:T(1,128)}', space=vmem, size = 0x12000, scoped, tag = 'internal scratch']
  #allocation2 [shape = 'f32[64,512]{1,0:T(8,128)}', space=vmem, size = 0x20000, scoped, tag = 'scratch operand']
  %s0 = inlined_call_operand.vmem [shape: bf16[64,128], index: 0, kind: input, shape index: {}]
  %s1 = inlined_call_operand.vmem [shape: bf16[128,512], index: 1, kind: input, shape index: {}]
  %s2 = inlined_call_operand.vmem [shape: f32[1,512], index: 2, kind: input, shape index: {}]
  %s3 = inlined_call_operand.vmem [shape: f32[64,512], index: 3, kind: output, shape index: {}]
  %s4 = sld [smem:[#allocation0]]
  $region30: #{_lambda_.9} parent=0
    _
  %s6 = ssub.s32 1, %s4
  %s7 = scalar_select 0, %s6, %s4
  // Predicated region
  $region2: #{_lambda_.9} parent=0 // pred_check
    _
  $region3: #{_lambda_.9} parent=0 // pred_check_branch
    %9 = sbr.rel (0) target = $region5
  $region4: #{_lambda_.9} parent=0 // pred_region
    _
  $region5: #{_lambda_.9} parent=0 // pred_fallthru
    _
  // Predicated region
  $region6: #{_lambda_.9} parent=0 // pred_check
    _
  $region7: #{_lambda_.9} parent=0 // pred_check_branch
    %11 = sbr.rel (0) target = $region9
  $region8: #{_lambda_.9} parent=0 // pred_region
    _
  $region9: #{_lambda_.9} parent=0 // pred_fallthru
    _
  // Predicated region
  $region10: #{_lambda_.9} parent=0 // pred_check
    _
  $region11: #{_lambda_.9} parent=0 // pred_check_branch
    %13 = sbr.rel (0) target = $region13
  $region12: #{_lambda_.9} parent=0 // pred_region
    _
  $region13: #{_lambda_.9} parent=0 // pred_fallthru
    _
  %p15 = scmp.eq.s32.totalorder 0, 0
  // Predicated region
  $region14: #{_lambda_.9} parent=0 // pred_check
    %p16 = pneg %p15
  $region15: #{_lambda_.9} parent=0 // pred_check_branch
    %18 = sbr.rel (%p16) target = $region17
  $region16: #{_lambda_.9} parent=0 // pred_region
    %19 = vst [vmem:[#allocation2] sm:$0xff] 0.0
    %20 = vst [vmem:[#allocation2 + $0x8] sm:$0xff] 0.0
    %21 = vst [vmem:[#allocation2 + $0x10] sm:$0xff] 0.0
    %22 = vst [vmem:[#allocation2 + $0x18] sm:$0xff] 0.0
    %23 = vst [vmem:[#allocation2 + $0x20] sm:$0xff] 0.0
    %24 = vst [vmem:[#allocation2 + $0x28] sm:$0xff] 0.0
    %25 = vst [vmem:[#allocation2 + $0x30] sm:$0xff] 0.0
    %26 = vst [vmem:[#allocation2 + $0x38] sm:$0xff] 0.0
    %27 = vst [vmem:[#allocation2 + $0x40] sm:$0xff] 0.0
    %28 = vst [vmem:[#allocation2 + $0x48] sm:$0xff] 0.0
    %29 = vst [vmem:[#allocation2 + $0x50] sm:$0xff] 0.0
    %30 = vst [vmem:[#allocation2 + $0x58] sm:$0xff] 0.0
    %31 = vst [vmem:[#allocation2 + $0x60] sm:$0xff] 0.0
    %32 = vst [vmem:[#allocation2 + $0x68] sm:$0xff] 0.0
    %33 = vst [vmem:[#allocation2 + $0x70] sm:$0xff] 0.0
    %34 = vst [vmem:[#allocation2 + $0x78] sm:$0xff] 0.0
    %35 = vst [vmem:[#allocation2 + $0x80] sm:$0xff] 0.0
    %36 = vst [vmem:[#allocation2 + $0x88] sm:$0xff] 0.0
    %37 = vst [vmem:[#allocation2 + $0x90] sm:$0xff] 0.0
    %38 = vst [vmem:[#allocation2 + $0x98] sm:$0xff] 0.0
    %39 = vst [vmem:[#allocation2 + $0xa0] sm:$0xff] 0.0
    %40 = vst [vmem:[#allocation2 + $0xa8] sm:$0xff] 0.0
    %41 = vst [vmem:[#allocation2 + $0xb0] sm:$0xff] 0.0
    %42 = vst [vmem:[#allocation2 + $0xb8] sm:$0xff] 0.0
    %43 = vst [vmem:[#allocation2 + $0xc0] sm:$0xff] 0.0
    %44 = vst [vmem:[#allocation2 + $0xc8] sm:$0xff] 0.0
    %45 = vst [vmem:[#allocation2 + $0xd0] sm:$0xff] 0.0
    %46 = vst [vmem:[#allocation2 + $0xd8] sm:$0xff] 0.0
    %47 = vst [vmem:[#allocation2 + $0xe0] sm:$0xff] 0.0
    %48 = vst [vmem:[#allocation2 + $0xe8] sm:$0xff] 0.0
    %49 = vst [vmem:[#allocation2 + $0xf0] sm:$0xff] 0.0
    %50 = vst [vmem:[#allocation2 + $0xf8] sm:$0xff] 0.0
  $region17: #{_lambda_.9} parent=0 // pred_fallthru
    _
  %v51 = vld [vmem:[#allocation2] sm:$0xff]
  %v52 = vld [vmem:[#allocation2 + $0x8] sm:$0xff]
  %v53 = vld [vmem:[#allocation2 + $0x10] sm:$0xff]
  %v54 = vld [vmem:[#allocation2 + $0x18] sm:$0xff]
  %v55 = vld [vmem:[#allocation2 + $0x20] sm:$0xff]
  %v56 = vld [vmem:[#allocation2 + $0x28] sm:$0xff]
  %v57 = vld [vmem:[#allocation2 + $0x30] sm:$0xff]
  %v58 = vld [vmem:[#allocation2 + $0x38] sm:$0xff]
  %v59 = vld [vmem:[#allocation2 + $0x40] sm:$0xff]
  %v60 = vld [vmem:[#allocation2 + $0x48] sm:$0xff]
  %v61 = vld [vmem:[#allocation2 + $0x50] sm:$0xff]
  %v62 = vld [vmem:[#allocation2 + $0x58] sm:$0xff]
  %v63 = vld [vmem:[#allocation2 + $0x60] sm:$0xff]
  %v64 = vld [vmem:[#allocation2 + $0x68] sm:$0xff]
  %v65 = vld [vmem:[#allocation2 + $0x70] sm:$0xff]
  %v66 = vld [vmem:[#allocation2 + $0x78] sm:$0xff]
  %v67 = vld [vmem:[#allocation2 + $0x80] sm:$0xff]
  %v68 = vld [vmem:[#allocation2 + $0x88] sm:$0xff]
  %v69 = vld [vmem:[#allocation2 + $0x90] sm:$0xff]
  %v70 = vld [vmem:[#allocation2 + $0x98] sm:$0xff]
  %v71 = vld [vmem:[#allocation2 + $0xa0] sm:$0xff]
  %v72 = vld [vmem:[#allocation2 + $0xa8] sm:$0xff]
  %v73 = vld [vmem:[#allocation2 + $0xb0] sm:$0xff]
  %v74 = vld [vmem:[#allocation2 + $0xb8] sm:$0xff]
  %v75 = vld [vmem:[#allocation2 + $0xc0] sm:$0xff]
  %v76 = vld [vmem:[#allocation2 + $0xc8] sm:$0xff]
  %v77 = vld [vmem:[#allocation2 + $0xd0] sm:$0xff]
  %v78 = vld [vmem:[#allocation2 + $0xd8] sm:$0xff]
  %v79 = vld [vmem:[#allocation2 + $0xe0] sm:$0xff]
  %v80 = vld [vmem:[#allocation2 + $0xe8] sm:$0xff]
  %v81 = vld [vmem:[#allocation2 + $0xf0] sm:$0xff]
  %v82 = vld [vmem:[#allocation2 + $0xf8] sm:$0xff]
  %v83 = vld [vmem:[%s0] sm:$0xf]
  %v84 = vld [vmem:[%s0 + $0x4] sm:$0xf]
  %v85 = vld [vmem:[%s0 + $0x8] sm:$0xf]
  %v86 = vld [vmem:[%s0 + $0xc] sm:$0xf]
  %v87 = vld [vmem:[%s0 + $0x10] sm:$0xf]
  %v88 = vld [vmem:[%s0 + $0x14] sm:$0xf]
  %v89 = vld [vmem:[%s0 + $0x18] sm:$0xf]
  %v90 = vld [vmem:[%s0 + $0x1c] sm:$0xf]
  %v91 = vld [vmem:[%s1] sm:$0xff]
  %v92 = vld [vmem:[%s1 + $0x8] sm:$0xff]
  %v93 = vld [vmem:[%s1 + $0x10] sm:$0xff]
  %v94 = vld [vmem:[%s1 + $0x18] sm:$0xff]
  %v95 = vld [vmem:[%s1 + $0x20] sm:$0xff]
  %v96 = vld [vmem:[%s1 + $0x28] sm:$0xff]
  %v97 = vld [vmem:[%s1 + $0x30] sm:$0xff]
  %v98 = vld [vmem:[%s1 + $0x38] sm:$0xff]
  %v99 = vld [vmem:[%s1 + $0x40] sm:$0xff]
  %v100 = vld [vmem:[%s1 + $0x48] sm:$0xff]
  %v101 = vld [vmem:[%s1 + $0x50] sm:$0xff]
  %v102 = vld [vmem:[%s1 + $0x58] sm:$0xff]
  %v103 = vld [vmem:[%s1 + $0x60] sm:$0xff]
  %v104 = vld [vmem:[%s1 + $0x68] sm:$0xff]
  %v105 = vld [vmem:[%s1 + $0x70] sm:$0xff]
  %v106 = vld [vmem:[%s1 + $0x78] sm:$0xff]
  %v107 = vld [vmem:[%s1 + $0x80] sm:$0xff]
  %v108 = vld [vmem:[%s1 + $0x88] sm:$0xff]
  %v109 = vld [vmem:[%s1 + $0x90] sm:$0xff]
  %v110 = vld [vmem:[%s1 + $0x98] sm:$0xff]
  %v111 = vld [vmem:[%s1 + $0xa0] sm:$0xff]
  %v112 = vld [vmem:[%s1 + $0xa8] sm:$0xff]
  %v113 = vld [vmem:[%s1 + $0xb0] sm:$0xff]
  %v114 = vld [vmem:[%s1 + $0xb8] sm:$0xff]
  %v115 = vld [vmem:[%s1 + $0xc0] sm:$0xff]
  %v116 = vld [vmem:[%s1 + $0xc8] sm:$0xff]
  %v117 = vld [vmem:[%s1 + $0xd0] sm:$0xff]
  %v118 = vld [vmem:[%s1 + $0xd8] sm:$0xff]
  %v119 = vld [vmem:[%s1 + $0xe0] sm:$0xff]
  %v120 = vld [vmem:[%s1 + $0xe8] sm:$0xff]
  %v121 = vld [vmem:[%s1 + $0xf0] sm:$0xff]
  %v122 = vld [vmem:[%s1 + $0xf8] sm:$0xff]
  %v131 = vunpack.c.l.b16 %v83
  %v132 = vunpack.c.l.b16 %v84
  %v133 = vunpack.c.l.b16 %v85
  %v134 = vunpack.c.l.b16 %v86
  %v135 = vunpack.c.l.b16 %v87
  %v136 = vunpack.c.l.b16 %v88
  %v137 = vunpack.c.l.b16 %v89
  %v138 = vunpack.c.l.b16 %v90
  %v139 = vpack.c.b16 %v132, %v131
  %v140 = vpack.c.b16 %v134, %v133
  %v141 = vpack.c.b16 %v136, %v135
  %v142 = vpack.c.b16 %v138, %v137
  %v179 = vunpack.c.l.b16 %v91
  %v180 = vunpack.c.h.b16 %v91
  %v181 = vunpack.c.l.b16 %v92
  %v182 = vunpack.c.h.b16 %v92
  %v183 = vunpack.c.l.b16 %v93
  %v184 = vunpack.c.h.b16 %v93
  %v185 = vunpack.c.l.b16 %v94
  %v186 = vunpack.c.h.b16 %v94
  %v187 = vunpack.c.l.b16 %v95
  %v188 = vunpack.c.h.b16 %v95
  %v189 = vunpack.c.l.b16 %v96
  %v190 = vunpack.c.h.b16 %v96
  %v191 = vunpack.c.l.b16 %v97
  %v192 = vunpack.c.h.b16 %v97
  %v193 = vunpack.c.l.b16 %v98
  %v194 = vunpack.c.h.b16 %v98
  %v195 = vunpack.c.l.b16 %v99
  %v196 = vunpack.c.h.b16 %v99
  %v197 = vunpack.c.l.b16 %v100
  %v198 = vunpack.c.h.b16 %v100
  %v199 = vunpack.c.l.b16 %v101
  %v200 = vunpack.c.h.b16 %v101
  %v201 = vunpack.c.l.b16 %v102
  %v202 = vunpack.c.h.b16 %v102
  %v203 = vunpack.c.l.b16 %v103
  %v204 = vunpack.c.h.b16 %v103
  %v205 = vunpack.c.l.b16 %v104
  %v206 = vunpack.c.h.b16 %v104
  %v207 = vunpack.c.l.b16 %v105
  %v208 = vunpack.c.h.b16 %v105
  %v209 = vunpack.c.l.b16 %v106
  %v210 = vunpack.c.h.b16 %v106
  %v211 = vunpack.c.l.b16 %v107
  %v212 = vunpack.c.h.b16 %v107
  %v213 = vunpack.c.l.b16 %v108
  %v214 = vunpack.c.h.b16 %v108
  %v215 = vunpack.c.l.b16 %v109
  %v216 = vunpack.c.h.b16 %v109
  %v217 = vunpack.c.l.b16 %v110
  %v218 = vunpack.c.h.b16 %v110
  %v219 = vunpack.c.l.b16 %v111
  %v220 = vunpack.c.h.b16 %v111
  %v221 = vunpack.c.l.b16 %v112
  %v222 = vunpack.c.h.b16 %v112
  %v223 = vunpack.c.l.b16 %v113
  %v224 = vunpack.c.h.b16 %v113
  %v225 = vunpack.c.l.b16 %v114
  %v226 = vunpack.c.h.b16 %v114
  %v227 = vunpack.c.l.b16 %v115
  %v228 = vunpack.c.h.b16 %v115
  %v229 = vunpack.c.l.b16 %v116
  %v230 = vunpack.c.h.b16 %v116
  %v231 = vunpack.c.l.b16 %v117
  %v232 = vunpack.c.h.b16 %v117
  %v233 = vunpack.c.l.b16 %v118
  %v234 = vunpack.c.h.b16 %v118
  %v235 = vunpack.c.l.b16 %v119
  %v236 = vunpack.c.h.b16 %v119
  %v237 = vunpack.c.l.b16 %v120
  %v238 = vunpack.c.h.b16 %v120
  %v239 = vunpack.c.l.b16 %v121
  %v240 = vunpack.c.h.b16 %v121
  %v241 = vunpack.c.l.b16 %v122
  %v242 = vunpack.c.h.b16 %v122
  %v243 = vpack.c.b16 %v183, %v179
  %v244 = vpack.c.b16 %v184, %v180
  %v245 = vpack.c.b16 %v185, %v181
  %v246 = vpack.c.b16 %v186, %v182
  %v247 = vpack.c.b16 %v191, %v187
  %v248 = vpack.c.b16 %v192, %v188
  %v249 = vpack.c.b16 %v193, %v189
  %v250 = vpack.c.b16 %v194, %v190
  %v251 = vpack.c.b16 %v199, %v195
  %v252 = vpack.c.b16 %v200, %v196
  %v253 = vpack.c.b16 %v201, %v197
  %v254 = vpack.c.b16 %v202, %v198
  %v255 = vpack.c.b16 %v207, %v203
  %v256 = vpack.c.b16 %v208, %v204
  %v257 = vpack.c.b16 %v209, %v205
  %v258 = vpack.c.b16 %v210, %v206
  %v259 = vpack.c.b16 %v215, %v211
  %v260 = vpack.c.b16 %v216, %v212
  %v261 = vpack.c.b16 %v217, %v213
  %v262 = vpack.c.b16 %v218, %v214
  %v263 = vpack.c.b16 %v223, %v219
  %v264 = vpack.c.b16 %v224, %v220
  %v265 = vpack.c.b16 %v225, %v221
  %v266 = vpack.c.b16 %v226, %v222
  %v267 = vpack.c.b16 %v231, %v227
  %v268 = vpack.c.b16 %v232, %v228
  %v269 = vpack.c.b16 %v233, %v229
  %v270 = vpack.c.b16 %v234, %v230
  %v271 = vpack.c.b16 %v239, %v235
  %v272 = vpack.c.b16 %v240, %v236
  %v273 = vpack.c.b16 %v241, %v237
  %v274 = vpack.c.b16 %v242, %v238
  %307 = vmatprep.subr.bf16.mxu0 %v272
  %308 = vmatpush1.bf16.msra.mxu0 %v271
  %309 = vmatprep.subr.bf16.mxu0 %v268
  %310 = vmatpush1.bf16.msra.mxu0 %v267
  %311 = vmatprep.subr.bf16.mxu0 %v264
  %312 = vmatpush1.bf16.msra.mxu0 %v263
  %313 = vmatprep.subr.bf16.mxu0 %v260
  %314 = vmatpush1.bf16.msra.mxu0 %v259
  %315 = vmatprep.subr.bf16.mxu0 %v256
  %316 = vmatpush1.bf16.msra.mxu0 %v255
  %317 = vmatprep.subr.bf16.mxu0 %v252
  %318 = vmatpush1.bf16.msra.mxu0 %v251
  %319 = vmatprep.subr.bf16.mxu0 %v248
  %320 = vmatpush1.bf16.msra.mxu0 %v247
  %321 = vmatprep.subr.bf16.mxu0 %v244
  %322 = vmatpush1.bf16.msra.mxu0 %v243
  %323 = vmatprep.subr.bf16.mxu0 0
  %324 = vmatpush2.bf16.msra.mxu0 0
  %325 = vmatprep.subr.bf16.mxu0 0
  %326 = vmatpush2.bf16.msra.mxu0 0
  %327 = vmatprep.subr.bf16.mxu0 0
  %328 = vmatpush2.bf16.msra.mxu0 0
  %329 = vmatprep.subr.bf16.mxu0 0
  %330 = vmatpush2.bf16.msra.mxu0 0
  %331 = vmatprep.subr.bf16.mxu0 0
  %332 = vmatpush2.bf16.msra.mxu0 0
  %333 = vmatprep.subr.bf16.mxu0 0
  %334 = vmatpush2.bf16.msra.mxu0 0
  %335 = vmatprep.subr.bf16.mxu0 0
  %336 = vmatpush2.bf16.msra.mxu0 0
  %337 = vmatprep.subr.bf16.mxu0 0
  %338 = vmatpush2.bf16.msra.mxu0 0
  %339 = vmatprep.mubr.bf16.mxu0 0
  %340 = vmatmul.mubr.bf16.gmra.mxu0 %v139
  %v341 = vpop.f32.mrf.mxu0
  %v342 = vadd.f32 0.0, %v341
  %v343 = vpop.f32.mrf.mxu0
  %v344 = vadd.f32 0.0, %v343
  %v345 = vpop.f32.mrf.mxu0
  %v346 = vadd.f32 0.0, %v345
  %v347 = vpop.f32.mrf.mxu0
  %v348 = vadd.f32 0.0, %v347
  %349 = vmatprep.mubr.bf16.mxu0 0
  %350 = vmatmul.mubr.bf16.gmra.mxu0 %v140
  %v351 = vpop.f32.mrf.mxu0
  %v352 = vadd.f32 0.0, %v351
  %v353 = vpop.f32.mrf.mxu0
  %v354 = vadd.f32 0.0, %v353
  %v355 = vpop.f32.mrf.mxu0
  %v356 = vadd.f32 0.0, %v355
  %v357 = vpop.f32.mrf.mxu0
  %v358 = vadd.f32 0.0, %v357
  %359 = vmatprep.mubr.bf16.mxu0 0
  %360 = vmatmul.mubr.bf16.gmra.mxu0 %v141
  %v361 = vpop.f32.mrf.mxu0
  %v362 = vadd.f32 0.0, %v361
  %v363 = vpop.f32.mrf.mxu0
  %v364 = vadd.f32 0.0, %v363
  %v365 = vpop.f32.mrf.mxu0
  %v366 = vadd.f32 0.0, %v365
  %v367 = vpop.f32.mrf.mxu0
  %v368 = vadd.f32 0.0, %v367
  %369 = vmatprep.mubr.bf16.mxu0 0
  %370 = vmatmul.mubr.bf16.gmra.mxu0 %v142
  %v371 = vpop.f32.mrf.mxu0
  %v372 = vadd.f32 0.0, %v371
  %v373 = vpop.f32.mrf.mxu0
  %v374 = vadd.f32 0.0, %v373
  %v375 = vpop.f32.mrf.mxu0
  %v376 = vadd.f32 0.0, %v375
  %v377 = vpop.f32.mrf.mxu0
  %v378 = vadd.f32 0.0, %v377
  %379 = vdwg.mxu0
  %380 = vmatprep.subr.bf16.mxu0 %v274
  %381 = vmatpush1.bf16.msra.mxu0 %v273
  %382 = vmatprep.subr.bf16.mxu0 %v270
  %383 = vmatpush1.bf16.msra.mxu0 %v269
  %384 = vmatprep.subr.bf16.mxu0 %v266
  %385 = vmatpush1.bf16.msra.mxu0 %v265
  %386 = vmatprep.subr.bf16.mxu0 %v262
  %387 = vmatpush1.bf16.msra.mxu0 %v261
  %388 = vmatprep.subr.bf16.mxu0 %v258
  %389 = vmatpush1.bf16.msra.mxu0 %v257
  %390 = vmatprep.subr.bf16.mxu0 %v254
  %391 = vmatpush1.bf16.msra.mxu0 %v253
  %392 = vmatprep.subr.bf16.mxu0 %v250
  %393 = vmatpush1.bf16.msra.mxu0 %v249
  %394 = vmatprep.subr.bf16.mxu0 %v246
  %395 = vmatpush1.bf16.msra.mxu0 %v245
  %396 = vmatprep.subr.bf16.mxu0 0
  %397 = vmatpush2.bf16.msra.mxu0 0
  %398 = vmatprep.subr.bf16.mxu0 0
  %399 = vmatpush2.bf16.msra.mxu0 0
  %400 = vmatprep.subr.bf16.mxu0 0
  %401 = vmatpush2.bf16.msra.mxu0 0
  %402 = vmatprep.subr.bf16.mxu0 0
  %403 = vmatpush2.bf16.msra.mxu0 0
  %404 = vmatprep.subr.bf16.mxu0 0
  %405 = vmatpush2.bf16.msra.mxu0 0
  %406 = vmatprep.subr.bf16.mxu0 0
  %407 = vmatpush2.bf16.msra.mxu0 0
  %408 = vmatprep.subr.bf16.mxu0 0
  %409 = vmatpush2.bf16.msra.mxu0 0
  %410 = vmatprep.subr.bf16.mxu0 0
  %411 = vmatpush2.bf16.msra.mxu0 0
  %412 = vmatprep.mubr.bf16.mxu0 0
  %413 = vmatmul.mubr.bf16.gmra.mxu0 %v139
  %v414 = vpop.f32.mrf.mxu0
  %v415 = vadd.f32 0.0, %v414
  %v416 = vpop.f32.mrf.mxu0
  %v417 = vadd.f32 0.0, %v416
  %v418 = vpop.f32.mrf.mxu0
  %v419 = vadd.f32 0.0, %v418
  %v420 = vpop.f32.mrf.mxu0
  %v421 = vadd.f32 0.0, %v420
  %422 = vmatprep.mubr.bf16.mxu0 0
  %423 = vmatmul.mubr.bf16.gmra.mxu0 %v140
  %v424 = vpop.f32.mrf.mxu0
  %v425 = vadd.f32 0.0, %v424
  %v426 = vpop.f32.mrf.mxu0
  %v427 = vadd.f32 0.0, %v426
  %v428 = vpop.f32.mrf.mxu0
  %v429 = vadd.f32 0.0, %v428
  %v430 = vpop.f32.mrf.mxu0
  %v431 = vadd.f32 0.0, %v430
  %432 = vmatprep.mubr.bf16.mxu0 0
  %433 = vmatmul.mubr.bf16.gmra.mxu0 %v141
  %v434 = vpop.f32.mrf.mxu0
  %v435 = vadd.f32 0.0, %v434
  %v436 = vpop.f32.mrf.mxu0
  %v437 = vadd.f32 0.0, %v436
  %v438 = vpop.f32.mrf.mxu0
  %v439 = vadd.f32 0.0, %v438
  %v440 = vpop.f32.mrf.mxu0
  %v441 = vadd.f32 0.0, %v440
  %442 = vmatprep.mubr.bf16.mxu0 0
  %443 = vmatmul.mubr.bf16.gmra.mxu0 %v142
  %v444 = vpop.f32.mrf.mxu0
  %v445 = vadd.f32 0.0, %v444
  %v446 = vpop.f32.mrf.mxu0
  %v447 = vadd.f32 0.0, %v446
  %v448 = vpop.f32.mrf.mxu0
  %v449 = vadd.f32 0.0, %v448
  %v450 = vpop.f32.mrf.mxu0
  %v451 = vadd.f32 0.0, %v450
  %452 = vdwg.mxu0
  %v453 = vadd.f32 %v51, %v342
  %v454 = vadd.f32 %v52, %v344
  %v455 = vadd.f32 %v53, %v415
  %v456 = vadd.f32 %v54, %v417
  %v457 = vadd.f32 %v55, %v346
  %v458 = vadd.f32 %v56, %v348
  %v459 = vadd.f32 %v57, %v419
  %v460 = vadd.f32 %v58, %v421
  %v461 = vadd.f32 %v59, %v352
  %v462 = vadd.f32 %v60, %v354
  %v463 = vadd.f32 %v61, %v425
  %v464 = vadd.f32 %v62, %v427
  %v465 = vadd.f32 %v63, %v356
  %v466 = vadd.f32 %v64, %v358
  %v467 = vadd.f32 %v65, %v429
  %v468 = vadd.f32 %v66, %v431
  %v469 = vadd.f32 %v67, %v362
  %v470 = vadd.f32 %v68, %v364
  %v471 = vadd.f32 %v69, %v435
  %v472 = vadd.f32 %v70, %v437
  %v473 = vadd.f32 %v71, %v366
  %v474 = vadd.f32 %v72, %v368
  %v475 = vadd.f32 %v73, %v439
  %v476 = vadd.f32 %v74, %v441
  %v477 = vadd.f32 %v75, %v372
  %v478 = vadd.f32 %v76, %v374
  %v479 = vadd.f32 %v77, %v445
  %v480 = vadd.f32 %v78, %v447
  %v481 = vadd.f32 %v79, %v376
  %v482 = vadd.f32 %v80, %v378
  %v483 = vadd.f32 %v81, %v449
  %v484 = vadd.f32 %v82, %v451
  %485 = vst [vmem:[#allocation2] sm:$0xff] %v453
  %486 = vst [vmem:[#allocation2 + $0x8] sm:$0xff] %v454
  %487 = vst [vmem:[#allocation2 + $0x10] sm:$0xff] %v455
  %488 = vst [vmem:[#allocation2 + $0x18] sm:$0xff] %v456
  %489 = vst [vmem:[#allocation2 + $0x20] sm:$0xff] %v457
  %490 = vst [vmem:[#allocation2 + $0x28] sm:$0xff] %v458
  %491 = vst [vmem:[#allocation2 + $0x30] sm:$0xff] %v459
  %492 = vst [vmem:[#allocation2 + $0x38] sm:$0xff] %v460
  %493 = vst [vmem:[#allocation2 + $0x40] sm:$0xff] %v461
  %494 = vst [vmem:[#allocation2 + $0x48] sm:$0xff] %v462
  %495 = vst [vmem:[#allocation2 + $0x50] sm:$0xff] %v463
  %496 = vst [vmem:[#allocation2 + $0x58] sm:$0xff] %v464
  %497 = vst [vmem:[#allocation2 + $0x60] sm:$0xff] %v465
  %498 = vst [vmem:[#allocation2 + $0x68] sm:$0xff] %v466
  %499 = vst [vmem:[#allocation2 + $0x70] sm:$0xff] %v467
  %500 = vst [vmem:[#allocation2 + $0x78] sm:$0xff] %v468
  %501 = vst [vmem:[#allocation2 + $0x80] sm:$0xff] %v469
  %502 = vst [vmem:[#allocation2 + $0x88] sm:$0xff] %v470
  %503 = vst [vmem:[#allocation2 + $0x90] sm:$0xff] %v471
  %504 = vst [vmem:[#allocation2 + $0x98] sm:$0xff] %v472
  %505 = vst [vmem:[#allocation2 + $0xa0] sm:$0xff] %v473
  %506 = vst [vmem:[#allocation2 + $0xa8] sm:$0xff] %v474
  %507 = vst [vmem:[#allocation2 + $0xb0] sm:$0xff] %v475
  %508 = vst [vmem:[#allocation2 + $0xb8] sm:$0xff] %v476
  %509 = vst [vmem:[#allocation2 + $0xc0] sm:$0xff] %v477
  %510 = vst [vmem:[#allocation2 + $0xc8] sm:$0xff] %v478
  %511 = vst [vmem:[#allocation2 + $0xd0] sm:$0xff] %v479
  %512 = vst [vmem:[#allocation2 + $0xd8] sm:$0xff] %v480
  %513 = vst [vmem:[#allocation2 + $0xe0] sm:$0xff] %v481
  %514 = vst [vmem:[#allocation2 + $0xe8] sm:$0xff] %v482
  %515 = vst [vmem:[#allocation2 + $0xf0] sm:$0xff] %v483
  %516 = vst [vmem:[#allocation2 + $0xf8] sm:$0xff] %v484
  // Predicated region
  $region18: #{_lambda_.9} parent=0 // pred_check
    %p517 = pneg %p15
  $region19: #{_lambda_.9} parent=0 // pred_check_branch
    %519 = sbr.rel (%p517) target = $region21
  $region20: #{_lambda_.9} parent=0 // pred_region
    %v520 = vld [vmem:[#allocation2] sm:$0xff]
    %v521 = vld [vmem:[#allocation2 + $0x8] sm:$0xff]
    %v522 = vld [vmem:[#allocation2 + $0x10] sm:$0xff]
    %v523 = vld [vmem:[#allocation2 + $0x18] sm:$0xff]
    %v524 = vld [vmem:[#allocation2 + $0x20] sm:$0xff]
    %v525 = vld [vmem:[#allocation2 + $0x28] sm:$0xff]
    %v526 = vld [vmem:[#allocation2 + $0x30] sm:$0xff]
    %v527 = vld [vmem:[#allocation2 + $0x38] sm:$0xff]
    %v528 = vld [vmem:[#allocation2 + $0x40] sm:$0xff]
    %v529 = vld [vmem:[#allocation2 + $0x48] sm:$0xff]
    %v530 = vld [vmem:[#allocation2 + $0x50] sm:$0xff]
    %v531 = vld [vmem:[#allocation2 + $0x58] sm:$0xff]
    %v532 = vld [vmem:[#allocation2 + $0x60] sm:$0xff]
    %v533 = vld [vmem:[#allocation2 + $0x68] sm:$0xff]
    %v534 = vld [vmem:[#allocation2 + $0x70] sm:$0xff]
    %v535 = vld [vmem:[#allocation2 + $0x78] sm:$0xff]
    %v536 = vld [vmem:[#allocation2 + $0x80] sm:$0xff]
    %v537 = vld [vmem:[#allocation2 + $0x88] sm:$0xff]
    %v538 = vld [vmem:[#allocation2 + $0x90] sm:$0xff]
    %v539 = vld [vmem:[#allocation2 + $0x98] sm:$0xff]
    %v540 = vld [vmem:[#allocation2 + $0xa0] sm:$0xff]
    %v541 = vld [vmem:[#allocation2 + $0xa8] sm:$0xff]
    %v542 = vld [vmem:[#allocation2 + $0xb0] sm:$0xff]
    %v543 = vld [vmem:[#allocation2 + $0xb8] sm:$0xff]
    %v544 = vld [vmem:[#allocation2 + $0xc0] sm:$0xff]
    %v545 = vld [vmem:[#allocation2 + $0xc8] sm:$0xff]
    %v546 = vld [vmem:[#allocation2 + $0xd0] sm:$0xff]
    %v547 = vld [vmem:[#allocation2 + $0xd8] sm:$0xff]
    %v548 = vld [vmem:[#allocation2 + $0xe0] sm:$0xff]
    %v549 = vld [vmem:[#allocation2 + $0xe8] sm:$0xff]
    %v550 = vld [vmem:[#allocation2 + $0xf0] sm:$0xff]
    %v551 = vld [vmem:[#allocation2 + $0xf8] sm:$0xff]
    %v552 = vld [vmem:[%s2] sm:$0xf]
    %v554 = vlaneseq
    %v555 = vshrl.u32 %v554, 7
    %v556 = vsub.s32 0, %v555
    %v557 = vrot.slane %v552, %v556
    %v558 = vlaneseq
    %v559 = vshrl.u32 %v558, 7
    %v560 = vsub.s32 1, %v559
    %v561 = vrot.slane %v552, %v560
    %v562 = vlaneseq
    %v563 = vshrl.u32 %v562, 7
    %v564 = vsub.s32 2, %v563
    %v565 = vrot.slane %v552, %v564
    %v566 = vlaneseq
    %v567 = vshrl.u32 %v566, 7
    %v568 = vsub.s32 3, %v567
    %v569 = vrot.slane %v552, %v568
    %v574 = vadd.f32 %v520, %v557
    %v575 = vadd.f32 %v521, %v561
    %v576 = vadd.f32 %v522, %v565
    %v577 = vadd.f32 %v523, %v569
    %v578 = vadd.f32 %v524, %v557
    %v579 = vadd.f32 %v525, %v561
    %v580 = vadd.f32 %v526, %v565
    %v581 = vadd.f32 %v527, %v569
    %v582 = vadd.f32 %v528, %v557
    %v583 = vadd.f32 %v529, %v561
    %v584 = vadd.f32 %v530, %v565
    %v585 = vadd.f32 %v531, %v569
    %v586 = vadd.f32 %v532, %v557
    %v587 = vadd.f32 %v533, %v561
    %v588 = vadd.f32 %v534, %v565
    %v589 = vadd.f32 %v535, %v569
    %v590 = vadd.f32 %v536, %v557
    %v591 = vadd.f32 %v537, %v561
    %v592 = vadd.f32 %v538, %v565
    %v593 = vadd.f32 %v539, %v569
    %v594 = vadd.f32 %v540, %v557
    %v595 = vadd.f32 %v541, %v561
    %v596 = vadd.f32 %v542, %v565
    %v597 = vadd.f32 %v543, %v569
    %v598 = vadd.f32 %v544, %v557
    %v599 = vadd.f32 %v545, %v561
    %v600 = vadd.f32 %v546, %v565
    %v601 = vadd.f32 %v547, %v569
    %v602 = vadd.f32 %v548, %v557
    %v603 = vadd.f32 %v549, %v561
    %v604 = vadd.f32 %v550, %v565
    %v605 = vadd.f32 %v551, %v569
    %606 = vst [vmem:[%s3] sm:$0xff] %v574
    %607 = vst [vmem:[%s3 + $0x8] sm:$0xff] %v575
    %608 = vst [vmem:[%s3 + $0x10] sm:$0xff] %v576
    %609 = vst [vmem:[%s3 + $0x18] sm:$0xff] %v577
    %610 = vst [vmem:[%s3 + $0x20] sm:$0xff] %v578
    %611 = vst [vmem:[%s3 + $0x28] sm:$0xff] %v579
    %612 = vst [vmem:[%s3 + $0x30] sm:$0xff] %v580
    %613 = vst [vmem:[%s3 + $0x38] sm:$0xff] %v581
    %614 = vst [vmem:[%s3 + $0x40] sm:$0xff] %v582
    %615 = vst [vmem:[%s3 + $0x48] sm:$0xff] %v583
    %616 = vst [vmem:[%s3 + $0x50] sm:$0xff] %v584
    %617 = vst [vmem:[%s3 + $0x58] sm:$0xff] %v585
    %618 = vst [vmem:[%s3 + $0x60] sm:$0xff] %v586
    %619 = vst [vmem:[%s3 + $0x68] sm:$0xff] %v587
    %620 = vst [vmem:[%s3 + $0x70] sm:$0xff] %v588
    %621 = vst [vmem:[%s3 + $0x78] sm:$0xff] %v589
    %622 = vst [vmem:[%s3 + $0x80] sm:$0xff] %v590
    %623 = vst [vmem:[%s3 + $0x88] sm:$0xff] %v591
    %624 = vst [vmem:[%s3 + $0x90] sm:$0xff] %v592
    %625 = vst [vmem:[%s3 + $0x98] sm:$0xff] %v593
    %626 = vst [vmem:[%s3 + $0xa0] sm:$0xff] %v594
    %627 = vst [vmem:[%s3 + $0xa8] sm:$0xff] %v595
    %628 = vst [vmem:[%s3 + $0xb0] sm:$0xff] %v596
    %629 = vst [vmem:[%s3 + $0xb8] sm:$0xff] %v597
    %630 = vst [vmem:[%s3 + $0xc0] sm:$0xff] %v598
    %631 = vst [vmem:[%s3 + $0xc8] sm:$0xff] %v599
    %632 = vst [vmem:[%s3 + $0xd0] sm:$0xff] %v600
    %633 = vst [vmem:[%s3 + $0xd8] sm:$0xff] %v601
    %634 = vst [vmem:[%s3 + $0xe0] sm:$0xff] %v602
    %635 = vst [vmem:[%s3 + $0xe8] sm:$0xff] %v603
    %636 = vst [vmem:[%s3 + $0xf0] sm:$0xff] %v604
    %637 = vst [vmem:[%s3 + $0xf8] sm:$0xff] %v605
  $region21: #{_lambda_.9} parent=0 // pred_fallthru
    _
  // Predicated region
  $region22: #{_lambda_.9} parent=0 // pred_check
    _
  $region23: #{_lambda_.9} parent=0 // pred_check_branch
    %639 = sbr.rel (0) target = $region25
  $region24: #{_lambda_.9} parent=0 // pred_region
    _
  $region25: #{_lambda_.9} parent=0 // pred_fallthru
    _
  // Predicated region
  $region26: #{_lambda_.9} parent=0 // pred_check
    _
  $region27: #{_lambda_.9} parent=0 // pred_check_branch
    %641 = sbr.rel (0) target = $region29
  $region28: #{_lambda_.9} parent=0 // pred_region
    _
  $region29: #{_lambda_.9} parent=0 // pred_fallthru
    _

</llo_original>
